<compile_context>
chip_gen: v7x
topology: tpu7x:2x2x1
jax: 0.10.0
libtpu: 0.0.40
codegen_flags: <defaults>
</compile_context>

<pallas_src>
import functools
import math

import jax
import jax.numpy as jnp
from jax.experimental import pallas as pl
from jax.experimental.pallas import tpu as pltpu


VMEM_LIMIT = 48 * 1024 * 1024  # headroom below v7x's 64 MiB physical VMEM


def _pick_tile(dim, candidates):
    """Largest candidate that evenly divides `dim`, else the full dim."""
    for c in candidates:
        if c <= dim and dim % c == 0:
            return c
    return dim


# -----------------------------------------------------------------------------
# Embeddings: (word + position + type) add fused with LayerNorm
# -----------------------------------------------------------------------------
def _emb_add_ln_kernel(tok_ref, pos_ref, typ_ref, g_ref, b_ref, o_ref, *, eps):
    x = (tok_ref[...].astype(jnp.float32)
         + pos_ref[...].astype(jnp.float32)
         + typ_ref[...].astype(jnp.float32))
    mean = jnp.mean(x, axis=-1, keepdims=True)
    var = jnp.mean(jnp.square(x - mean), axis=-1, keepdims=True)
    y = (x - mean) * jax.lax.rsqrt(var + eps)
    o_ref[...] = (y * g_ref[...].astype(jnp.float32)
                  + b_ref[...].astype(jnp.float32)).astype(o_ref.dtype)


def embeddings_ln(tok, pos, typ, gamma, beta, *, batch, seq,
                  eps=1e-12, out_dtype=jnp.bfloat16):
    # tok: [B*S, H] gathered word embeddings; pos: [S, H]; typ: [1, H]
    M, H = tok.shape
    ts = _pick_tile(seq, (512, 256, 128, 64, 32, 16, 8))
    nblocks = seq // ts
    return pl.pallas_call(
        functools.partial(_emb_add_ln_kernel, eps=eps),
        out_shape=jax.ShapeDtypeStruct((M, H), out_dtype),
        grid=(batch, nblocks),
        in_specs=[
            pl.BlockSpec((ts, H), lambda b, s: (b * nblocks + s, 0)),
            pl.BlockSpec((ts, H), lambda b, s: (s, 0)),
            pl.BlockSpec((1, H), lambda b, s: (0, 0)),
            pl.BlockSpec((1, H), lambda b, s: (0, 0)),
            pl.BlockSpec((1, H), lambda b, s: (0, 0)),
        ],
        out_specs=pl.BlockSpec((ts, H), lambda b, s: (b * nblocks + s, 0)),
        compiler_params=pltpu.CompilerParams(
            dimension_semantics=("parallel", "parallel"),
            vmem_limit_bytes=VMEM_LIMIT),
    )(tok, pos, typ, gamma.reshape(1, H), beta.reshape(1, H))


# -----------------------------------------------------------------------------
# Tiled matmul + bias (QKV projection)
# -----------------------------------------------------------------------------
def _mm_bias_kernel(x_ref, w_ref, b_ref, o_ref, acc_ref):
    k = pl.program_id(2)

    @pl.when(k == 0)
    def _():
        acc_ref[...] = jnp.zeros_like(acc_ref)

    acc_ref[...] += jnp.dot(x_ref[...], w_ref[...],
                            preferred_element_type=jnp.float32)

    @pl.when(k == pl.num_programs(2) - 1)
    def _():
        o_ref[...] = (acc_ref[...] + b_ref[...].astype(jnp.float32)
                      ).astype(o_ref.dtype)


def matmul_bias(x, w, b, out_dtype=jnp.bfloat16):
    M, K = x.shape
    N = w.shape[1]
    tm = _pick_tile(M, (256, 128, 64, 32, 16, 8))
    tn = _pick_tile(N, (512, 256, 128))
    tk = _pick_tile(K, (512, 256, 128))
    grid = (M // tm, N // tn, K // tk)
    return pl.pallas_call(
        _mm_bias_kernel,
        out_shape=jax.ShapeDtypeStruct((M, N), out_dtype),
        grid=grid,
        in_specs=[
            pl.BlockSpec((tm, tk), lambda i, j, k: (i, k)),
            pl.BlockSpec((tk, tn), lambda i, j, k: (k, j)),
            pl.BlockSpec((1, tn), lambda i, j, k: (0, j)),
        ],
        out_specs=pl.BlockSpec((tm, tn), lambda i, j, k: (i, j)),
        scratch_shapes=[pltpu.VMEM((tm, tn), jnp.float32)],
        compiler_params=pltpu.CompilerParams(
            dimension_semantics=("parallel", "parallel", "arbitrary"),
            vmem_limit_bytes=VMEM_LIMIT),
    )(x, w, b.reshape(1, N))


# -----------------------------------------------------------------------------
# Tiled matmul + bias + residual + LayerNorm epilogue (attention out projection)
# (output/hidden dim kept un-tiled so the LN row statistics are exact)
# -----------------------------------------------------------------------------
def _mm_res_ln_kernel(x_ref, w_ref, b_ref, res_ref, g_ref, beta_ref,
                      o_ref, acc_ref, *, eps):
    k = pl.program_id(1)

    @pl.when(k == 0)
    def _():
        acc_ref[...] = jnp.zeros_like(acc_ref)

    acc_ref[...] += jnp.dot(x_ref[...], w_ref[...],
                            preferred_element_type=jnp.float32)

    @pl.when(k == pl.num_programs(1) - 1)
    def _():
        h = (acc_ref[...] + b_ref[...].astype(jnp.float32)
             + res_ref[...].astype(jnp.float32))
        mean = jnp.mean(h, axis=-1, keepdims=True)
        var = jnp.mean(jnp.square(h - mean), axis=-1, keepdims=True)
        y = (h - mean) * jax.lax.rsqrt(var + eps)
        o_ref[...] = (y * g_ref[...].astype(jnp.float32)
                      + beta_ref[...].astype(jnp.float32)).astype(o_ref.dtype)


def matmul_bias_res_ln(x, w, b, *, residual, gamma, beta, eps=1e-12,
                       out_dtype=jnp.bfloat16):
    M, K = x.shape
    N = w.shape[1]
    tm = _pick_tile(M, (256, 128, 64, 32, 16, 8))
    tk = _pick_tile(K, (512, 256, 128))
    grid = (M // tm, K // tk)
    return pl.pallas_call(
        functools.partial(_mm_res_ln_kernel, eps=eps),
        out_shape=jax.ShapeDtypeStruct((M, N), out_dtype),
        grid=grid,
        in_specs=[
            pl.BlockSpec((tm, tk), lambda i, k: (i, k)),
            pl.BlockSpec((tk, N), lambda i, k: (k, 0)),
            pl.BlockSpec((1, N), lambda i, k: (0, 0)),
            pl.BlockSpec((tm, N), lambda i, k: (i, 0)),
            pl.BlockSpec((1, N), lambda i, k: (0, 0)),
            pl.BlockSpec((1, N), lambda i, k: (0, 0)),
        ],
        out_specs=pl.BlockSpec((tm, N), lambda i, k: (i, 0)),
        scratch_shapes=[pltpu.VMEM((tm, N), jnp.float32)],
        compiler_params=pltpu.CompilerParams(
            dimension_semantics=("parallel", "arbitrary"),
            vmem_limit_bytes=VMEM_LIMIT),
    )(x, w, b.reshape(1, N), residual, gamma.reshape(1, N), beta.reshape(1, N))


# -----------------------------------------------------------------------------
# Fused FFN block: GELU(x@W1+b1)@W2+b2 + residual(x) + LayerNorm, one kernel
# per row-tile.  The [M, FFN] activation never leaves VMEM.
# -----------------------------------------------------------------------------
def _ffn_ln_kernel(x_ref, w1_ref, b1_ref, w2_ref, b2_ref, g_ref, be_ref,
                   o_ref, *, eps):
    x = x_ref[...]                                              # (tm, H) bf16
    h = jnp.dot(x, w1_ref[...], preferred_element_type=jnp.float32)
    h = h + b1_ref[...].astype(jnp.float32)
    # TODO(synk): HF BERT uses exact erf GELU; tanh approximation kept for
    # guaranteed Mosaic lowering (small systematic numeric drift).
    h = jax.nn.gelu(h, approximate=True)
    y = jnp.dot(h.astype(x.dtype), w2_ref[...],
                preferred_element_type=jnp.float32)
    y = y + b2_ref[...].astype(jnp.float32) + x.astype(jnp.float32)
    mean = jnp.mean(y, axis=-1, keepdims=True)
    var = jnp.mean(jnp.square(y - mean), axis=-1, keepdims=True)
    z = (y - mean) * jax.lax.rsqrt(var + eps)
    o_ref[...] = (z * g_ref[...].astype(jnp.float32)
                  + be_ref[...].astype(jnp.float32)).astype(o_ref.dtype)


def ffn_ln(x, w1, b1, w2, b2, *, gamma, beta, eps=1e-12, out_dtype=jnp.bfloat16):
    M, H = x.shape
    F = w1.shape[1]
    tm = _pick_tile(M, (256, 128, 64, 32, 16, 8))
    return pl.pallas_call(
        functools.partial(_ffn_ln_kernel, eps=eps),
        out_shape=jax.ShapeDtypeStruct((M, H), out_dtype),
        grid=(M // tm,),
        in_specs=[
            pl.BlockSpec((tm, H), lambda i: (i, 0)),
            pl.BlockSpec((H, F), lambda i: (0, 0)),
            pl.BlockSpec((1, F), lambda i: (0, 0)),
            pl.BlockSpec((F, H), lambda i: (0, 0)),
            pl.BlockSpec((1, H), lambda i: (0, 0)),
            pl.BlockSpec((1, H), lambda i: (0, 0)),
            pl.BlockSpec((1, H), lambda i: (0, 0)),
        ],
        out_specs=pl.BlockSpec((tm, H), lambda i: (i, 0)),
        compiler_params=pltpu.CompilerParams(
            dimension_semantics=("parallel",),
            vmem_limit_bytes=VMEM_LIMIT),
    )(x, w1, b1.reshape(1, F), w2, b2.reshape(1, H),
      gamma.reshape(1, H), beta.reshape(1, H))


# -----------------------------------------------------------------------------
# Multi-head self-attention: grid over (batch, head), per-head (S, Dh) tiles
# read directly from the fused [M, 3H] QKV activation (no wrapper transposes).
# -----------------------------------------------------------------------------
def _attention_kernel(q_ref, k_ref, v_ref, o_ref, *, scale):
    q = q_ref[...]                                              # (S, Dh) bf16
    k = k_ref[...]
    v = v_ref[...]
    s = jax.lax.dot_general(q, k, (((1,), (1,)), ((), ())),
                            preferred_element_type=jnp.float32) * scale
    m = jnp.max(s, axis=-1, keepdims=True)
    p = jnp.exp(s - m)
    denom = jnp.sum(p, axis=-1, keepdims=True)
    p = p * pl.reciprocal(denom, approx=True)                   # EUP, free slot
    ctx = jnp.dot(p.astype(v.dtype), v, preferred_element_type=jnp.float32)
    o_ref[...] = ctx.astype(o_ref.dtype)


def multi_head_attention(qkv, *, batch, seq, n_heads, out_dtype=jnp.bfloat16):
    # qkv: [M, 3H] with columns laid out [q_h0 .. q_h{nH-1} | k_* | v_*]
    # NOTE: no attention mask, matching the reference which calls encoder(input_ids)
    # with no attention_mask (HF defaults to all-ones).
    M, H3 = qkv.shape
    H = H3 // 3
    Dh = H // n_heads
    scale = 1.0 / math.sqrt(Dh)
    nH = n_heads

    q_spec = pl.BlockSpec((seq, Dh), lambda b, h: (b, h))
    k_spec = pl.BlockSpec((seq, Dh), lambda b, h, nH=nH: (b, nH + h))
    v_spec = pl.BlockSpec((seq, Dh), lambda b, h, nH=nH: (b, 2 * nH + h))
    o_spec = pl.BlockSpec((seq, Dh), lambda b, h: (b, h))

    return pl.pallas_call(
        functools.partial(_attention_kernel, scale=scale),
        out_shape=jax.ShapeDtypeStruct((M, H), out_dtype),
        grid=(batch, n_heads),
        in_specs=[q_spec, k_spec, v_spec],
        out_specs=o_spec,
        compiler_params=pltpu.CompilerParams(
            dimension_semantics=("parallel", "parallel"),
            vmem_limit_bytes=VMEM_LIMIT),
    )(qkv, qkv, qkv)


# -----------------------------------------------------------------------------
# Fused MLM head: transform(dense+GELU+LayerNorm) computed ONCE per row-tile
# (cached in VMEM), then decoder matmul + cross-entropy + argmax streaming over
# vocab tiles with an online max / log-sum-exp / argmax.  Neither the [M,H]
# transformed hidden nor the [M,V] logits ever hit HBM.
# -----------------------------------------------------------------------------
def _mlm_decoder_xent_kernel(x_ref, tw_ref, tb_ref, tg_ref, tbe_ref,
                             dw_ref, db_ref, tgt_ref,
                             preds_ref, loss_ref,
                             h_sc, m_sc, l_sc, best_sc, idx_sc, tlog_sc,
                             *, eps):
    j = pl.program_id(1)

    @pl.when(j == 0)
    def _():
        # MLM transform for this row tile: dense + GELU + LayerNorm.
        h = jnp.dot(x_ref[...], tw_ref[...], preferred_element_type=jnp.float32)
        h = h + tb_ref[...].astype(jnp.float32)
        h = jax.nn.gelu(h, approximate=True)
        mean = jnp.mean(h, axis=-1, keepdims=True)
        var = jnp.mean(jnp.square(h - mean), axis=-1, keepdims=True)
        hn = (h - mean) * jax.lax.rsqrt(var + eps)
        hn = (hn * tg_ref[...].astype(jnp.float32)
              + tbe_ref[...].astype(jnp.float32))
        h_sc[...] = hn.astype(h_sc.dtype)
        # online reduction state
        m_sc[...] = jnp.full_like(m_sc, -jnp.inf)
        l_sc[...] = jnp.zeros_like(l_sc)
        best_sc[...] = jnp.full_like(best_sc, -jnp.inf)
        idx_sc[...] = jnp.zeros_like(idx_sc)
        tlog_sc[...] = jnp.zeros_like(tlog_sc)

    # logits tile for this vocab slice, f32 accumulation on the MXU
    logits = jnp.dot(h_sc[...], dw_ref[...], preferred_element_type=jnp.float32)
    logits = logits + db_ref[...].astype(jnp.float32)           # (tm, tv)
    tv = logits.shape[-1]
    col = jax.lax.broadcasted_iota(jnp.int32, logits.shape, 1) + j * tv

    # --- online log-sum-exp -------------------------------------------------
    tile_max = jnp.max(logits, axis=-1, keepdims=True)          # (tm, 1)
    new_m = jnp.maximum(m_sc[...], tile_max)
    l_sc[...] = (l_sc[...] * jnp.exp(m_sc[...] - new_m)
                 + jnp.sum(jnp.exp(logits - new_m), axis=-1, keepdims=True))
    m_sc[...] = new_m

    # --- streaming argmax (first occurrence) ---------------------------------
    is_tile_max = logits == tile_max
    tile_arg = jnp.min(jnp.where(is_tile_max, col, jnp.iinfo(jnp.int32).max),
                       axis=-1, keepdims=True)
    better = tile_max > best_sc[...]
    idx_sc[...] = jnp.where(better, tile_arg, idx_sc[...])
    best_sc[...] = jnp.where(better, tile_max, best_sc[...])

    # --- target logit (exactly one vocab tile contributes per row) -----------
    tgt = tgt_ref[...]                                           # (tm, 1) int32
    hit = col == tgt
    tlog_sc[...] += jnp.sum(jnp.where(hit, logits, 0.0), axis=-1, keepdims=True)

    @pl.when(j == pl.num_programs(1) - 1)
    def _():
        lse = m_sc[...] + jnp.log(l_sc[...])
        loss = lse - tlog_sc[...]                                # (tm, 1)
        # lane-dense output slabs (broadcast across 128 lanes; wrapper takes col 0)
        loss_ref[...] = jnp.broadcast_to(loss, loss_ref.shape)
        preds_ref[...] = jnp.broadcast_to(idx_sc[...], preds_ref.shape)


def mlm_decoder_xent_argmax(x, mlm_w, mlm_b, mlm_g, mlm_beta, dec_w, dec_b,
                            targets, *, eps=1e-12, max_vocab_tile=512):
    M, H = x.shape
    V = dec_w.shape[1]
    tm = _pick_tile(M, (128, 64, 32, 16, 8))
    tv = _pick_tile(V, tuple(c for c in (2048, 1024, 512, 256, 128)
                             if c <= max_vocab_tile))
    grid = (M // tm, V // tv)

    preds_slab, loss_slab = pl.pallas_call(
        functools.partial(_mlm_decoder_xent_kernel, eps=eps),
        out_shape=(jax.ShapeDtypeStruct((M, 128), jnp.int32),
                   jax.ShapeDtypeStruct((M, 128), jnp.float32)),
        grid=grid,
        in_specs=[
            pl.BlockSpec((tm, H), lambda i, j: (i, 0)),
            pl.BlockSpec((H, H), lambda i, j: (0, 0)),
            pl.BlockSpec((1, H), lambda i, j: (0, 0)),
            pl.BlockSpec((1, H), lambda i, j: (0, 0)),
            pl.BlockSpec((1, H), lambda i, j: (0, 0)),
            pl.BlockSpec((H, tv), lambda i, j: (0, j)),
            pl.BlockSpec((1, tv), lambda i, j: (0, j)),
            pl.BlockSpec((tm, 1), lambda i, j: (i, 0)),
        ],
        out_specs=(pl.BlockSpec((tm, 128), lambda i, j: (i, 0)),
                   pl.BlockSpec((tm, 128), lambda i, j: (i, 0))),
        scratch_shapes=[pltpu.VMEM((tm, H), jnp.bfloat16),   # cached MLM hidden
                        pltpu.VMEM((tm, 1), jnp.float32),    # running max
                        pltpu.VMEM((tm, 1), jnp.float32),    # running sum-exp
                        pltpu.VMEM((tm, 1), jnp.float32),    # best logit (argmax)
                        pltpu.VMEM((tm, 1), jnp.int32),      # best index
                        pltpu.VMEM((tm, 1), jnp.float32)],   # target logit
        compiler_params=pltpu.CompilerParams(
            dimension_semantics=("parallel", "arbitrary"),
            vmem_limit_bytes=VMEM_LIMIT),
    )(x, mlm_w, mlm_b.reshape(1, H), mlm_g.reshape(1, H), mlm_beta.reshape(1, H),
      dec_w, dec_b.reshape(1, V), targets.reshape(M, 1).astype(jnp.int32))
    return preds_slab[:, 0], loss_slab[:, 0]


# -----------------------------------------------------------------------------
# Synthetic BERT-MLM parameters (bf16 weights, f32 biases / LN params)
# -----------------------------------------------------------------------------
def init_params(key, *, vocab, hidden, ffn, n_layers, n_heads, max_pos, n_types=2):
    def w(k, shape):
        return (0.02 * jax.random.normal(k, shape, jnp.float32)).astype(jnp.bfloat16)

    keys = iter(jax.random.split(key, 8 + 4 * n_layers))
    p = {
        "word_emb": w(next(keys), (vocab, hidden)),
        "pos_emb": w(next(keys), (max_pos, hidden)),
        "type_emb": w(next(keys), (n_types, hidden)),
        "emb_ln_g": jnp.ones((hidden,), jnp.float32),
        "emb_ln_b": jnp.zeros((hidden,), jnp.float32),
        "layers": [],
        "mlm_w": w(next(keys), (hidden, hidden)),
        "mlm_b": jnp.zeros((hidden,), jnp.float32),
        "mlm_ln_g": jnp.ones((hidden,), jnp.float32),
        "mlm_ln_b": jnp.zeros((hidden,), jnp.float32),
        "dec_w": w(next(keys), (hidden, vocab)),
        "dec_b": jnp.zeros((vocab,), jnp.float32),
    }
    for _ in range(n_layers):
        p["layers"].append({
            "qkv_w": w(next(keys), (hidden, 3 * hidden)),   # fused Q|K|V
            "qkv_b": jnp.zeros((3 * hidden,), jnp.float32),
            "wo": w(next(keys), (hidden, hidden)),
            "bo": jnp.zeros((hidden,), jnp.float32),
            "attn_ln_g": jnp.ones((hidden,), jnp.float32),
            "attn_ln_b": jnp.zeros((hidden,), jnp.float32),
            "w1": w(next(keys), (hidden, ffn)),
            "b1": jnp.zeros((ffn,), jnp.float32),
            "w2": w(next(keys), (ffn, hidden)),
            "b2": jnp.zeros((hidden,), jnp.float32),
            "ffn_ln_g": jnp.ones((hidden,), jnp.float32),
            "ffn_ln_b": jnp.zeros((hidden,), jnp.float32),
        })
    return p


# -----------------------------------------------------------------------------
# Forward pass (mirrors MacBert.forward semantics)
# -----------------------------------------------------------------------------
def macbert_forward(params, source_ids, target_ids, *, n_heads):
    B, S = source_ids.shape
    H = params["word_emb"].shape[1]
    M = B * S

    # ----- embeddings (gather is XLA glue; add + LayerNorm is one Pallas kernel)
    tok = jnp.take(params["word_emb"], source_ids.reshape(-1), axis=0)   # [M,H]
    pos = params["pos_emb"][:S]                                          # [S,H]
    typ = params["type_emb"][0:1]                                        # [1,H]
    x = embeddings_ln(tok, pos, typ, params["emb_ln_g"], params["emb_ln_b"],
                      batch=B, seq=S)                                    # bf16 [M,H]

    # ----- transformer layers -----
    for lp in params["layers"]:
        qkv = matmul_bias(x, lp["qkv_w"], lp["qkv_b"])                   # [M, 3H]
        ctx = multi_head_attention(qkv, batch=B, seq=S, n_heads=n_heads)  # [M, H]
        # wo projection fused with residual add + LayerNorm
        x = matmul_bias_res_ln(ctx, lp["wo"], lp["bo"], residual=x,
                               gamma=lp["attn_ln_g"], beta=lp["attn_ln_b"])
        # whole FFN block (two matmuls + GELU + residual + LayerNorm) in one kernel
        x = ffn_ln(x, lp["w1"], lp["b1"], lp["w2"], lp["b2"],
                   gamma=lp["ffn_ln_g"], beta=lp["ffn_ln_b"])

    # ----- MLM head + decoder + cross-entropy + argmax fused in one kernel -----
    preds_flat, loss_flat = mlm_decoder_xent_argmax(
        x, params["mlm_w"], params["mlm_b"], params["mlm_ln_g"], params["mlm_ln_b"],
        params["dec_w"], params["dec_b"], target_ids.reshape(M))

    # nn.CrossEntropyLoss default reduction='mean' over all B*S positions
    return {"decode_result": preds_flat.reshape(B, S),
            "loss": jnp.mean(loss_flat)}


# -----------------------------------------------------------------------------
# Main
# -----------------------------------------------------------------------------
if __name__ == "__main__":
    # small, lane-aligned shapes consistent with the module's forward
    B, S = 2, 8
    VOCAB = 512
    HIDDEN = 256
    FFN = 512
    N_LAYERS = 2
    N_HEADS = 2           # Dh = 128 (lane-aligned)
    MAX_POS = 16

    PAD_ID, CLS_ID, SEP_ID = 0, 1, 2

    key = jax.random.PRNGKey(0)
    k_param, k_src, k_tgt = jax.random.split(key, 3)

    params = init_params(k_param, vocab=VOCAB, hidden=HIDDEN, ffn=FFN,
                         n_layers=N_LAYERS, n_heads=N_HEADS, max_pos=MAX_POS)

    # synthetic tokenized batch analogous to tensor_ready's [CLS] ... [SEP] [PAD]*
    src_body = jax.random.randint(k_src, (B, S - 3), 3, VOCAB, dtype=jnp.int32)
    tgt_body = jax.random.randint(k_tgt, (B, S - 3), 3, VOCAB, dtype=jnp.int32)
    cls_col = jnp.full((B, 1), CLS_ID, jnp.int32)
    sep_col = jnp.full((B, 1), SEP_ID, jnp.int32)
    pad_col = jnp.full((B, 1), PAD_ID, jnp.int32)
    source_ids = jnp.concatenate([cls_col, src_body, sep_col, pad_col], axis=1)
    target_ids = jnp.concatenate([cls_col, tgt_body, sep_col, pad_col], axis=1)

    forward = jax.jit(functools.partial(macbert_forward, n_heads=N_HEADS))
    out = forward(params, source_ids, target_ids)
    jax.block_until_ready(out)

    assert out["decode_result"].shape == (B, S)
    assert out["decode_result"].dtype == jnp.int32
    assert out["loss"].shape == ()
    assert bool(jnp.isfinite(out["loss"]))
    print("KERNEL_OK")
</pallas_src>

<mosaic_0001>
module attributes {stable_mosaic.version = 11 : i64} {
  func.func @_emb_add_ln_kernel(%arg0: i32, %arg1: i32, %arg2: memref<8x256xbf16, #tpu.memory_space<vmem>>, %arg3: memref<8x256xbf16, #tpu.memory_space<vmem>>, %arg4: memref<1x256xbf16, #tpu.memory_space<vmem>>, %arg5: memref<1x256xf32, #tpu.memory_space<vmem>>, %arg6: memref<1x256xf32, #tpu.memory_space<vmem>>, %arg7: memref<8x256xbf16, #tpu.memory_space<vmem>>) attributes {dimension_semantics = [#tpu.dimension_semantics<parallel>, #tpu.dimension_semantics<parallel>], iteration_bounds = array<i64: 2, 1>, scalar_prefetch = 0 : i64, scratch_operands = 0 : i64, tpu.core_type = #tpu.core_type<tc>, window_params = [{transform_indices = @transform_0, window_bounds = array<i64: 8, 256>}, {transform_indices = @transform_1, window_bounds = array<i64: 8, 256>}, {pipeline_mode = #tpu.pipeline_mode<synchronous>, transform_indices = @transform_2, window_bounds = array<i64: 1, 256>}, {pipeline_mode = #tpu.pipeline_mode<synchronous>, transform_indices = @transform_3, window_bounds = array<i64: 1, 256>}, {pipeline_mode = #tpu.pipeline_mode<synchronous>, transform_indices = @transform_4, window_bounds = array<i64: 1, 256>}, {transform_indices = @transform_5, window_bounds = array<i64: 8, 256>}]} {
    %c0 = arith.constant 0 : index
    %c0_0 = arith.constant 0 : index
    %0 = vector.load %arg2[%c0, %c0_0] : memref<8x256xbf16, #tpu.memory_space<vmem>>, vector<8x256xbf16>
    %1 = arith.extf %0 : vector<8x256xbf16> to vector<8x256xf32>
    %c0_1 = arith.constant 0 : index
    %c0_2 = arith.constant 0 : index
    %2 = vector.load %arg3[%c0_1, %c0_2] : memref<8x256xbf16, #tpu.memory_space<vmem>>, vector<8x256xbf16>
    %3 = arith.extf %2 : vector<8x256xbf16> to vector<8x256xf32>
    %4 = arith.addf %1, %3 : vector<8x256xf32>
    %c0_3 = arith.constant 0 : index
    %c0_4 = arith.constant 0 : index
    %5 = vector.load %arg4[%c0_3, %c0_4] : memref<1x256xbf16, #tpu.memory_space<vmem>>, vector<1x256xbf16>
    %6 = arith.extf %5 : vector<1x256xbf16> to vector<1x256xf32>
    %7 = vector.broadcast %6 : vector<1x256xf32> to vector<8x256xf32>
    %8 = arith.addf %4, %7 : vector<8x256xf32>
    %cst = arith.constant dense<0.000000e+00> : vector<8xf32>
    %9 = vector.multi_reduction <add>, %8, %cst [1] : vector<8x256xf32> to vector<8xf32>
    %10 = vector.shape_cast %9 : vector<8xf32> to vector<8x1xf32>
    %cst_5 = arith.constant 2.560000e+02 : f32
    %11 = vector.broadcast %cst_5 : f32 to vector<8x1xf32>
    %12 = arith.divf %10, %11 : vector<8x1xf32>
    %13 = vector.broadcast %12 : vector<8x1xf32> to vector<8x256xf32>
    %14 = arith.subf %8, %13 : vector<8x256xf32>
    %15 = arith.mulf %14, %14 : vector<8x256xf32>
    %cst_6 = arith.constant dense<0.000000e+00> : vector<8xf32>
    %16 = vector.multi_reduction <add>, %15, %cst_6 [1] : vector<8x256xf32> to vector<8xf32>
    %17 = vector.shape_cast %16 : vector<8xf32> to vector<8x1xf32>
    %cst_7 = arith.constant 2.560000e+02 : f32
    %18 = vector.broadcast %cst_7 : f32 to vector<8x1xf32>
    %19 = arith.divf %17, %18 : vector<8x1xf32>
    %20 = vector.broadcast %12 : vector<8x1xf32> to vector<8x256xf32>
    %21 = arith.subf %8, %20 : vector<8x256xf32>
    %cst_8 = arith.constant 9.99999996E-13 : f32
    %22 = vector.broadcast %cst_8 : f32 to vector<8x1xf32>
    %23 = arith.addf %19, %22 : vector<8x1xf32>
    %24 = math.rsqrt %23 : vector<8x1xf32>
    %25 = vector.broadcast %24 : vector<8x1xf32> to vector<8x256xf32>
    %26 = arith.mulf %21, %25 : vector<8x256xf32>
    %c0_9 = arith.constant 0 : index
    %c0_10 = arith.constant 0 : index
    %27 = vector.load %arg5[%c0_9, %c0_10] : memref<1x256xf32, #tpu.memory_space<vmem>>, vector<1x256xf32>
    %28 = vector.broadcast %27 : vector<1x256xf32> to vector<8x256xf32>
    %29 = arith.mulf %26, %28 : vector<8x256xf32>
    %c0_11 = arith.constant 0 : index
    %c0_12 = arith.constant 0 : index
    %30 = vector.load %arg6[%c0_11, %c0_12] : memref<1x256xf32, #tpu.memory_space<vmem>>, vector<1x256xf32>
    %31 = vector.broadcast %30 : vector<1x256xf32> to vector<8x256xf32>
    %32 = arith.addf %29, %31 : vector<8x256xf32>
    %33 = arith.truncf %32 : vector<8x256xf32> to vector<8x256xbf16>
    %c0_13 = arith.constant 0 : index
    %c0_14 = arith.constant 0 : index
    %34 = vector.load %arg7[%c0_13, %c0_14] : memref<8x256xbf16, #tpu.memory_space<vmem>>, vector<8x256xbf16>
    tpu.vector_store %arg7[%c0_13, %c0_14], %33 {strides = array<i32>} : memref<8x256xbf16, #tpu.memory_space<vmem>>, vector<8x256xbf16>,
    return
  }
  func.func @transform_0(%arg0: i32, %arg1: i32) -> (i32, i32) {
    %c1_i32 = arith.constant 1 : i32
    %0 = arith.muli %arg0, %c1_i32 : i32
    %1 = arith.addi %0, %arg1 : i32
    %c0_i32 = arith.constant 0 : i32
    %c0_i32_0 = arith.constant 0 : i32
    return %1, %c0_i32 : i32, i32
  }
  func.func @transform_1(%arg0: i32, %arg1: i32) -> (i32, i32) {
    %c0_i32 = arith.constant 0 : i32
    %c0_i32_0 = arith.constant 0 : i32
    return %arg1, %c0_i32 : i32, i32
  }
  func.func @transform_2(%arg0: i32, %arg1: i32) -> (i32, i32) {
    %c0_i32 = arith.constant 0 : i32
    %c0_i32_0 = arith.constant 0 : i32
    %c0_i32_1 = arith.constant 0 : i32
    return %c0_i32, %c0_i32_0 : i32, i32
  }
  func.func @transform_3(%arg0: i32, %arg1: i32) -> (i32, i32) {
    %c0_i32 = arith.constant 0 : i32
    %c0_i32_0 = arith.constant 0 : i32
    %c0_i32_1 = arith.constant 0 : i32
    return %c0_i32, %c0_i32_0 : i32, i32
  }
  func.func @transform_4(%arg0: i32, %arg1: i32) -> (i32, i32) {
    %c0_i32 = arith.constant 0 : i32
    %c0_i32_0 = arith.constant 0 : i32
    %c0_i32_1 = arith.constant 0 : i32
    return %c0_i32, %c0_i32_0 : i32, i32
  }
  func.func @transform_5(%arg0: i32, %arg1: i32) -> (i32, i32) {
    %c1_i32 = arith.constant 1 : i32
    %0 = arith.muli %arg0, %c1_i32 : i32
    %1 = arith.addi %0, %arg1 : i32
    %c0_i32 = arith.constant 0 : i32
    %c0_i32_0 = arith.constant 0 : i32
    return %1, %c0_i32 : i32, i32
  }
}

module attributes {stable_mosaic.version = 11 : i64} {
  func.func @_mm_bias_kernel(%arg0: i32, %arg1: i32, %arg2: i32, %arg3: memref<16x256xbf16, #tpu.memory_space<vmem>>, %arg4: memref<256x256xbf16, #tpu.memory_space<vmem>>, %arg5: memref<1x256xf32, #tpu.memory_space<vmem>>, %arg6: memref<16x256xbf16, #tpu.memory_space<vmem>>, %arg7: memref<16x256xf32, #tpu.memory_space<vmem>>) attributes {dimension_semantics = [#tpu.dimension_semantics<parallel>, #tpu.dimension_semantics<parallel>, #tpu.dimension_semantics<arbitrary>], iteration_bounds = array<i64: 1, 3, 1>, scalar_prefetch = 0 : i64, scratch_operands = 1 : i64, tpu.core_type = #tpu.core_type<tc>, window_params = [{transform_indices = @transform_0, window_bounds = array<i64: 16, 256>}, {transform_indices = @transform_1, window_bounds = array<i64: 256, 256>}, {transform_indices = @transform_2, window_bounds = array<i64: 1, 256>}, {transform_indices = @transform_3, window_bounds = array<i64: 16, 256>}]} {
    %c0_i32 = arith.constant 0 : i32
    %0 = arith.cmpi eq, %arg2, %c0_i32 : i32
    %1 = arith.extui %0 : i1 to i32
    %c0_i32_0 = arith.constant 0 : i32
    %2 = arith.cmpi ne, %1, %c0_i32_0 : i32
    scf.if %2 {
      %cst_10 = arith.constant 0.000000e+00 : f32
      %12 = vector.broadcast %cst_10 : f32 to vector<16x256xf32>
      %c0_11 = arith.constant 0 : index
      %c0_12 = arith.constant 0 : index
      %13 = vector.load %arg7[%c0_11, %c0_12] : memref<16x256xf32, #tpu.memory_space<vmem>>, vector<16x256xf32>
      tpu.vector_store %arg7[%c0_11, %c0_12], %12 {strides = array<i32>} : memref<16x256xf32, #tpu.memory_space<vmem>>, vector<16x256xf32>,
    } else {
    }
    %c0 = arith.constant 0 : index
    %c0_1 = arith.constant 0 : index
    %3 = vector.load %arg7[%c0, %c0_1] : memref<16x256xf32, #tpu.memory_space<vmem>>, vector<16x256xf32>
    %c0_2 = arith.constant 0 : index
    %c0_3 = arith.constant 0 : index
    %4 = vector.load %arg3[%c0_2, %c0_3] : memref<16x256xbf16, #tpu.memory_space<vmem>>, vector<16x256xbf16>
    %c0_4 = arith.constant 0 : index
    %c0_5 = arith.constant 0 : index
    %5 = vector.load %arg4[%c0_4, %c0_5] : memref<256x256xbf16, #tpu.memory_space<vmem>>, vector<256x256xbf16>
    %cst = arith.constant dense<0.000000e+00> : vector<16x256xf32>
    %6 = tpu.matmul %4, %5, %cst {dimension_numbers = #tpu.dot_dimension_numbers<[1], [0], [0], [1], [0, 0, 1, 1], [], []>} : vector<16x256xbf16>, vector<256x256xbf16>, vector<16x256xf32> -> vector<16x256xf32>
    %7 = arith.addf %3, %6 : vector<16x256xf32>
    %c0_6 = arith.constant 0 : index
    %c0_7 = arith.constant 0 : index
    %8 = vector.load %arg7[%c0_6, %c0_7] : memref<16x256xf32, #tpu.memory_space<vmem>>, vector<16x256xf32>
    tpu.vector_store %arg7[%c0_6, %c0_7], %7 {strides = array<i32>} : memref<16x256xf32, #tpu.memory_space<vmem>>, vector<16x256xf32>,
    %c0_i32_8 = arith.constant 0 : i32
    %9 = arith.cmpi eq, %arg2, %c0_i32_8 : i32
    %10 = arith.extui %9 : i1 to i32
    %c0_i32_9 = arith.constant 0 : i32
    %11 = arith.cmpi ne, %10, %c0_i32_9 : i32
    scf.if %11 {
      %c0_10 = arith.constant 0 : index
      %c0_11 = arith.constant 0 : index
      %12 = vector.load %arg7[%c0_10, %c0_11] : memref<16x256xf32, #tpu.memory_space<vmem>>, vector<16x256xf32>
      %c0_12 = arith.constant 0 : index
      %c0_13 = arith.constant 0 : index
      %13 = vector.load %arg5[%c0_12, %c0_13] : memref<1x256xf32, #tpu.memory_space<vmem>>, vector<1x256xf32>
      %14 = vector.broadcast %13 : vector<1x256xf32> to vector<16x256xf32>
      %15 = arith.addf %12, %14 : vector<16x256xf32>
      %16 = arith.truncf %15 : vector<16x256xf32> to vector<16x256xbf16>
      %c0_14 = arith.constant 0 : index
      %c0_15 = arith.constant 0 : index
      %17 = vector.load %arg6[%c0_14, %c0_15] : memref<16x256xbf16, #tpu.memory_space<vmem>>, vector<16x256xbf16>
      tpu.vector_store %arg6[%c0_14, %c0_15], %16 {strides = array<i32>} : memref<16x256xbf16, #tpu.memory_space<vmem>>, vector<16x256xbf16>,
    } else {
    }
    return
  }
  func.func @transform_0(%arg0: i32, %arg1: i32, %arg2: i32) -> (i32, i32) {
    %c0_i32 = arith.constant 0 : i32
    return %arg0, %arg2 : i32, i32
  }
  func.func @transform_1(%arg0: i32, %arg1: i32, %arg2: i32) -> (i32, i32) {
    %c0_i32 = arith.constant 0 : i32
    return %arg2, %arg1 : i32, i32
  }
  func.func @transform_2(%arg0: i32, %arg1: i32, %arg2: i32) -> (i32, i32) {
    %c0_i32 = arith.constant 0 : i32
    %c0_i32_0 = arith.constant 0 : i32
    return %c0_i32, %arg1 : i32, i32
  }
  func.func @transform_3(%arg0: i32, %arg1: i32, %arg2: i32) -> (i32, i32) {
    %c0_i32 = arith.constant 0 : i32
    return %arg0, %arg1 : i32, i32
  }
}

module attributes {stable_mosaic.version = 11 : i64} {
  func.func @_mm_res_ln_kernel(%arg0: i32, %arg1: i32, %arg2: memref<16x256xbf16, #tpu.memory_space<vmem>>, %arg3: memref<256x256xbf16, #tpu.memory_space<vmem>>, %arg4: memref<1x256xf32, #tpu.memory_space<vmem>>, %arg5: memref<16x256xbf16, #tpu.memory_space<vmem>>, %arg6: memref<1x256xf32, #tpu.memory_space<vmem>>, %arg7: memref<1x256xf32, #tpu.memory_space<vmem>>, %arg8: memref<16x256xbf16, #tpu.memory_space<vmem>>, %arg9: memref<16x256xf32, #tpu.memory_space<vmem>>) attributes {dimension_semantics = [#tpu.dimension_semantics<parallel>, #tpu.dimension_semantics<arbitrary>], iteration_bounds = array<i64: 1, 1>, scalar_prefetch = 0 : i64, scratch_operands = 1 : i64, tpu.core_type = #tpu.core_type<tc>, window_params = [{transform_indices = @transform_0, window_bounds = array<i64: 16, 256>}, {transform_indices = @transform_1, window_bounds = array<i64: 256, 256>}, {pipeline_mode = #tpu.pipeline_mode<synchronous>, transform_indices = @transform_2, window_bounds = array<i64: 1, 256>}, {transform_indices = @transform_3, window_bounds = array<i64: 16, 256>}, {pipeline_mode = #tpu.pipeline_mode<synchronous>, transform_indices = @transform_4, window_bounds = array<i64: 1, 256>}, {pipeline_mode = #tpu.pipeline_mode<synchronous>, transform_indices = @transform_5, window_bounds = array<i64: 1, 256>}, {transform_indices = @transform_6, window_bounds = array<i64: 16, 256>}]} {
    %c0_i32 = arith.constant 0 : i32
    %0 = arith.cmpi eq, %arg1, %c0_i32 : i32
    %1 = arith.extui %0 : i1 to i32
    %c0_i32_0 = arith.constant 0 : i32
    %2 = arith.cmpi ne, %1, %c0_i32_0 : i32
    scf.if %2 {
      %cst_10 = arith.constant 0.000000e+00 : f32
      %12 = vector.broadcast %cst_10 : f32 to vector<16x256xf32>
      %c0_11 = arith.constant 0 : index
      %c0_12 = arith.constant 0 : index
      %13 = vector.load %arg9[%c0_11, %c0_12] : memref<16x256xf32, #tpu.memory_space<vmem>>, vector<16x256xf32>
      tpu.vector_store %arg9[%c0_11, %c0_12], %12 {strides = array<i32>} : memref<16x256xf32, #tpu.memory_space<vmem>>, vector<16x256xf32>,
    } else {
    }
    %c0 = arith.constant 0 : index
    %c0_1 = arith.constant 0 : index
    %3 = vector.load %arg9[%c0, %c0_1] : memref<16x256xf32, #tpu.memory_space<vmem>>, vector<16x256xf32>
    %c0_2 = arith.constant 0 : index
    %c0_3 = arith.constant 0 : index
    %4 = vector.load %arg2[%c0_2, %c0_3] : memref<16x256xbf16, #tpu.memory_space<vmem>>, vector<16x256xbf16>
    %c0_4 = arith.constant 0 : index
    %c0_5 = arith.constant 0 : index
    %5 = vector.load %arg3[%c0_4, %c0_5] : memref<256x256xbf16, #tpu.memory_space<vmem>>, vector<256x256xbf16>
    %cst = arith.constant dense<0.000000e+00> : vector<16x256xf32>
    %6 = tpu.matmul %4, %5, %cst {dimension_numbers = #tpu.dot_dimension_numbers<[1], [0], [0], [1], [0, 0, 1, 1], [], []>} : vector<16x256xbf16>, vector<256x256xbf16>, vector<16x256xf32> -> vector<16x256xf32>
    %7 = arith.addf %3, %6 : vector<16x256xf32>
    %c0_6 = arith.constant 0 : index
    %c0_7 = arith.constant 0 : index
    %8 = vector.load %arg9[%c0_6, %c0_7] : memref<16x256xf32, #tpu.memory_space<vmem>>, vector<16x256xf32>
    tpu.vector_store %arg9[%c0_6, %c0_7], %7 {strides = array<i32>} : memref<16x256xf32, #tpu.memory_space<vmem>>, vector<16x256xf32>,
    %c0_i32_8 = arith.constant 0 : i32
    %9 = arith.cmpi eq, %arg1, %c0_i32_8 : i32
    %10 = arith.extui %9 : i1 to i32
    %c0_i32_9 = arith.constant 0 : i32
    %11 = arith.cmpi ne, %10, %c0_i32_9 : i32
    scf.if %11 {
      %c0_10 = arith.constant 0 : index
      %c0_11 = arith.constant 0 : index
      %12 = vector.load %arg9[%c0_10, %c0_11] : memref<16x256xf32, #tpu.memory_space<vmem>>, vector<16x256xf32>
      %c0_12 = arith.constant 0 : index
      %c0_13 = arith.constant 0 : index
      %13 = vector.load %arg4[%c0_12, %c0_13] : memref<1x256xf32, #tpu.memory_space<vmem>>, vector<1x256xf32>
      %14 = vector.broadcast %13 : vector<1x256xf32> to vector<16x256xf32>
      %15 = arith.addf %12, %14 : vector<16x256xf32>
      %c0_14 = arith.constant 0 : index
      %c0_15 = arith.constant 0 : index
      %16 = vector.load %arg5[%c0_14, %c0_15] : memref<16x256xbf16, #tpu.memory_space<vmem>>, vector<16x256xbf16>
      %17 = arith.extf %16 : vector<16x256xbf16> to vector<16x256xf32>
      %18 = arith.addf %15, %17 : vector<16x256xf32>
      %cst_16 = arith.constant dense<0.000000e+00> : vector<16xf32>
      %19 = vector.multi_reduction <add>, %18, %cst_16 [1] : vector<16x256xf32> to vector<16xf32>
      %20 = vector.shape_cast %19 : vector<16xf32> to vector<16x1xf32>
      %cst_17 = arith.constant 2.560000e+02 : f32
      %21 = vector.broadcast %cst_17 : f32 to vector<16x1xf32>
      %22 = arith.divf %20, %21 : vector<16x1xf32>
      %23 = vector.broadcast %22 : vector<16x1xf32> to vector<16x256xf32>
      %24 = arith.subf %18, %23 : vector<16x256xf32>
      %25 = arith.mulf %24, %24 : vector<16x256xf32>
      %cst_18 = arith.constant dense<0.000000e+00> : vector<16xf32>
      %26 = vector.multi_reduction <add>, %25, %cst_18 [1] : vector<16x256xf32> to vector<16xf32>
      %27 = vector.shape_cast %26 : vector<16xf32> to vector<16x1xf32>
      %cst_19 = arith.constant 2.560000e+02 : f32
      %28 = vector.broadcast %cst_19 : f32 to vector<16x1xf32>
      %29 = arith.divf %27, %28 : vector<16x1xf32>
      %30 = vector.broadcast %22 : vector<16x1xf32> to vector<16x256xf32>
      %31 = arith.subf %18, %30 : vector<16x256xf32>
      %cst_20 = arith.constant 9.99999996E-13 : f32
      %32 = vector.broadcast %cst_20 : f32 to vector<16x1xf32>
      %33 = arith.addf %29, %32 : vector<16x1xf32>
      %34 = math.rsqrt %33 : vector<16x1xf32>
      %35 = vector.broadcast %34 : vector<16x1xf32> to vector<16x256xf32>
      %36 = arith.mulf %31, %35 : vector<16x256xf32>
      %c0_21 = arith.constant 0 : index
      %c0_22 = arith.constant 0 : index
      %37 = vector.load %arg6[%c0_21, %c0_22] : memref<1x256xf32, #tpu.memory_space<vmem>>, vector<1x256xf32>
      %38 = vector.broadcast %37 : vector<1x256xf32> to vector<16x256xf32>
      %39 = arith.mulf %36, %38 : vector<16x256xf32>
      %c0_23 = arith.constant 0 : index
      %c0_24 = arith.constant 0 : index
      %40 = vector.load %arg7[%c0_23, %c0_24] : memref<1x256xf32, #tpu.memory_space<vmem>>, vector<1x256xf32>
      %41 = vector.broadcast %40 : vector<1x256xf32> to vector<16x256xf32>
      %42 = arith.addf %39, %41 : vector<16x256xf32>
      %43 = arith.truncf %42 : vector<16x256xf32> to vector<16x256xbf16>
      %c0_25 = arith.constant 0 : index
      %c0_26 = arith.constant 0 : index
      %44 = vector.load %arg8[%c0_25, %c0_26] : memref<16x256xbf16, #tpu.memory_space<vmem>>, vector<16x256xbf16>
      tpu.vector_store %arg8[%c0_25, %c0_26], %43 {strides = array<i32>} : memref<16x256xbf16, #tpu.memory_space<vmem>>, vector<16x256xbf16>,
    } else {
    }
    return
  }
  func.func @transform_0(%arg0: i32, %arg1: i32) -> (i32, i32) {
    %c0_i32 = arith.constant 0 : i32
    return %arg0, %arg1 : i32, i32
  }
  func.func @transform_1(%arg0: i32, %arg1: i32) -> (i32, i32) {
    %c0_i32 = arith.constant 0 : i32
    %c0_i32_0 = arith.constant 0 : i32
    return %arg1, %c0_i32 : i32, i32
  }
  func.func @transform_2(%arg0: i32, %arg1: i32) -> (i32, i32) {
    %c0_i32 = arith.constant 0 : i32
    %c0_i32_0 = arith.constant 0 : i32
    %c0_i32_1 = arith.constant 0 : i32
    return %c0_i32, %c0_i32_0 : i32, i32
  }
  func.func @transform_3(%arg0: i32, %arg1: i32) -> (i32, i32) {
    %c0_i32 = arith.constant 0 : i32
    %c0_i32_0 = arith.constant 0 : i32
    return %arg0, %c0_i32 : i32, i32
  }
  func.func @transform_4(%arg0: i32, %arg1: i32) -> (i32, i32) {
    %c0_i32 = arith.constant 0 : i32
    %c0_i32_0 = arith.constant 0 : i32
    %c0_i32_1 = arith.constant 0 : i32
    return %c0_i32, %c0_i32_0 : i32, i32
  }
  func.func @transform_5(%arg0: i32, %arg1: i32) -> (i32, i32) {
    %c0_i32 = arith.constant 0 : i32
    %c0_i32_0 = arith.constant 0 : i32
    %c0_i32_1 = arith.constant 0 : i32
    return %c0_i32, %c0_i32_0 : i32, i32
  }
  func.func @transform_6(%arg0: i32, %arg1: i32) -> (i32, i32) {
    %c0_i32 = arith.constant 0 : i32
    %c0_i32_0 = arith.constant 0 : i32
    return %arg0, %c0_i32 : i32, i32
  }
}

module attributes {stable_mosaic.version = 11 : i64} {
  func.func @_attention_kernel(%arg0: i32, %arg1: i32, %arg2: memref<8x128xbf16, #tpu.memory_space<vmem>>, %arg3: memref<8x128xbf16, #tpu.memory_space<vmem>>, %arg4: memref<8x128xbf16, #tpu.memory_space<vmem>>, %arg5: memref<8x128xbf16, #tpu.memory_space<vmem>>) attributes {dimension_semantics = [#tpu.dimension_semantics<parallel>, #tpu.dimension_semantics<parallel>], iteration_bounds = array<i64: 2, 2>, scalar_prefetch = 0 : i64, scratch_operands = 0 : i64, tpu.core_type = #tpu.core_type<tc>, window_params = [{transform_indices = @transform_0, window_bounds = array<i64: 8, 128>}, {transform_indices = @transform_1, window_bounds = array<i64: 8, 128>}, {transform_indices = @transform_2, window_bounds = array<i64: 8, 128>}, {transform_indices = @transform_3, window_bounds = array<i64: 8, 128>}]} {
    %c0 = arith.constant 0 : index
    %c0_0 = arith.constant 0 : index
    %0 = vector.load %arg2[%c0, %c0_0] : memref<8x128xbf16, #tpu.memory_space<vmem>>, vector<8x128xbf16>
    %c0_1 = arith.constant 0 : index
    %c0_2 = arith.constant 0 : index
    %1 = vector.load %arg3[%c0_1, %c0_2] : memref<8x128xbf16, #tpu.memory_space<vmem>>, vector<8x128xbf16>
    %c0_3 = arith.constant 0 : index
    %c0_4 = arith.constant 0 : index
    %2 = vector.load %arg4[%c0_3, %c0_4] : memref<8x128xbf16, #tpu.memory_space<vmem>>, vector<8x128xbf16>
    %cst = arith.constant dense<0.000000e+00> : vector<8x8xf32>
    %3 = tpu.matmul %0, %1, %cst {dimension_numbers = #tpu.dot_dimension_numbers<[1], [1], [0], [0], [0, 0, 1, 0], [], []>} : vector<8x128xbf16>, vector<8x128xbf16>, vector<8x8xf32> -> vector<8x8xf32>
    %cst_5 = arith.constant 0.0883883461 : f32
    %4 = vector.broadcast %cst_5 : f32 to vector<8x8xf32>
    %5 = arith.mulf %3, %4 : vector<8x8xf32>
    %cst_6 = arith.constant dense<0xFF800000> : vector<8xf32>
    %6 = vector.multi_reduction <maximumf>, %5, %cst_6 [1] : vector<8x8xf32> to vector<8xf32>
    %7 = vector.shape_cast %6 : vector<8xf32> to vector<8x1xf32>
    %8 = vector.broadcast %7 : vector<8x1xf32> to vector<8x8xf32>
    %9 = arith.subf %5, %8 : vector<8x8xf32>
    %10 = math.exp %9 : vector<8x8xf32>
    %cst_7 = arith.constant dense<0.000000e+00> : vector<8xf32>
    %11 = vector.multi_reduction <add>, %10, %cst_7 [1] : vector<8x8xf32> to vector<8xf32>
    %12 = vector.shape_cast %11 : vector<8xf32> to vector<8x1xf32>
    %13 = tpu.reciprocal %12 {approx = true} : vector<8x1xf32> -> vector<8x1xf32>
    %14 = vector.broadcast %13 : vector<8x1xf32> to vector<8x8xf32>
    %15 = arith.mulf %10, %14 : vector<8x8xf32>
    %16 = arith.truncf %15 : vector<8x8xf32> to vector<8x8xbf16>
    %cst_8 = arith.constant dense<0.000000e+00> : vector<8x128xf32>
    %17 = tpu.matmul %16, %2, %cst_8 {dimension_numbers = #tpu.dot_dimension_numbers<[1], [0], [0], [1], [0, 0, 1, 1], [], []>} : vector<8x8xbf16>, vector<8x128xbf16>, vector<8x128xf32> -> vector<8x128xf32>
    %18 = arith.truncf %17 : vector<8x128xf32> to vector<8x128xbf16>
    %c0_9 = arith.constant 0 : index
    %c0_10 = arith.constant 0 : index
    %19 = vector.load %arg5[%c0_9, %c0_10] : memref<8x128xbf16, #tpu.memory_space<vmem>>, vector<8x128xbf16>
    tpu.vector_store %arg5[%c0_9, %c0_10], %18 {strides = array<i32>} : memref<8x128xbf16, #tpu.memory_space<vmem>>, vector<8x128xbf16>,
    return
  }
  func.func @transform_0(%arg0: i32, %arg1: i32) -> (i32, i32) {
    %c0_i32 = arith.constant 0 : i32
    return %arg0, %arg1 : i32, i32
  }
  func.func @transform_1(%arg0: i32, %arg1: i32) -> (i32, i32) {
    %c2_i32 = arith.constant 2 : i32
    %0 = arith.addi %c2_i32, %arg1 : i32
    %c0_i32 = arith.constant 0 : i32
    return %arg0, %0 : i32, i32
  }
  func.func @transform_2(%arg0: i32, %arg1: i32) -> (i32, i32) {
    %c4_i32 = arith.constant 4 : i32
    %0 = arith.addi %c4_i32, %arg1 : i32
    %c0_i32 = arith.constant 0 : i32
    return %arg0, %0 : i32, i32
  }
  func.func @transform_3(%arg0: i32, %arg1: i32) -> (i32, i32) {
    %c0_i32 = arith.constant 0 : i32
    return %arg0, %arg1 : i32, i32
  }
}

module attributes {stable_mosaic.version = 11 : i64} {
  func.func @_ffn_ln_kernel(%arg0: i32, %arg1: memref<16x256xbf16, #tpu.memory_space<vmem>>, %arg2: memref<256x512xbf16, #tpu.memory_space<vmem>>, %arg3: memref<1x512xf32, #tpu.memory_space<vmem>>, %arg4: memref<512x256xbf16, #tpu.memory_space<vmem>>, %arg5: memref<1x256xf32, #tpu.memory_space<vmem>>, %arg6: memref<1x256xf32, #tpu.memory_space<vmem>>, %arg7: memref<1x256xf32, #tpu.memory_space<vmem>>, %arg8: memref<16x256xbf16, #tpu.memory_space<vmem>>) attributes {dimension_semantics = [#tpu.dimension_semantics<parallel>], iteration_bounds = array<i64: 1>, scalar_prefetch = 0 : i64, scratch_operands = 0 : i64, tpu.core_type = #tpu.core_type<tc>, window_params = [{transform_indices = @transform_0, window_bounds = array<i64: 16, 256>}, {pipeline_mode = #tpu.pipeline_mode<synchronous>, transform_indices = @transform_1, window_bounds = array<i64: 256, 512>}, {pipeline_mode = #tpu.pipeline_mode<synchronous>, transform_indices = @transform_2, window_bounds = array<i64: 1, 512>}, {pipeline_mode = #tpu.pipeline_mode<synchronous>, transform_indices = @transform_3, window_bounds = array<i64: 512, 256>}, {pipeline_mode = #tpu.pipeline_mode<synchronous>, transform_indices = @transform_4, window_bounds = array<i64: 1, 256>}, {pipeline_mode = #tpu.pipeline_mode<synchronous>, transform_indices = @transform_5, window_bounds = array<i64: 1, 256>}, {pipeline_mode = #tpu.pipeline_mode<synchronous>, transform_indices = @transform_6, window_bounds = array<i64: 1, 256>}, {transform_indices = @transform_7, window_bounds = array<i64: 16, 256>}]} {
    %c0 = arith.constant 0 : index
    %c0_0 = arith.constant 0 : index
    %0 = vector.load %arg1[%c0, %c0_0] : memref<16x256xbf16, #tpu.memory_space<vmem>>, vector<16x256xbf16>
    %c0_1 = arith.constant 0 : index
    %c0_2 = arith.constant 0 : index
    %1 = vector.load %arg2[%c0_1, %c0_2] : memref<256x512xbf16, #tpu.memory_space<vmem>>, vector<256x512xbf16>
    %cst = arith.constant dense<0.000000e+00> : vector<16x512xf32>
    %2 = tpu.matmul %0, %1, %cst {dimension_numbers = #tpu.dot_dimension_numbers<[1], [0], [0], [1], [0, 0, 1, 1], [], []>} : vector<16x256xbf16>, vector<256x512xbf16>, vector<16x512xf32> -> vector<16x512xf32>
    %c0_3 = arith.constant 0 : index
    %c0_4 = arith.constant 0 : index
    %3 = vector.load %arg3[%c0_3, %c0_4] : memref<1x512xf32, #tpu.memory_space<vmem>>, vector<1x512xf32>
    %4 = vector.broadcast %3 : vector<1x512xf32> to vector<16x512xf32>
    %5 = arith.addf %2, %4 : vector<16x512xf32>
    %6 = arith.mulf %5, %5 : vector<16x512xf32>
    %7 = arith.mulf %5, %6 : vector<16x512xf32>
    %cst_5 = arith.constant 4.471500e-02 : f32
    %8 = vector.broadcast %cst_5 : f32 to vector<16x512xf32>
    %9 = arith.mulf %8, %7 : vector<16x512xf32>
    %10 = arith.addf %5, %9 : vector<16x512xf32>
    %cst_6 = arith.constant 0.797884583 : f32
    %11 = vector.broadcast %cst_6 : f32 to vector<16x512xf32>
    %12 = arith.mulf %11, %10 : vector<16x512xf32>
    %13 = math.tanh %12 : vector<16x512xf32>
    %cst_7 = arith.constant 1.000000e+00 : f32
    %14 = vector.broadcast %cst_7 : f32 to vector<16x512xf32>
    %15 = arith.addf %14, %13 : vector<16x512xf32>
    %cst_8 = arith.constant 5.000000e-01 : f32
    %16 = vector.broadcast %cst_8 : f32 to vector<16x512xf32>
    %17 = arith.mulf %16, %15 : vector<16x512xf32>
    %18 = arith.mulf %5, %17 : vector<16x512xf32>
    %19 = arith.truncf %18 : vector<16x512xf32> to vector<16x512xbf16>
    %c0_9 = arith.constant 0 : index
    %c0_10 = arith.constant 0 : index
    %20 = vector.load %arg4[%c0_9, %c0_10] : memref<512x256xbf16, #tpu.memory_space<vmem>>, vector<512x256xbf16>
    %cst_11 = arith.constant dense<0.000000e+00> : vector<16x256xf32>
    %21 = tpu.matmul %19, %20, %cst_11 {dimension_numbers = #tpu.dot_dimension_numbers<[1], [0], [0], [1], [0, 0, 1, 1], [], []>} : vector<16x512xbf16>, vector<512x256xbf16>, vector<16x256xf32> -> vector<16x256xf32>
    %c0_12 = arith.constant 0 : index
    %c0_13 = arith.constant 0 : index
    %22 = vector.load %arg5[%c0_12, %c0_13] : memref<1x256xf32, #tpu.memory_space<vmem>>, vector<1x256xf32>
    %23 = vector.broadcast %22 : vector<1x256xf32> to vector<16x256xf32>
    %24 = arith.addf %21, %23 : vector<16x256xf32>
    %25 = arith.extf %0 : vector<16x256xbf16> to vector<16x256xf32>
    %26 = arith.addf %24, %25 : vector<16x256xf32>
    %cst_14 = arith.constant dense<0.000000e+00> : vector<16xf32>
    %27 = vector.multi_reduction <add>, %26, %cst_14 [1] : vector<16x256xf32> to vector<16xf32>
    %28 = vector.shape_cast %27 : vector<16xf32> to vector<16x1xf32>
    %cst_15 = arith.constant 2.560000e+02 : f32
    %29 = vector.broadcast %cst_15 : f32 to vector<16x1xf32>
    %30 = arith.divf %28, %29 : vector<16x1xf32>
    %31 = vector.broadcast %30 : vector<16x1xf32> to vector<16x256xf32>
    %32 = arith.subf %26, %31 : vector<16x256xf32>
    %33 = arith.mulf %32, %32 : vector<16x256xf32>
    %cst_16 = arith.constant dense<0.000000e+00> : vector<16xf32>
    %34 = vector.multi_reduction <add>, %33, %cst_16 [1] : vector<16x256xf32> to vector<16xf32>
    %35 = vector.shape_cast %34 : vector<16xf32> to vector<16x1xf32>
    %cst_17 = arith.constant 2.560000e+02 : f32
    %36 = vector.broadcast %cst_17 : f32 to vector<16x1xf32>
    %37 = arith.divf %35, %36 : vector<16x1xf32>
    %38 = vector.broadcast %30 : vector<16x1xf32> to vector<16x256xf32>
    %39 = arith.subf %26, %38 : vector<16x256xf32>
    %cst_18 = arith.constant 9.99999996E-13 : f32
    %40 = vector.broadcast %cst_18 : f32 to vector<16x1xf32>
    %41 = arith.addf %37, %40 : vector<16x1xf32>
    %42 = math.rsqrt %41 : vector<16x1xf32>
    %43 = vector.broadcast %42 : vector<16x1xf32> to vector<16x256xf32>
    %44 = arith.mulf %39, %43 : vector<16x256xf32>
    %c0_19 = arith.constant 0 : index
    %c0_20 = arith.constant 0 : index
    %45 = vector.load %arg6[%c0_19, %c0_20] : memref<1x256xf32, #tpu.memory_space<vmem>>, vector<1x256xf32>
    %46 = vector.broadcast %45 : vector<1x256xf32> to vector<16x256xf32>
    %47 = arith.mulf %44, %46 : vector<16x256xf32>
    %c0_21 = arith.constant 0 : index
    %c0_22 = arith.constant 0 : index
    %48 = vector.load %arg7[%c0_21, %c0_22] : memref<1x256xf32, #tpu.memory_space<vmem>>, vector<1x256xf32>
    %49 = vector.broadcast %48 : vector<1x256xf32> to vector<16x256xf32>
    %50 = arith.addf %47, %49 : vector<16x256xf32>
    %51 = arith.truncf %50 : vector<16x256xf32> to vector<16x256xbf16>
    %c0_23 = arith.constant 0 : index
    %c0_24 = arith.constant 0 : index
    %52 = vector.load %arg8[%c0_23, %c0_24] : memref<16x256xbf16, #tpu.memory_space<vmem>>, vector<16x256xbf16>
    tpu.vector_store %arg8[%c0_23, %c0_24], %51 {strides = array<i32>} : memref<16x256xbf16, #tpu.memory_space<vmem>>, vector<16x256xbf16>,
    return
  }
  func.func @transform_0(%arg0: i32) -> (i32, i32) {
    %c0_i32 = arith.constant 0 : i32
    %c0_i32_0 = arith.constant 0 : i32
    return %arg0, %c0_i32 : i32, i32
  }
  func.func @transform_1(%arg0: i32) -> (i32, i32) {
    %c0_i32 = arith.constant 0 : i32
    %c0_i32_0 = arith.constant 0 : i32
    %c0_i32_1 = arith.constant 0 : i32
    return %c0_i32, %c0_i32_0 : i32, i32
  }
  func.func @transform_2(%arg0: i32) -> (i32, i32) {
    %c0_i32 = arith.constant 0 : i32
    %c0_i32_0 = arith.constant 0 : i32
    %c0_i32_1 = arith.constant 0 : i32
    return %c0_i32, %c0_i32_0 : i32, i32
  }
  func.func @transform_3(%arg0: i32) -> (i32, i32) {
    %c0_i32 = arith.constant 0 : i32
    %c0_i32_0 = arith.constant 0 : i32
    %c0_i32_1 = arith.constant 0 : i32
    return %c0_i32, %c0_i32_0 : i32, i32
  }
  func.func @transform_4(%arg0: i32) -> (i32, i32) {
    %c0_i32 = arith.constant 0 : i32
    %c0_i32_0 = arith.constant 0 : i32
    %c0_i32_1 = arith.constant 0 : i32
    return %c0_i32, %c0_i32_0 : i32, i32
  }
  func.func @transform_5(%arg0: i32) -> (i32, i32) {
    %c0_i32 = arith.constant 0 : i32
    %c0_i32_0 = arith.constant 0 : i32
    %c0_i32_1 = arith.constant 0 : i32
    return %c0_i32, %c0_i32_0 : i32, i32
  }
  func.func @transform_6(%arg0: i32) -> (i32, i32) {
    %c0_i32 = arith.constant 0 : i32
    %c0_i32_0 = arith.constant 0 : i32
    %c0_i32_1 = arith.constant 0 : i32
    return %c0_i32, %c0_i32_0 : i32, i32
  }
  func.func @transform_7(%arg0: i32) -> (i32, i32) {
    %c0_i32 = arith.constant 0 : i32
    %c0_i32_0 = arith.constant 0 : i32
    return %arg0, %c0_i32 : i32, i32
  }
}

module attributes {stable_mosaic.version = 11 : i64} {
  func.func @_mm_bias_kernel(%arg0: i32, %arg1: i32, %arg2: i32, %arg3: memref<16x256xbf16, #tpu.memory_space<vmem>>, %arg4: memref<256x256xbf16, #tpu.memory_space<vmem>>, %arg5: memref<1x256xf32, #tpu.memory_space<vmem>>, %arg6: memref<16x256xbf16, #tpu.memory_space<vmem>>, %arg7: memref<16x256xf32, #tpu.memory_space<vmem>>) attributes {dimension_semantics = [#tpu.dimension_semantics<parallel>, #tpu.dimension_semantics<parallel>, #tpu.dimension_semantics<arbitrary>], iteration_bounds = array<i64: 1, 3, 1>, scalar_prefetch = 0 : i64, scratch_operands = 1 : i64, tpu.core_type = #tpu.core_type<tc>, window_params = [{transform_indices = @transform_0, window_bounds = array<i64: 16, 256>}, {transform_indices = @transform_1, window_bounds = array<i64: 256, 256>}, {transform_indices = @transform_2, window_bounds = array<i64: 1, 256>}, {transform_indices = @transform_3, window_bounds = array<i64: 16, 256>}]} {
    %c0_i32 = arith.constant 0 : i32
    %0 = arith.cmpi eq, %arg2, %c0_i32 : i32
    %1 = arith.extui %0 : i1 to i32
    %c0_i32_0 = arith.constant 0 : i32
    %2 = arith.cmpi ne, %1, %c0_i32_0 : i32
    scf.if %2 {
      %cst_10 = arith.constant 0.000000e+00 : f32
      %12 = vector.broadcast %cst_10 : f32 to vector<16x256xf32>
      %c0_11 = arith.constant 0 : index
      %c0_12 = arith.constant 0 : index
      %13 = vector.load %arg7[%c0_11, %c0_12] : memref<16x256xf32, #tpu.memory_space<vmem>>, vector<16x256xf32>
      tpu.vector_store %arg7[%c0_11, %c0_12], %12 {strides = array<i32>} : memref<16x256xf32, #tpu.memory_space<vmem>>, vector<16x256xf32>,
    } else {
    }
    %c0 = arith.constant 0 : index
    %c0_1 = arith.constant 0 : index
    %3 = vector.load %arg7[%c0, %c0_1] : memref<16x256xf32, #tpu.memory_space<vmem>>, vector<16x256xf32>
    %c0_2 = arith.constant 0 : index
    %c0_3 = arith.constant 0 : index
    %4 = vector.load %arg3[%c0_2, %c0_3] : memref<16x256xbf16, #tpu.memory_space<vmem>>, vector<16x256xbf16>
    %c0_4 = arith.constant 0 : index
    %c0_5 = arith.constant 0 : index
    %5 = vector.load %arg4[%c0_4, %c0_5] : memref<256x256xbf16, #tpu.memory_space<vmem>>, vector<256x256xbf16>
    %cst = arith.constant dense<0.000000e+00> : vector<16x256xf32>
    %6 = tpu.matmul %4, %5, %cst {dimension_numbers = #tpu.dot_dimension_numbers<[1], [0], [0], [1], [0, 0, 1, 1], [], []>} : vector<16x256xbf16>, vector<256x256xbf16>, vector<16x256xf32> -> vector<16x256xf32>
    %7 = arith.addf %3, %6 : vector<16x256xf32>
    %c0_6 = arith.constant 0 : index
    %c0_7 = arith.constant 0 : index
    %8 = vector.load %arg7[%c0_6, %c0_7] : memref<16x256xf32, #tpu.memory_space<vmem>>, vector<16x256xf32>
    tpu.vector_store %arg7[%c0_6, %c0_7], %7 {strides = array<i32>} : memref<16x256xf32, #tpu.memory_space<vmem>>, vector<16x256xf32>,
    %c0_i32_8 = arith.constant 0 : i32
    %9 = arith.cmpi eq, %arg2, %c0_i32_8 : i32
    %10 = arith.extui %9 : i1 to i32
    %c0_i32_9 = arith.constant 0 : i32
    %11 = arith.cmpi ne, %10, %c0_i32_9 : i32
    scf.if %11 {
      %c0_10 = arith.constant 0 : index
      %c0_11 = arith.constant 0 : index
      %12 = vector.load %arg7[%c0_10, %c0_11] : memref<16x256xf32, #tpu.memory_space<vmem>>, vector<16x256xf32>
      %c0_12 = arith.constant 0 : index
      %c0_13 = arith.constant 0 : index
      %13 = vector.load %arg5[%c0_12, %c0_13] : memref<1x256xf32, #tpu.memory_space<vmem>>, vector<1x256xf32>
      %14 = vector.broadcast %13 : vector<1x256xf32> to vector<16x256xf32>
      %15 = arith.addf %12, %14 : vector<16x256xf32>
      %16 = arith.truncf %15 : vector<16x256xf32> to vector<16x256xbf16>
      %c0_14 = arith.constant 0 : index
      %c0_15 = arith.constant 0 : index
      %17 = vector.load %arg6[%c0_14, %c0_15] : memref<16x256xbf16, #tpu.memory_space<vmem>>, vector<16x256xbf16>
      tpu.vector_store %arg6[%c0_14, %c0_15], %16 {strides = array<i32>} : memref<16x256xbf16, #tpu.memory_space<vmem>>, vector<16x256xbf16>,
    } else {
    }
    return
  }
  func.func @transform_0(%arg0: i32, %arg1: i32, %arg2: i32) -> (i32, i32) {
    %c0_i32 = arith.constant 0 : i32
    return %arg0, %arg2 : i32, i32
  }
  func.func @transform_1(%arg0: i32, %arg1: i32, %arg2: i32) -> (i32, i32) {
    %c0_i32 = arith.constant 0 : i32
    return %arg2, %arg1 : i32, i32
  }
  func.func @transform_2(%arg0: i32, %arg1: i32, %arg2: i32) -> (i32, i32) {
    %c0_i32 = arith.constant 0 : i32
    %c0_i32_0 = arith.constant 0 : i32
    return %c0_i32, %arg1 : i32, i32
  }
  func.func @transform_3(%arg0: i32, %arg1: i32, %arg2: i32) -> (i32, i32) {
    %c0_i32 = arith.constant 0 : i32
    return %arg0, %arg1 : i32, i32
  }
}

module attributes {stable_mosaic.version = 11 : i64} {
  func.func @_mlm_decoder_xent_kernel(%arg0: i32, %arg1: i32, %arg2: memref<16x256xbf16, #tpu.memory_space<vmem>>, %arg3: memref<256x256xbf16, #tpu.memory_space<vmem>>, %arg4: memref<1x256xf32, #tpu.memory_space<vmem>>, %arg5: memref<1x256xf32, #tpu.memory_space<vmem>>, %arg6: memref<1x256xf32, #tpu.memory_space<vmem>>, %arg7: memref<256x512xbf16, #tpu.memory_space<vmem>>, %arg8: memref<1x512xf32, #tpu.memory_space<vmem>>, %arg9: memref<16x1xi32, #tpu.memory_space<vmem>>, %arg10: memref<16x128xi32, #tpu.memory_space<vmem>>, %arg11: memref<16x128xf32, #tpu.memory_space<vmem>>, %arg12: memref<16x256xbf16, #tpu.memory_space<vmem>>, %arg13: memref<16x1xf32, #tpu.memory_space<vmem>>, %arg14: memref<16x1xf32, #tpu.memory_space<vmem>>, %arg15: memref<16x1xf32, #tpu.memory_space<vmem>>, %arg16: memref<16x1xi32, #tpu.memory_space<vmem>>, %arg17: memref<16x1xf32, #tpu.memory_space<vmem>>) attributes {dimension_semantics = [#tpu.dimension_semantics<parallel>, #tpu.dimension_semantics<arbitrary>], iteration_bounds = array<i64: 1, 1>, scalar_prefetch = 0 : i64, scratch_operands = 6 : i64, tpu.core_type = #tpu.core_type<tc>, window_params = [{transform_indices = @transform_0, window_bounds = array<i64: 16, 256>}, {pipeline_mode = #tpu.pipeline_mode<synchronous>, transform_indices = @transform_1, window_bounds = array<i64: 256, 256>}, {pipeline_mode = #tpu.pipeline_mode<synchronous>, transform_indices = @transform_2, window_bounds = array<i64: 1, 256>}, {pipeline_mode = #tpu.pipeline_mode<synchronous>, transform_indices = @transform_3, window_bounds = array<i64: 1, 256>}, {pipeline_mode = #tpu.pipeline_mode<synchronous>, transform_indices = @transform_4, window_bounds = array<i64: 1, 256>}, {transform_indices = @transform_5, window_bounds = array<i64: 256, 512>}, {transform_indices = @transform_6, window_bounds = array<i64: 1, 512>}, {transform_indices = @transform_7, window_bounds = array<i64: 16, 1>}, {transform_indices = @transform_8, window_bounds = array<i64: 16, 128>}, {transform_indices = @transform_9, window_bounds = array<i64: 16, 128>}]} {
    %c0_i32 = arith.constant 0 : i32
    %0 = arith.cmpi eq, %arg1, %c0_i32 : i32
    %1 = arith.extui %0 : i1 to i32
    %c0_i32_0 = arith.constant 0 : i32
    %2 = arith.cmpi ne, %1, %c0_i32_0 : i32
    scf.if %2 {
      %c0_39 = arith.constant 0 : index
      %c0_40 = arith.constant 0 : index
      %57 = vector.load %arg2[%c0_39, %c0_40] : memref<16x256xbf16, #tpu.memory_space<vmem>>, vector<16x256xbf16>
      %c0_41 = arith.constant 0 : index
      %c0_42 = arith.constant 0 : index
      %58 = vector.load %arg3[%c0_41, %c0_42] : memref<256x256xbf16, #tpu.memory_space<vmem>>, vector<256x256xbf16>
      %cst_43 = arith.constant dense<0.000000e+00> : vector<16x256xf32>
      %59 = tpu.matmul %57, %58, %cst_43 {dimension_numbers = #tpu.dot_dimension_numbers<[1], [0], [0], [1], [0, 0, 1, 1], [], []>} : vector<16x256xbf16>, vector<256x256xbf16>, vector<16x256xf32> -> vector<16x256xf32>
      %c0_44 = arith.constant 0 : index
      %c0_45 = arith.constant 0 : index
      %60 = vector.load %arg4[%c0_44, %c0_45] : memref<1x256xf32, #tpu.memory_space<vmem>>, vector<1x256xf32>
      %61 = vector.broadcast %60 : vector<1x256xf32> to vector<16x256xf32>
      %62 = arith.addf %59, %61 : vector<16x256xf32>
      %63 = arith.mulf %62, %62 : vector<16x256xf32>
      %64 = arith.mulf %62, %63 : vector<16x256xf32>
      %cst_46 = arith.constant 4.471500e-02 : f32
      %65 = vector.broadcast %cst_46 : f32 to vector<16x256xf32>
      %66 = arith.mulf %65, %64 : vector<16x256xf32>
      %67 = arith.addf %62, %66 : vector<16x256xf32>
      %cst_47 = arith.constant 0.797884583 : f32
      %68 = vector.broadcast %cst_47 : f32 to vector<16x256xf32>
      %69 = arith.mulf %68, %67 : vector<16x256xf32>
      %70 = math.tanh %69 : vector<16x256xf32>
      %cst_48 = arith.constant 1.000000e+00 : f32
      %71 = vector.broadcast %cst_48 : f32 to vector<16x256xf32>
      %72 = arith.addf %71, %70 : vector<16x256xf32>
      %cst_49 = arith.constant 5.000000e-01 : f32
      %73 = vector.broadcast %cst_49 : f32 to vector<16x256xf32>
      %74 = arith.mulf %73, %72 : vector<16x256xf32>
      %75 = arith.mulf %62, %74 : vector<16x256xf32>
      %cst_50 = arith.constant dense<0.000000e+00> : vector<16xf32>
      %76 = vector.multi_reduction <add>, %75, %cst_50 [1] : vector<16x256xf32> to vector<16xf32>
      %77 = vector.shape_cast %76 : vector<16xf32> to vector<16x1xf32>
      %cst_51 = arith.constant 2.560000e+02 : f32
      %78 = vector.broadcast %cst_51 : f32 to vector<16x1xf32>
      %79 = arith.divf %77, %78 : vector<16x1xf32>
      %80 = vector.broadcast %79 : vector<16x1xf32> to vector<16x256xf32>
      %81 = arith.subf %75, %80 : vector<16x256xf32>
      %82 = arith.mulf %81, %81 : vector<16x256xf32>
      %cst_52 = arith.constant dense<0.000000e+00> : vector<16xf32>
      %83 = vector.multi_reduction <add>, %82, %cst_52 [1] : vector<16x256xf32> to vector<16xf32>
      %84 = vector.shape_cast %83 : vector<16xf32> to vector<16x1xf32>
      %cst_53 = arith.constant 2.560000e+02 : f32
      %85 = vector.broadcast %cst_53 : f32 to vector<16x1xf32>
      %86 = arith.divf %84, %85 : vector<16x1xf32>
      %87 = vector.broadcast %79 : vector<16x1xf32> to vector<16x256xf32>
      %88 = arith.subf %75, %87 : vector<16x256xf32>
      %cst_54 = arith.constant 9.99999996E-13 : f32
      %89 = vector.broadcast %cst_54 : f32 to vector<16x1xf32>
      %90 = arith.addf %86, %89 : vector<16x1xf32>
      %91 = math.rsqrt %90 : vector<16x1xf32>
      %92 = vector.broadcast %91 : vector<16x1xf32> to vector<16x256xf32>
      %93 = arith.mulf %88, %92 : vector<16x256xf32>
      %c0_55 = arith.constant 0 : index
      %c0_56 = arith.constant 0 : index
      %94 = vector.load %arg5[%c0_55, %c0_56] : memref<1x256xf32, #tpu.memory_space<vmem>>, vector<1x256xf32>
      %95 = vector.broadcast %94 : vector<1x256xf32> to vector<16x256xf32>
      %96 = arith.mulf %93, %95 : vector<16x256xf32>
      %c0_57 = arith.constant 0 : index
      %c0_58 = arith.constant 0 : index
      %97 = vector.load %arg6[%c0_57, %c0_58] : memref<1x256xf32, #tpu.memory_space<vmem>>, vector<1x256xf32>
      %98 = vector.broadcast %97 : vector<1x256xf32> to vector<16x256xf32>
      %99 = arith.addf %96, %98 : vector<16x256xf32>
      %100 = arith.truncf %99 : vector<16x256xf32> to vector<16x256xbf16>
      %c0_59 = arith.constant 0 : index
      %c0_60 = arith.constant 0 : index
      %101 = vector.load %arg12[%c0_59, %c0_60] : memref<16x256xbf16, #tpu.memory_space<vmem>>, vector<16x256xbf16>
      tpu.vector_store %arg12[%c0_59, %c0_60], %100 {strides = array<i32>} : memref<16x256xbf16, #tpu.memory_space<vmem>>, vector<16x256xbf16>,
      %cst_61 = arith.constant 0xFF800000 : f32
      %102 = vector.broadcast %cst_61 : f32 to vector<16x1xf32>
      %c0_62 = arith.constant 0 : index
      %c0_63 = arith.constant 0 : index
      %103 = vector.load %arg13[%c0_62, %c0_63] : memref<16x1xf32, #tpu.memory_space<vmem>>, vector<16x1xf32>
      tpu.vector_store %arg13[%c0_62, %c0_63], %102 {strides = array<i32>} : memref<16x1xf32, #tpu.memory_space<vmem>>, vector<16x1xf32>,
      %cst_64 = arith.constant 0.000000e+00 : f32
      %104 = vector.broadcast %cst_64 : f32 to vector<16x1xf32>
      %c0_65 = arith.constant 0 : index
      %c0_66 = arith.constant 0 : index
      %105 = vector.load %arg14[%c0_65, %c0_66] : memref<16x1xf32, #tpu.memory_space<vmem>>, vector<16x1xf32>
      tpu.vector_store %arg14[%c0_65, %c0_66], %104 {strides = array<i32>} : memref<16x1xf32, #tpu.memory_space<vmem>>, vector<16x1xf32>,
      %cst_67 = arith.constant 0xFF800000 : f32
      %106 = vector.broadcast %cst_67 : f32 to vector<16x1xf32>
      %c0_68 = arith.constant 0 : index
      %c0_69 = arith.constant 0 : index
      %107 = vector.load %arg15[%c0_68, %c0_69] : memref<16x1xf32, #tpu.memory_space<vmem>>, vector<16x1xf32>
      tpu.vector_store %arg15[%c0_68, %c0_69], %106 {strides = array<i32>} : memref<16x1xf32, #tpu.memory_space<vmem>>, vector<16x1xf32>,
      %c0_i32_70 = arith.constant 0 : i32
      %108 = vector.broadcast %c0_i32_70 : i32 to vector<16x1xi32>
      %c0_71 = arith.constant 0 : index
      %c0_72 = arith.constant 0 : index
      %109 = vector.load %arg16[%c0_71, %c0_72] : memref<16x1xi32, #tpu.memory_space<vmem>>, vector<16x1xi32>
      tpu.vector_store %arg16[%c0_71, %c0_72], %108 {strides = array<i32>} : memref<16x1xi32, #tpu.memory_space<vmem>>, vector<16x1xi32>,
      %cst_73 = arith.constant 0.000000e+00 : f32
      %110 = vector.broadcast %cst_73 : f32 to vector<16x1xf32>
      %c0_74 = arith.constant 0 : index
      %c0_75 = arith.constant 0 : index
      %111 = vector.load %arg17[%c0_74, %c0_75] : memref<16x1xf32, #tpu.memory_space<vmem>>, vector<16x1xf32>
      tpu.vector_store %arg17[%c0_74, %c0_75], %110 {strides = array<i32>} : memref<16x1xf32, #tpu.memory_space<vmem>>, vector<16x1xf32>,
    } else {
    }
    %c0 = arith.constant 0 : index
    %c0_1 = arith.constant 0 : index
    %3 = vector.load %arg12[%c0, %c0_1] : memref<16x256xbf16, #tpu.memory_space<vmem>>, vector<16x256xbf16>
    %c0_2 = arith.constant 0 : index
    %c0_3 = arith.constant 0 : index
    %4 = vector.load %arg7[%c0_2, %c0_3] : memref<256x512xbf16, #tpu.memory_space<vmem>>, vector<256x512xbf16>
    %cst = arith.constant dense<0.000000e+00> : vector<16x512xf32>
    %5 = tpu.matmul %3, %4, %cst {dimension_numbers = #tpu.dot_dimension_numbers<[1], [0], [0], [1], [0, 0, 1, 1], [], []>} : vector<16x256xbf16>, vector<256x512xbf16>, vector<16x512xf32> -> vector<16x512xf32>
    %c0_4 = arith.constant 0 : index
    %c0_5 = arith.constant 0 : index
    %6 = vector.load %arg8[%c0_4, %c0_5] : memref<1x512xf32, #tpu.memory_space<vmem>>, vector<1x512xf32>
    %7 = vector.broadcast %6 : vector<1x512xf32> to vector<16x512xf32>
    %8 = arith.addf %5, %7 : vector<16x512xf32>
    %9 = tpu.iota {dimensions = array<i32: 1>} : vector<16x512xi32>
    %c512_i32 = arith.constant 512 : i32
    %10 = arith.muli %arg1, %c512_i32 : i32
    %11 = vector.broadcast %10 : i32 to vector<16x512xi32>
    %12 = arith.addi %9, %11 : vector<16x512xi32>
    %cst_6 = arith.constant dense<0xFF800000> : vector<16xf32>
    %13 = vector.multi_reduction <maximumf>, %8, %cst_6 [1] : vector<16x512xf32> to vector<16xf32>
    %14 = vector.shape_cast %13 : vector<16xf32> to vector<16x1xf32>
    %c0_7 = arith.constant 0 : index
    %c0_8 = arith.constant 0 : index
    %15 = vector.load %arg13[%c0_7, %c0_8] : memref<16x1xf32, #tpu.memory_space<vmem>>, vector<16x1xf32>
    %16 = arith.maximumf %15, %14 : vector<16x1xf32>
    %c0_9 = arith.constant 0 : index
    %c0_10 = arith.constant 0 : index
    %17 = vector.load %arg14[%c0_9, %c0_10] : memref<16x1xf32, #tpu.memory_space<vmem>>, vector<16x1xf32>
    %c0_11 = arith.constant 0 : index
    %c0_12 = arith.constant 0 : index
    %18 = vector.load %arg13[%c0_11, %c0_12] : memref<16x1xf32, #tpu.memory_space<vmem>>, vector<16x1xf32>
    %19 = arith.subf %18, %16 : vector<16x1xf32>
    %20 = math.exp %19 : vector<16x1xf32>
    %21 = arith.mulf %17, %20 : vector<16x1xf32>
    %22 = vector.broadcast %16 : vector<16x1xf32> to vector<16x512xf32>
    %23 = arith.subf %8, %22 : vector<16x512xf32>
    %24 = math.exp %23 : vector<16x512xf32>
    %cst_13 = arith.constant dense<0.000000e+00> : vector<16xf32>
    %25 = vector.multi_reduction <add>, %24, %cst_13 [1] : vector<16x512xf32> to vector<16xf32>
    %26 = vector.shape_cast %25 : vector<16xf32> to vector<16x1xf32>
    %27 = arith.addf %21, %26 : vector<16x1xf32>
    %c0_14 = arith.constant 0 : index
    %c0_15 = arith.constant 0 : index
    %28 = vector.load %arg14[%c0_14, %c0_15] : memref<16x1xf32, #tpu.memory_space<vmem>>, vector<16x1xf32>
    tpu.vector_store %arg14[%c0_14, %c0_15], %27 {strides = array<i32>} : memref<16x1xf32, #tpu.memory_space<vmem>>, vector<16x1xf32>,
    %c0_16 = arith.constant 0 : index
    %c0_17 = arith.constant 0 : index
    %29 = vector.load %arg13[%c0_16, %c0_17] : memref<16x1xf32, #tpu.memory_space<vmem>>, vector<16x1xf32>
    tpu.vector_store %arg13[%c0_16, %c0_17], %16 {strides = array<i32>} : memref<16x1xf32, #tpu.memory_space<vmem>>, vector<16x1xf32>,
    %30 = vector.broadcast %14 : vector<16x1xf32> to vector<16x512xf32>
    %31 = arith.cmpf oeq, %8, %30 : vector<16x512xf32>
    %c2147483647_i32 = arith.constant 2147483647 : i32
    %32 = vector.broadcast %c2147483647_i32 : i32 to vector<16x512xi32>
    %33 = arith.select %31, %12, %32 : vector<16x512xi1>, vector<16x512xi32>
    %cst_18 = arith.constant dense<2147483647> : vector<16xi32>
    %34 = vector.multi_reduction <minsi>, %33, %cst_18 [1] : vector<16x512xi32> to vector<16xi32>
    %35 = vector.shape_cast %34 : vector<16xi32> to vector<16x1xi32>
    %c0_19 = arith.constant 0 : index
    %c0_20 = arith.constant 0 : index
    %36 = vector.load %arg15[%c0_19, %c0_20] : memref<16x1xf32, #tpu.memory_space<vmem>>, vector<16x1xf32>
    %37 = arith.cmpf ogt, %14, %36 : vector<16x1xf32>
    %c0_21 = arith.constant 0 : index
    %c0_22 = arith.constant 0 : index
    %38 = vector.load %arg16[%c0_21, %c0_22] : memref<16x1xi32, #tpu.memory_space<vmem>>, vector<16x1xi32>
    %39 = arith.select %37, %35, %38 : vector<16x1xi1>, vector<16x1xi32>
    %c0_23 = arith.constant 0 : index
    %c0_24 = arith.constant 0 : index
    %40 = vector.load %arg16[%c0_23, %c0_24] : memref<16x1xi32, #tpu.memory_space<vmem>>, vector<16x1xi32>
    tpu.vector_store %arg16[%c0_23, %c0_24], %39 {strides = array<i32>} : memref<16x1xi32, #tpu.memory_space<vmem>>, vector<16x1xi32>,
    %c0_25 = arith.constant 0 : index
    %c0_26 = arith.constant 0 : index
    %41 = vector.load %arg15[%c0_25, %c0_26] : memref<16x1xf32, #tpu.memory_space<vmem>>, vector<16x1xf32>
    %42 = arith.select %37, %14, %41 : vector<16x1xi1>, vector<16x1xf32>
    %c0_27 = arith.constant 0 : index
    %c0_28 = arith.constant 0 : index
    %43 = vector.load %arg15[%c0_27, %c0_28] : memref<16x1xf32, #tpu.memory_space<vmem>>, vector<16x1xf32>
    tpu.vector_store %arg15[%c0_27, %c0_28], %42 {strides = array<i32>} : memref<16x1xf32, #tpu.memory_space<vmem>>, vector<16x1xf32>,
    %c0_29 = arith.constant 0 : index
    %c0_30 = arith.constant 0 : index
    %44 = vector.load %arg9[%c0_29, %c0_30] : memref<16x1xi32, #tpu.memory_space<vmem>>, vector<16x1xi32>
    %45 = vector.broadcast %44 : vector<16x1xi32> to vector<16x512xi32>
    %46 = arith.cmpi eq, %12, %45 : vector<16x512xi32>
    %c0_31 = arith.constant 0 : index
    %c0_32 = arith.constant 0 : index
    %47 = vector.load %arg17[%c0_31, %c0_32] : memref<16x1xf32, #tpu.memory_space<vmem>>, vector<16x1xf32>
    %cst_33 = arith.constant 0.000000e+00 : f32
    %48 = vector.broadcast %cst_33 : f32 to vector<16x512xf32>
    %49 = arith.select %46, %8, %48 : vector<16x512xi1>, vector<16x512xf32>
    %cst_34 = arith.constant dense<0.000000e+00> : vector<16xf32>
    %50 = vector.multi_reduction <add>, %49, %cst_34 [1] : vector<16x512xf32> to vector<16xf32>
    %51 = vector.shape_cast %50 : vector<16xf32> to vector<16x1xf32>
    %52 = arith.addf %47, %51 : vector<16x1xf32>
    %c0_35 = arith.constant 0 : index
    %c0_36 = arith.constant 0 : index
    %53 = vector.load %arg17[%c0_35, %c0_36] : memref<16x1xf32, #tpu.memory_space<vmem>>, vector<16x1xf32>
    tpu.vector_store %arg17[%c0_35, %c0_36], %52 {strides = array<i32>} : memref<16x1xf32, #tpu.memory_space<vmem>>, vector<16x1xf32>,
    %c0_i32_37 = arith.constant 0 : i32
    %54 = arith.cmpi eq, %arg1, %c0_i32_37 : i32
    %55 = arith.extui %54 : i1 to i32
    %c0_i32_38 = arith.constant 0 : i32
    %56 = arith.cmpi ne, %55, %c0_i32_38 : i32
    scf.if %56 {
      %c0_39 = arith.constant 0 : index
      %c0_40 = arith.constant 0 : index
      %57 = vector.load %arg13[%c0_39, %c0_40] : memref<16x1xf32, #tpu.memory_space<vmem>>, vector<16x1xf32>
      %c0_41 = arith.constant 0 : index
      %c0_42 = arith.constant 0 : index
      %58 = vector.load %arg14[%c0_41, %c0_42] : memref<16x1xf32, #tpu.memory_space<vmem>>, vector<16x1xf32>
      %59 = math.log %58 : vector<16x1xf32>
      %60 = arith.addf %57, %59 : vector<16x1xf32>
      %c0_43 = arith.constant 0 : index
      %c0_44 = arith.constant 0 : index
      %61 = vector.load %arg17[%c0_43, %c0_44] : memref<16x1xf32, #tpu.memory_space<vmem>>, vector<16x1xf32>
      %62 = arith.subf %60, %61 : vector<16x1xf32>
      %63 = vector.shape_cast %62 : vector<16x1xf32> to vector<16x1xf32>
      %64 = vector.broadcast %63 : vector<16x1xf32> to vector<16x128xf32>
      %c0_45 = arith.constant 0 : index
      %c0_46 = arith.constant 0 : index
      %65 = vector.load %arg11[%c0_45, %c0_46] : memref<16x128xf32, #tpu.memory_space<vmem>>, vector<16x128xf32>
      tpu.vector_store %arg11[%c0_45, %c0_46], %64 {strides = array<i32>} : memref<16x128xf32, #tpu.memory_space<vmem>>, vector<16x128xf32>,
      %c0_47 = arith.constant 0 : index
      %c0_48 = arith.constant 0 : index
      %66 = vector.load %arg16[%c0_47, %c0_48] : memref<16x1xi32, #tpu.memory_space<vmem>>, vector<16x1xi32>
      %67 = vector.shape_cast %66 : vector<16x1xi32> to vector<16x1xi32>
      %68 = vector.broadcast %67 : vector<16x1xi32> to vector<16x128xi32>
      %c0_49 = arith.constant 0 : index
      %c0_50 = arith.constant 0 : index
      %69 = vector.load %arg10[%c0_49, %c0_50] : memref<16x128xi32, #tpu.memory_space<vmem>>, vector<16x128xi32>
      tpu.vector_store %arg10[%c0_49, %c0_50], %68 {strides = array<i32>} : memref<16x128xi32, #tpu.memory_space<vmem>>, vector<16x128xi32>,
    } else {
    }
    return
  }
  func.func @transform_0(%arg0: i32, %arg1: i32) -> (i32, i32) {
    %c0_i32 = arith.constant 0 : i32
    %c0_i32_0 = arith.constant 0 : i32
    return %arg0, %c0_i32 : i32, i32
  }
  func.func @transform_1(%arg0: i32, %arg1: i32) -> (i32, i32) {
    %c0_i32 = arith.constant 0 : i32
    %c0_i32_0 = arith.constant 0 : i32
    %c0_i32_1 = arith.constant 0 : i32
    return %c0_i32, %c0_i32_0 : i32, i32
  }
  func.func @transform_2(%arg0: i32, %arg1: i32) -> (i32, i32) {
    %c0_i32 = arith.constant 0 : i32
    %c0_i32_0 = arith.constant 0 : i32
    %c0_i32_1 = arith.constant 0 : i32
    return %c0_i32, %c0_i32_0 : i32, i32
  }
  func.func @transform_3(%arg0: i32, %arg1: i32) -> (i32, i32) {
    %c0_i32 = arith.constant 0 : i32
    %c0_i32_0 = arith.constant 0 : i32
    %c0_i32_1 = arith.constant 0 : i32
    return %c0_i32, %c0_i32_0 : i32, i32
  }
  func.func @transform_4(%arg0: i32, %arg1: i32) -> (i32, i32) {
    %c0_i32 = arith.constant 0 : i32
    %c0_i32_0 = arith.constant 0 : i32
    %c0_i32_1 = arith.constant 0 : i32
    return %c0_i32, %c0_i32_0 : i32, i32
  }
  func.func @transform_5(%arg0: i32, %arg1: i32) -> (i32, i32) {
    %c0_i32 = arith.constant 0 : i32
    %c0_i32_0 = arith.constant 0 : i32
    return %c0_i32, %arg1 : i32, i32
  }
  func.func @transform_6(%arg0: i32, %arg1: i32) -> (i32, i32) {
    %c0_i32 = arith.constant 0 : i32
    %c0_i32_0 = arith.constant 0 : i32
    return %c0_i32, %arg1 : i32, i32
  }
  func.func @transform_7(%arg0: i32, %arg1: i32) -> (i32, i32) {
    %c0_i32 = arith.constant 0 : i32
    %c0_i32_0 = arith.constant 0 : i32
    return %arg0, %c0_i32 : i32, i32
  }
  func.func @transform_8(%arg0: i32, %arg1: i32) -> (i32, i32) {
    %c0_i32 = arith.constant 0 : i32
    %c0_i32_0 = arith.constant 0 : i32
    return %arg0, %c0_i32 : i32, i32
  }
  func.func @transform_9(%arg0: i32, %arg1: i32) -> (i32, i32) {
    %c0_i32 = arith.constant 0 : i32
    %c0_i32_0 = arith.constant 0 : i32
    return %arg0, %c0_i32 : i32, i32
  }
}

</mosaic_0001>

<llo_original>
// kernel: macbert_forward.12
$region0: #{macbert_forward.12}
  #allocation0 [shape = 'u32[]', space=smem, size = 0x4, offset = 0x4, fixed_abs, tag = 'smem constant byte address 0x4 - core index']
  #allocation1 [shape = 'u32[144,128]{1,0:T(1,128)}', space=vmem, size = 0x12000, scoped, tag = 'internal scratch']
  %s0 = inlined_call_operand.vmem [shape: bf16[16,768], index: 0, kind: input, shape index: {}, may-alias: {0,1,2}]
  %s1 = inlined_call_operand.vmem [shape: bf16[16,768], index: 1, kind: input, shape index: {}, may-alias: {0,1,2}]
  %s2 = inlined_call_operand.vmem [shape: bf16[16,768], index: 2, kind: input, shape index: {}, may-alias: {0,1,2}]
  %s3 = inlined_call_operand.vmem [shape: bf16[16,256], index: 3, kind: output, shape index: {}]
  %s4 = sld [smem:[#allocation0]]
  $region45: #{macbert_forward.12} parent=0
    _
  %s6 = ssub.s32 1, %s4
  %s7 = scalar_select 0, %s6, %s4
  loop: start=0, step=1, limit=6
  $region2: #{macbert_forward.12} parent=0 // loop_pre_header
    _
  $region3: #{macbert_forward.12} parent=0 // loop_header
    %s9 = sphi 0, %s13
    %p10 = scmp.ge.s32.totalorder %s9, 6
    %s16 = sphi 0, %s28
    %s17 = sphi 0, %s24
    %s18 = sphi 0, %s16
    %s19 = sphi 0, %s17
    %s20 = sphi 0, %s18
    %s21 = sphi 0, %s19
    %s33 = sphi 0, %s35
    %s36 = sphi 0, %s33
    %s37 = sphi 0, %s36
    %s53 = sphi 0, %s37
    %s63 = sphi 0, %s65
    %s66 = sphi 0, %s63
    %s67 = sphi 0, %s66
    %s83 = sphi 0, %s67
    %s93 = sphi 0, %s95
    %s96 = sphi 0, %s93
    %s97 = sphi 0, %s96
    %s113 = sphi 0, %s97
    %s121 = sphi 0, %s123
    %s124 = sphi 0, %s121
    %s125 = sphi 0, %s124
    %s141 = sphi 0, %s125
  $region4: #{macbert_forward.12} parent=0 // loop_header_branch
    %12 = sbr.rel (%p10) target = $region8
  $region5: #{macbert_forward.12} parent=0 // loop_body
    %s14 = ssub.s32 %s9, 1
    %s15 = ssub.s32 %s9, 2
    %s22 = sadd.s32 1, %s17
    %p23 = scmp.ge.s32.totalorder %s22, 2
    %s24 = scalar_select %p23, 0, %s22
    %s25 = sadd.s32 1, %s16
    %s26 = scalar_select %p23, %s25, %s16
    %p27 = scmp.ge.s32.totalorder %s26, 2
    %s28 = scalar_select %p27, 0, %s26
    %s29 = ssub.s32 %s16, %s28
    %s30 = ssub.s32 %s17, %s24
    %s31 = sor.u32 %s29, %s30
    %p32 = scmp.eq.s32.totalorder %s31, 0
    %s34 = sadd.s32 %s33, 1
    %s35 = scalar_select %p32, %s33, %s34
    %p38 = pneg %p32
    %p39 = scmp.eq.s32.totalorder %s9, 3
    %p40 = por %p38, %p39
    %p41 = scmp.ne.s32.totalorder %s33, %s36
    %p42 = scmp.eq.s32.totalorder %s9, 0
    %p43 = por %p41, %p42
    %p44 = scmp.ne.s32.totalorder %s33, %s36
    %p45 = scmp.eq.s32.totalorder %s14, 3
    %p46 = por %p44, %p45
    %p47 = scmp.ne.s32.totalorder %s36, %s37
    %p48 = scmp.eq.s32.totalorder %s14, 0
    %p49 = por %p47, %p48
    %p50 = scmp.ne.s32.totalorder %s36, %s37
    %p51 = scmp.eq.s32.totalorder %s15, 3
    %p52 = por %p50, %p51
    %p54 = scmp.ne.s32.totalorder %s37, %s53
    %p55 = scmp.eq.s32.totalorder %s15, 0
    %p56 = por %p54, %p55
    %s57 = sadd.s32 %s17, 2
    %s58 = sadd.s32 %s24, 2
    %s59 = ssub.s32 %s16, %s28
    %s60 = ssub.s32 %s57, %s58
    %s61 = sor.u32 %s59, %s60
    %p62 = scmp.eq.s32.totalorder %s61, 0
    %s64 = sadd.s32 %s63, 1
    %s65 = scalar_select %p62, %s63, %s64
    %p68 = pneg %p62
    %p69 = scmp.eq.s32.totalorder %s9, 3
    %p70 = por %p68, %p69
    %p71 = scmp.ne.s32.totalorder %s63, %s66
    %p72 = scmp.eq.s32.totalorder %s9, 0
    %p73 = por %p71, %p72
    %p74 = scmp.ne.s32.totalorder %s63, %s66
    %p75 = scmp.eq.s32.totalorder %s14, 3
    %p76 = por %p74, %p75
    %p77 = scmp.ne.s32.totalorder %s66, %s67
    %p78 = scmp.eq.s32.totalorder %s14, 0
    %p79 = por %p77, %p78
    %p80 = scmp.ne.s32.totalorder %s66, %s67
    %p81 = scmp.eq.s32.totalorder %s15, 3
    %p82 = por %p80, %p81
    %p84 = scmp.ne.s32.totalorder %s67, %s83
    %p85 = scmp.eq.s32.totalorder %s15, 0
    %p86 = por %p84, %p85
    %s87 = sadd.s32 %s17, 4
    %s88 = sadd.s32 %s24, 4
    %s89 = ssub.s32 %s16, %s28
    %s90 = ssub.s32 %s87, %s88
    %s91 = sor.u32 %s89, %s90
    %p92 = scmp.eq.s32.totalorder %s91, 0
    %s94 = sadd.s32 %s93, 1
    %s95 = scalar_select %p92, %s93, %s94
    %p98 = pneg %p92
    %p99 = scmp.eq.s32.totalorder %s9, 3
    %p100 = por %p98, %p99
    %p101 = scmp.ne.s32.totalorder %s93, %s96
    %p102 = scmp.eq.s32.totalorder %s9, 0
    %p103 = por %p101, %p102
    %p104 = scmp.ne.s32.totalorder %s93, %s96
    %p105 = scmp.eq.s32.totalorder %s14, 3
    %p106 = por %p104, %p105
    %p107 = scmp.ne.s32.totalorder %s96, %s97
    %p108 = scmp.eq.s32.totalorder %s14, 0
    %p109 = por %p107, %p108
    %p110 = scmp.ne.s32.totalorder %s96, %s97
    %p111 = scmp.eq.s32.totalorder %s15, 3
    %p112 = por %p110, %p111
    %p114 = scmp.ne.s32.totalorder %s97, %s113
    %p115 = scmp.eq.s32.totalorder %s15, 0
    %p116 = por %p114, %p115
    %s117 = ssub.s32 %s16, %s28
    %s118 = ssub.s32 %s17, %s24
    %s119 = sor.u32 %s117, %s118
    %p120 = scmp.eq.s32.totalorder %s119, 0
    %s122 = sadd.s32 %s121, 1
    %s123 = scalar_select %p120, %s121, %s122
    %p126 = pneg %p120
    %p127 = scmp.eq.s32.totalorder %s9, 3
    %p128 = por %p126, %p127
    %p129 = scmp.ne.s32.totalorder %s121, %s124
    %p130 = scmp.eq.s32.totalorder %s9, 0
    %p131 = por %p129, %p130
    %p132 = scmp.ne.s32.totalorder %s121, %s124
    %p133 = scmp.eq.s32.totalorder %s14, 3
    %p134 = por %p132, %p133
    %p135 = scmp.ne.s32.totalorder %s124, %s125
    %p136 = scmp.eq.s32.totalorder %s14, 0
    %p137 = por %p135, %p136
    %p138 = scmp.ne.s32.totalorder %s124, %s125
    %p139 = scmp.eq.s32.totalorder %s15, 3
    %p140 = por %p138, %p139
    %p142 = scmp.ne.s32.totalorder %s125, %s141
    %p143 = scmp.eq.s32.totalorder %s15, 0
    %p144 = por %p142, %p143
    %p145 = scmp.le.s32.totalorder 1, %s9
    %p146 = scmp.lt.s32.totalorder %s9, 5
    %p147 = pnand %p145, %p146
    %p148 = pneg %p147
    // Predicated region
    $region9: #{macbert_forward.12} parent=5 // pred_check
      _
    $region10: #{macbert_forward.12} parent=5 // pred_check_branch
      %150 = sbr.rel (%p147) target = $region12
    $region11: #{macbert_forward.12} parent=5 // pred_region
      %s151 = ssub.s32 %s9, 1
    $region12: #{macbert_forward.12} parent=5 // pred_fallthru
      _
    %p152 = scmp.lt.s32.totalorder %s9, 4
    // Predicated region
    $region13: #{macbert_forward.12} parent=5 // pred_check
      %p153 = pneg %p152
    $region14: #{macbert_forward.12} parent=5 // pred_check_branch
      %155 = sbr.rel (%p153) target = $region16
    $region15: #{macbert_forward.12} parent=5 // pred_region
      // Predicated region
      $region17: #{macbert_forward.12} parent=15 // pred_check
        %p156 = pneg %p43
      $region18: #{macbert_forward.12} parent=15 // pred_check_branch
        %158 = sbr.rel (%p156) target = $region20
      $region19: #{macbert_forward.12} parent=15 // pred_region
        %p159 = scmp.lt.s32.totalorder %s16, 1
        %s160 = scalar_select %p159, %s16, 1
        %p161 = scmp.lt.s32.totalorder %s17, 5
        %s162 = scalar_select %p161, %s17, 5
        %s163 = smul.addr %s160, 6
        %s164 = sadd.s32 %s162, %s163
        %s165 = smul.addr %s164, 4
        %s166 = scalar_lea.vmem %s0, %s165
      $region20: #{macbert_forward.12} parent=15 // pred_fallthru
        _
      // Predicated region
      $region21: #{macbert_forward.12} parent=15 // pred_check
        %p167 = pneg %p73
      $region22: #{macbert_forward.12} parent=15 // pred_check_branch
        %169 = sbr.rel (%p167) target = $region24
      $region23: #{macbert_forward.12} parent=15 // pred_region
        %s170 = sadd.s32 %s17, 2
        %p171 = scmp.lt.s32.totalorder %s16, 1
        %s172 = scalar_select %p171, %s16, 1
        %p173 = scmp.lt.s32.totalorder %s170, 5
        %s174 = scalar_select %p173, %s170, 5
        %s175 = smul.addr %s172, 6
        %s176 = sadd.s32 %s174, %s175
        %s177 = smul.addr %s176, 4
        %s178 = scalar_lea.vmem %s1, %s177
        %s179 = sadd.s32 %s17, 2
      $region24: #{macbert_forward.12} parent=15 // pred_fallthru
        _
      // Predicated region
      $region25: #{macbert_forward.12} parent=15 // pred_check
        %p180 = pneg %p103
      $region26: #{macbert_forward.12} parent=15 // pred_check_branch
        %182 = sbr.rel (%p180) target = $region28
      $region27: #{macbert_forward.12} parent=15 // pred_region
        %s183 = sadd.s32 %s17, 4
        %p184 = scmp.lt.s32.totalorder %s16, 1
        %s185 = scalar_select %p184, %s16, 1
        %p186 = scmp.lt.s32.totalorder %s183, 5
        %s187 = scalar_select %p186, %s183, 5
        %s188 = smul.addr %s185, 6
        %s189 = sadd.s32 %s187, %s188
        %s190 = smul.addr %s189, 4
        %s191 = scalar_lea.vmem %s2, %s190
        %s192 = sadd.s32 %s17, 4
      $region28: #{macbert_forward.12} parent=15 // pred_fallthru
        _
    $region16: #{macbert_forward.12} parent=5 // pred_fallthru
      _
    %p193 = scmp.le.s32.totalorder 1, %s9
    %p194 = scmp.lt.s32.totalorder %s9, 5
    %p195 = pnand %p193, %p194
    %p196 = pneg %p195
    // Predicated region
    $region29: #{macbert_forward.12} parent=5 // pred_check
      _
    $region30: #{macbert_forward.12} parent=5 // pred_check_branch
      %198 = sbr.rel (%p195) target = $region32
    $region31: #{macbert_forward.12} parent=5 // pred_region
      %s199 = ssub.s32 %s9, 1
      %p200 = scmp.lt.s32.totalorder %s18, 1
      %s201 = scalar_select %p200, %s18, 1
      %p202 = scmp.lt.s32.totalorder %s19, 5
      %s203 = scalar_select %p202, %s19, 5
      %s204 = smul.addr %s201, 6
      %s205 = sadd.s32 %s203, %s204
      %s206 = smul.addr %s205, 4
      %s207 = scalar_lea.vmem %s0, %s206
      %p208 = pneg %p49
      %p209 = pneg %p46
      %s210 = sadd.s32 %s19, 2
      %p211 = scmp.lt.s32.totalorder %s18, 1
      %s212 = scalar_select %p211, %s18, 1
      %p213 = scmp.lt.s32.totalorder %s210, 5
      %s214 = scalar_select %p213, %s210, 5
      %s215 = smul.addr %s212, 6
      %s216 = sadd.s32 %s214, %s215
      %s217 = smul.addr %s216, 4
      %s218 = scalar_lea.vmem %s1, %s217
      %p219 = pneg %p79
      %p220 = pneg %p76
      %s221 = sadd.s32 %s19, 4
      %p222 = scmp.lt.s32.totalorder %s18, 1
      %s223 = scalar_select %p222, %s18, 1
      %p224 = scmp.lt.s32.totalorder %s221, 5
      %s225 = scalar_select %p224, %s221, 5
      %s226 = smul.addr %s223, 6
      %s227 = sadd.s32 %s225, %s226
      %s228 = smul.addr %s227, 4
      %s229 = scalar_lea.vmem %s2, %s228
      %p230 = pneg %p109
      %p231 = pneg %p106
      %p232 = pneg %p137
      %p233 = pneg %p134
      %p234 = scmp.lt.s32.totalorder %s18, 1
      %s235 = scalar_select %p234, %s18, 1
      %p236 = scmp.lt.s32.totalorder %s19, 1
      %s237 = scalar_select %p236, %s19, 1
      %s238 = smul.addr %s235, 2
      %s239 = sadd.s32 %s237, %s238
      %s240 = smul.addr %s239, 4
      %s241 = scalar_lea.vmem %s3, %s240
      %p242 = scmp.lt.s32.totalorder %s18, 1
      %s243 = scalar_select %p242, %s18, 1
      %p244 = scmp.lt.s32.totalorder %s19, 5
      %s245 = scalar_select %p244, %s19, 5
      %s246 = smul.addr %s243, 6
      %s247 = sadd.s32 %s245, %s246
      %s248 = smul.addr %s247, 4
      %s249 = scalar_lea.vmem %s0, %s248
      %s250 = sadd.s32 %s19, 2
      %p251 = scmp.lt.s32.totalorder %s18, 1
      %s252 = scalar_select %p251, %s18, 1
      %p253 = scmp.lt.s32.totalorder %s250, 5
      %s254 = scalar_select %p253, %s250, 5
      %s255 = smul.addr %s252, 6
      %s256 = sadd.s32 %s254, %s255
      %s257 = smul.addr %s256, 4
      %s258 = scalar_lea.vmem %s1, %s257
      %s259 = sadd.s32 %s19, 2
      %s260 = sadd.s32 %s19, 4
      %p261 = scmp.lt.s32.totalorder %s18, 1
      %s262 = scalar_select %p261, %s18, 1
      %p263 = scmp.lt.s32.totalorder %s260, 5
      %s264 = scalar_select %p263, %s260, 5
      %s265 = smul.addr %s262, 6
      %s266 = sadd.s32 %s264, %s265
      %s267 = smul.addr %s266, 4
      %s268 = scalar_lea.vmem %s2, %s267
      %s269 = sadd.s32 %s19, 4
      %p270 = scmp.lt.s32.totalorder %s18, 1
      %s271 = scalar_select %p270, %s18, 1
      %p272 = scmp.lt.s32.totalorder %s19, 1
      %s273 = scalar_select %p272, %s19, 1
      %s274 = smul.addr %s271, 2
      %s275 = sadd.s32 %s273, %s274
      %s276 = smul.addr %s275, 4
      %s277 = scalar_lea.vmem %s3, %s276
      %v279 = vld [vmem:[%s249] sm:$0xf]
      %v280 = vld [vmem:[%s258] sm:$0xf]
      %v281 = vld [vmem:[%s268] sm:$0xf]
      %282 = vmatprep.subr.bf16.mxu0 0
      %283 = vmatpush1.bf16.xpose.msra.mxu0 %v280
      %284 = vmatprep.subr.bf16.mxu0 0
      %285 = vmatpush1.bf16.xpose.msra.mxu0 0
      %286 = vmatprep.subr.bf16.mxu0 0
      %287 = vmatpush1.bf16.xpose.msra.mxu0 0
      %288 = vmatprep.subr.bf16.mxu0 0
      %289 = vmatpush1.bf16.xpose.msra.mxu0 0
      %290 = vmatprep.subr.bf16.mxu0 0
      %291 = vmatpush1.bf16.xpose.msra.mxu0 0
      %292 = vmatprep.subr.bf16.mxu0 0
      %293 = vmatpush1.bf16.xpose.msra.mxu0 0
      %294 = vmatprep.subr.bf16.mxu0 0
      %295 = vmatpush1.bf16.xpose.msra.mxu0 0
      %296 = vmatprep.subr.bf16.mxu0 0
      %297 = vmatpush1.bf16.xpose.msra.mxu0 0
      %298 = vmatprep.subr.bf16.mxu0 0
      %299 = vmatpush1.bf16.xpose.msra.mxu0 0
      %300 = vmatprep.subr.bf16.mxu0 0
      %301 = vmatpush1.bf16.xpose.msra.mxu0 0
      %302 = vmatprep.subr.bf16.mxu0 0
      %303 = vmatpush1.bf16.xpose.msra.mxu0 0
      %304 = vmatprep.subr.bf16.mxu0 0
      %305 = vmatpush1.bf16.xpose.msra.mxu0 0
      %306 = vmatprep.subr.bf16.mxu0 0
      %307 = vmatpush1.bf16.xpose.msra.mxu0 0
      %308 = vmatprep.subr.bf16.mxu0 0
      %309 = vmatpush1.bf16.xpose.msra.mxu0 0
      %310 = vmatprep.subr.bf16.mxu0 0
      %311 = vmatpush1.bf16.xpose.msra.mxu0 0
      %312 = vmatprep.subr.bf16.mxu0 0
      %313 = vmatpush1.bf16.xpose.msra.mxu0 0
      %314 = vmatprep.mubr.bf16.mxu0 0
      %315 = vmatmul.mubr.bf16.gmra.mrb[0].mxu0 %v279
      %v316 = vpop.f32.mrb[0].mxu0
      %v317 = vadd.f32 0.0, %v316
      %v318 = vpop.f32.mrb[0].mxu0
      %v319 = vpop.f32.mrb[0].mxu0
      %v320 = vpop.f32.mrb[0].mxu0
      %321 = vdwg.mxu0
      %v322 = vmul.f32 %v317, 0.088388346
      %vm323 = vcmask 64512
      %v324 = vsel %vm323, %v322, -inf
      %325 = vmax.xlane.f32.xlu0 %v324
      %v326 = vpop.xlane.xlu0 %325
      %v327 = vsub.f32 %v322, %v326
      %v328 = vmul.f32 %v327, 1.442695
      %v329 = vpow.pop %v328
      %v330 = vsel %vm323, %v329, 0.0
      %331 = vadd.xlane.f32.xlu0 %v330
      %v332 = vpop.xlane.xlu0 %331
      %v333 = vrcp.pop %v332
      %v334 = vmul.f32 %v329, %v333
      %v335 = vpack.c.bf16 %v334, %v334
      %v337 = vsel %vm323, %v335, 0
      %vm339 = vcmask 1043456
      %v341 = vsel %vm339, %v281, 0
      %343 = vmatprep.subr.bf16.mxu0 0
      %344 = vmatpush1.bf16.msra.mxu0 %v341
      %345 = vmatprep.subr.bf16.mxu0 0
      %346 = vmatpush1.bf16.msra.mxu0 0
      %347 = vmatprep.subr.bf16.mxu0 0
      %348 = vmatpush1.bf16.msra.mxu0 0
      %349 = vmatprep.subr.bf16.mxu0 0
      %350 = vmatpush1.bf16.msra.mxu0 0
      %351 = vmatprep.subr.bf16.mxu0 0
      %352 = vmatpush1.bf16.msra.mxu0 0
      %353 = vmatprep.subr.bf16.mxu0 0
      %354 = vmatpush1.bf16.msra.mxu0 0
      %355 = vmatprep.subr.bf16.mxu0 0
      %356 = vmatpush1.bf16.msra.mxu0 0
      %357 = vmatprep.subr.bf16.mxu0 0
      %358 = vmatpush1.bf16.msra.mxu0 0
      %359 = vmatprep.subr.bf16.mxu0 0
      %360 = vmatpush1.bf16.msra.mxu0 0
      %361 = vmatprep.subr.bf16.mxu0 0
      %362 = vmatpush1.bf16.msra.mxu0 0
      %363 = vmatprep.subr.bf16.mxu0 0
      %364 = vmatpush1.bf16.msra.mxu0 0
      %365 = vmatprep.subr.bf16.mxu0 0
      %366 = vmatpush1.bf16.msra.mxu0 0
      %367 = vmatprep.subr.bf16.mxu0 0
      %368 = vmatpush1.bf16.msra.mxu0 0
      %369 = vmatprep.subr.bf16.mxu0 0
      %370 = vmatpush1.bf16.msra.mxu0 0
      %371 = vmatprep.subr.bf16.mxu0 0
      %372 = vmatpush1.bf16.msra.mxu0 0
      %373 = vmatprep.subr.bf16.mxu0 0
      %374 = vmatpush1.bf16.msra.mxu0 0
      %375 = vmatprep.mubr.bf16.mxu0 0
      %376 = vmatmul.mubr.bf16.gmra.mrb[0].mxu0 %v337
      %v377 = vpop.f32.mrb[0].mxu0
      %v378 = vadd.f32 0.0, %v377
      %v379 = vpop.f32.mrb[0].mxu0
      %v380 = vpop.f32.mrb[0].mxu0
      %v381 = vpop.f32.mrb[0].mxu0
      %382 = vdwg.mxu0
      %v383 = vpack.c.bf16 %v378, %v378
      %384 = vst [vmem:[%s277] sm:$0xf] %v383
      %p385 = scmp.lt.s32.totalorder %s18, 1
      %s386 = scalar_select %p385, %s18, 1
      %p387 = scmp.lt.s32.totalorder %s19, 1
      %s388 = scalar_select %p387, %s19, 1
      %s389 = smul.addr %s386, 2
      %s390 = sadd.s32 %s388, %s389
      %s391 = smul.addr %s390, 4
      %s392 = scalar_lea.vmem %s3, %s391
      // Predicated region
      $region33: #{macbert_forward.12} parent=31 // pred_check
        %p393 = pneg %p134
      $region34: #{macbert_forward.12} parent=31 // pred_check_branch
        %395 = sbr.rel (%p393) target = $region36
      $region35: #{macbert_forward.12} parent=31 // pred_region
        _
      $region36: #{macbert_forward.12} parent=31 // pred_fallthru
        _
    $region32: #{macbert_forward.12} parent=5 // pred_fallthru
      _
    %p396 = scmp.le.s32.totalorder 2, %s9
    // Predicated region
    $region37: #{macbert_forward.12} parent=5 // pred_check
      %p397 = pneg %p396
    $region38: #{macbert_forward.12} parent=5 // pred_check_branch
      %399 = sbr.rel (%p397) target = $region40
    $region39: #{macbert_forward.12} parent=5 // pred_region
      %s400 = ssub.s32 %s9, 2
      // Predicated region
      $region41: #{macbert_forward.12} parent=39 // pred_check
        %p401 = pneg %p140
      $region42: #{macbert_forward.12} parent=39 // pred_check_branch
        %403 = sbr.rel (%p401) target = $region44
      $region43: #{macbert_forward.12} parent=39 // pred_region
        %p404 = scmp.lt.s32.totalorder %s20, 1
        %s405 = scalar_select %p404, %s20, 1
        %p406 = scmp.lt.s32.totalorder %s21, 1
        %s407 = scalar_select %p406, %s21, 1
        %s408 = smul.addr %s405, 2
        %s409 = sadd.s32 %s407, %s408
        %s410 = smul.addr %s409, 4
        %s411 = scalar_lea.vmem %s3, %s410
      $region44: #{macbert_forward.12} parent=39 // pred_fallthru
        _
    $region40: #{macbert_forward.12} parent=5 // pred_fallthru
      _
  $region6: #{macbert_forward.12} parent=0 // loop_footer
    %s13 = sadd.s32 1, %s9
  $region7: #{macbert_forward.12} parent=0 // loop_footer_branch
    %8 = sbr.rel target = $region3
  $region8: #{macbert_forward.12} parent=0 // loop_exit
    _

// kernel: macbert_forward.10
$region0: #{macbert_forward.10}
  #allocation0 [shape = 'u32[]', space=smem, size = 0x4, offset = 0x4, fixed_abs, tag = 'smem constant byte address 0x4 - core index']
  #allocation1 [shape = 'u32[144,128]{1,0:T(1,128)}', space=vmem, size = 0x12000, scoped, tag = 'internal scratch']
  %s0 = inlined_call_operand.vmem [shape: bf16[16,256], index: 0, kind: input, shape index: {}]
  %s1 = inlined_call_operand.vmem [shape: bf16[8,256], index: 1, kind: input, shape index: {}]
  %s2 = inlined_call_operand.vmem [shape: bf16[1,256], index: 2, kind: input, shape index: {}]
  %s3 = inlined_call_operand.vmem [shape: f32[1,256], index: 3, kind: input, shape index: {}]
  %s4 = inlined_call_operand.vmem [shape: f32[1,256], index: 4, kind: input, shape index: {}]
  %s5 = inlined_call_operand.vmem [shape: bf16[16,256], index: 5, kind: output, shape index: {}]
  %s6 = sld [smem:[#allocation0]]
  $region53: #{macbert_forward.10} parent=0
    _
  %s8 = ssub.s32 1, %s6
  %s9 = scalar_select 0, %s8, %s6
  loop: start=0, step=1, limit=4
  $region2: #{macbert_forward.10} parent=0 // loop_pre_header
    _
  $region3: #{macbert_forward.10} parent=0 // loop_header
    %s11 = sphi 0, %s15
    %p12 = scmp.ge.s32.totalorder %s11, 4
    %s18 = sphi 0, %s30
    %s19 = sphi 0, %s26
    %s20 = sphi 0, %s18
    %s21 = sphi 0, %s19
    %s22 = sphi 0, %s20
    %s23 = sphi 0, %s21
    %s35 = sphi 0, %s37
    %s38 = sphi 0, %s35
    %s39 = sphi 0, %s38
    %s55 = sphi 0, %s39
    %s61 = sphi 0, %s63
    %s64 = sphi 0, %s61
    %s65 = sphi 0, %s64
    %s81 = sphi 0, %s65
    %s85 = sphi 0, %s85
    %s87 = sphi 0, %s85
    %s88 = sphi 0, %s87
    %s102 = sphi 0, %s88
    %s106 = sphi 0, %s106
    %s108 = sphi 0, %s106
    %s109 = sphi 0, %s108
    %s123 = sphi 0, %s109
    %s127 = sphi 0, %s127
    %s129 = sphi 0, %s127
    %s130 = sphi 0, %s129
    %s144 = sphi 0, %s130
    %s152 = sphi 0, %s154
    %s155 = sphi 0, %s152
    %s156 = sphi 0, %s155
    %s172 = sphi 0, %s156
  $region4: #{macbert_forward.10} parent=0 // loop_header_branch
    %14 = sbr.rel (%p12) target = $region8
  $region5: #{macbert_forward.10} parent=0 // loop_body
    %s16 = ssub.s32 %s11, 1
    %s17 = ssub.s32 %s11, 2
    %s24 = sadd.s32 1, %s19
    %p25 = scmp.ge.s32.totalorder %s24, 1
    %s26 = scalar_select %p25, 0, %s24
    %s27 = sadd.s32 1, %s18
    %s28 = scalar_select %p25, %s27, %s18
    %p29 = scmp.ge.s32.totalorder %s28, 2
    %s30 = scalar_select %p29, 0, %s28
    %s31 = sadd.s32 %s18, %s19
    %s32 = sadd.s32 %s30, %s26
    %s33 = ssub.s32 %s31, %s32
    %p34 = scmp.eq.s32.totalorder %s33, 0
    %s36 = sadd.s32 %s35, 1
    %s37 = scalar_select %p34, %s35, %s36
    %p40 = pneg %p34
    %p41 = scmp.eq.s32.totalorder %s11, 1
    %p42 = por %p40, %p41
    %p43 = scmp.ne.s32.totalorder %s35, %s38
    %p44 = scmp.eq.s32.totalorder %s11, 0
    %p45 = por %p43, %p44
    %p46 = scmp.ne.s32.totalorder %s35, %s38
    %p47 = scmp.eq.s32.totalorder %s16, 1
    %p48 = por %p46, %p47
    %p49 = scmp.ne.s32.totalorder %s38, %s39
    %p50 = scmp.eq.s32.totalorder %s16, 0
    %p51 = por %p49, %p50
    %p52 = scmp.ne.s32.totalorder %s38, %s39
    %p53 = scmp.eq.s32.totalorder %s17, 1
    %p54 = por %p52, %p53
    %p56 = scmp.ne.s32.totalorder %s39, %s55
    %p57 = scmp.eq.s32.totalorder %s17, 0
    %p58 = por %p56, %p57
    %s59 = ssub.s32 %s19, %s26
    %p60 = scmp.eq.s32.totalorder %s59, 0
    %s62 = sadd.s32 %s61, 1
    %s63 = scalar_select %p60, %s61, %s62
    %p66 = pneg %p60
    %p67 = scmp.eq.s32.totalorder %s11, 1
    %p68 = por %p66, %p67
    %p69 = scmp.ne.s32.totalorder %s61, %s64
    %p70 = scmp.eq.s32.totalorder %s11, 0
    %p71 = por %p69, %p70
    %p72 = scmp.ne.s32.totalorder %s61, %s64
    %p73 = scmp.eq.s32.totalorder %s16, 1
    %p74 = por %p72, %p73
    %p75 = scmp.ne.s32.totalorder %s64, %s65
    %p76 = scmp.eq.s32.totalorder %s16, 0
    %p77 = por %p75, %p76
    %p78 = scmp.ne.s32.totalorder %s64, %s65
    %p79 = scmp.eq.s32.totalorder %s17, 1
    %p80 = por %p78, %p79
    %p82 = scmp.ne.s32.totalorder %s65, %s81
    %p83 = scmp.eq.s32.totalorder %s17, 0
    %p84 = por %p82, %p83
    %s86 = sadd.s32 %s85, 1
    %p89 = scmp.eq.s32.totalorder %s11, 1
    %p90 = scmp.ne.s32.totalorder %s85, %s87
    %p91 = scmp.eq.s32.totalorder %s11, 0
    %p92 = por %p90, %p91
    %p93 = scmp.ne.s32.totalorder %s85, %s87
    %p94 = scmp.eq.s32.totalorder %s16, 1
    %p95 = por %p93, %p94
    %p96 = scmp.ne.s32.totalorder %s87, %s88
    %p97 = scmp.eq.s32.totalorder %s16, 0
    %p98 = por %p96, %p97
    %p99 = scmp.ne.s32.totalorder %s87, %s88
    %p100 = scmp.eq.s32.totalorder %s17, 1
    %p101 = por %p99, %p100
    %p103 = scmp.ne.s32.totalorder %s88, %s102
    %p104 = scmp.eq.s32.totalorder %s17, 0
    %p105 = por %p103, %p104
    %s107 = sadd.s32 %s106, 1
    %p110 = scmp.eq.s32.totalorder %s11, 1
    %p111 = scmp.ne.s32.totalorder %s106, %s108
    %p112 = scmp.eq.s32.totalorder %s11, 0
    %p113 = por %p111, %p112
    %p114 = scmp.ne.s32.totalorder %s106, %s108
    %p115 = scmp.eq.s32.totalorder %s16, 1
    %p116 = por %p114, %p115
    %p117 = scmp.ne.s32.totalorder %s108, %s109
    %p118 = scmp.eq.s32.totalorder %s16, 0
    %p119 = por %p117, %p118
    %p120 = scmp.ne.s32.totalorder %s108, %s109
    %p121 = scmp.eq.s32.totalorder %s17, 1
    %p122 = por %p120, %p121
    %p124 = scmp.ne.s32.totalorder %s109, %s123
    %p125 = scmp.eq.s32.totalorder %s17, 0
    %p126 = por %p124, %p125
    %s128 = sadd.s32 %s127, 1
    %p131 = scmp.eq.s32.totalorder %s11, 1
    %p132 = scmp.ne.s32.totalorder %s127, %s129
    %p133 = scmp.eq.s32.totalorder %s11, 0
    %p134 = por %p132, %p133
    %p135 = scmp.ne.s32.totalorder %s127, %s129
    %p136 = scmp.eq.s32.totalorder %s16, 1
    %p137 = por %p135, %p136
    %p138 = scmp.ne.s32.totalorder %s129, %s130
    %p139 = scmp.eq.s32.totalorder %s16, 0
    %p140 = por %p138, %p139
    %p141 = scmp.ne.s32.totalorder %s129, %s130
    %p142 = scmp.eq.s32.totalorder %s17, 1
    %p143 = por %p141, %p142
    %p145 = scmp.ne.s32.totalorder %s130, %s144
    %p146 = scmp.eq.s32.totalorder %s17, 0
    %p147 = por %p145, %p146
    %s148 = sadd.s32 %s18, %s19
    %s149 = sadd.s32 %s30, %s26
    %s150 = ssub.s32 %s148, %s149
    %p151 = scmp.eq.s32.totalorder %s150, 0
    %s153 = sadd.s32 %s152, 1
    %s154 = scalar_select %p151, %s152, %s153
    %p157 = pneg %p151
    %p158 = scmp.eq.s32.totalorder %s11, 1
    %p159 = por %p157, %p158
    %p160 = scmp.ne.s32.totalorder %s152, %s155
    %p161 = scmp.eq.s32.totalorder %s11, 0
    %p162 = por %p160, %p161
    %p163 = scmp.ne.s32.totalorder %s152, %s155
    %p164 = scmp.eq.s32.totalorder %s16, 1
    %p165 = por %p163, %p164
    %p166 = scmp.ne.s32.totalorder %s155, %s156
    %p167 = scmp.eq.s32.totalorder %s16, 0
    %p168 = por %p166, %p167
    %p169 = scmp.ne.s32.totalorder %s155, %s156
    %p170 = scmp.eq.s32.totalorder %s17, 1
    %p171 = por %p169, %p170
    %p173 = scmp.ne.s32.totalorder %s156, %s172
    %p174 = scmp.eq.s32.totalorder %s17, 0
    %p175 = por %p173, %p174
    %p176 = scmp.le.s32.totalorder 1, %s11
    %p177 = scmp.lt.s32.totalorder %s11, 3
    %p178 = pnand %p176, %p177
    %p179 = pneg %p178
    // Predicated region
    $region9: #{macbert_forward.10} parent=5 // pred_check
      _
    $region10: #{macbert_forward.10} parent=5 // pred_check_branch
      %181 = sbr.rel (%p178) target = $region12
    $region11: #{macbert_forward.10} parent=5 // pred_region
      %s182 = ssub.s32 %s11, 1
      // Predicated region
      $region13: #{macbert_forward.10} parent=11 // pred_check
        %p183 = pneg %p77
      $region14: #{macbert_forward.10} parent=11 // pred_check_branch
        %185 = sbr.rel (%p183) target = $region16
      $region15: #{macbert_forward.10} parent=11 // pred_region
        %p186 = scmp.lt.s32.totalorder %s21, 0
        %s187 = scalar_select %p186, %s21, 0
        %s188 = smul.addr %s187, 2
        %s189 = smul.addr %s188, 4
        %s190 = scalar_lea.vmem %s1, %s189
      $region16: #{macbert_forward.10} parent=11 // pred_fallthru
        _
      // Predicated region
      $region17: #{macbert_forward.10} parent=11 // pred_check
        %p191 = pneg %p98
      $region18: #{macbert_forward.10} parent=11 // pred_check_branch
        %193 = sbr.rel (%p191) target = $region20
      $region19: #{macbert_forward.10} parent=11 // pred_region
        _
      $region20: #{macbert_forward.10} parent=11 // pred_fallthru
        _
      // Predicated region
      $region21: #{macbert_forward.10} parent=11 // pred_check
        %p194 = pneg %p119
      $region22: #{macbert_forward.10} parent=11 // pred_check_branch
        %196 = sbr.rel (%p194) target = $region24
      $region23: #{macbert_forward.10} parent=11 // pred_region
        _
      $region24: #{macbert_forward.10} parent=11 // pred_fallthru
        _
      // Predicated region
      $region25: #{macbert_forward.10} parent=11 // pred_check
        %p197 = pneg %p140
      $region26: #{macbert_forward.10} parent=11 // pred_check_branch
        %199 = sbr.rel (%p197) target = $region28
      $region27: #{macbert_forward.10} parent=11 // pred_region
        _
      $region28: #{macbert_forward.10} parent=11 // pred_fallthru
        _
    $region12: #{macbert_forward.10} parent=5 // pred_fallthru
      _
    %p200 = scmp.lt.s32.totalorder %s11, 2
    // Predicated region
    $region29: #{macbert_forward.10} parent=5 // pred_check
      %p201 = pneg %p200
    $region30: #{macbert_forward.10} parent=5 // pred_check_branch
      %203 = sbr.rel (%p201) target = $region32
    $region31: #{macbert_forward.10} parent=5 // pred_region
      // Predicated region
      $region33: #{macbert_forward.10} parent=31 // pred_check
        %p204 = pneg %p45
      $region34: #{macbert_forward.10} parent=31 // pred_check_branch
        %206 = sbr.rel (%p204) target = $region36
      $region35: #{macbert_forward.10} parent=31 // pred_region
        %s207 = sadd.s32 %s18, %s19
        %p208 = scmp.lt.s32.totalorder %s207, 1
        %s209 = scalar_select %p208, %s207, 1
        %s210 = smul.addr %s209, 2
        %s211 = smul.addr %s210, 4
        %s212 = scalar_lea.vmem %s0, %s211
        %s213 = sadd.s32 %s18, %s19
      $region36: #{macbert_forward.10} parent=31 // pred_fallthru
        _
    $region32: #{macbert_forward.10} parent=5 // pred_fallthru
      _
    %p214 = scmp.le.s32.totalorder 1, %s11
    %p215 = scmp.lt.s32.totalorder %s11, 3
    %p216 = pnand %p214, %p215
    %p217 = pneg %p216
    // Predicated region
    $region37: #{macbert_forward.10} parent=5 // pred_check
      _
    $region38: #{macbert_forward.10} parent=5 // pred_check_branch
      %219 = sbr.rel (%p216) target = $region40
    $region39: #{macbert_forward.10} parent=5 // pred_region
      %s220 = ssub.s32 %s11, 1
      %s221 = sadd.s32 %s20, %s21
      %p222 = scmp.lt.s32.totalorder %s221, 1
      %s223 = scalar_select %p222, %s221, 1
      %s224 = smul.addr %s223, 2
      %s225 = smul.addr %s224, 4
      %s226 = scalar_lea.vmem %s0, %s225
      %p227 = pneg %p51
      %p228 = pneg %p48
      %p229 = scmp.lt.s32.totalorder %s21, 0
      %s230 = scalar_select %p229, %s21, 0
      %s231 = smul.addr %s230, 2
      %s232 = smul.addr %s231, 4
      %s233 = scalar_lea.vmem %s1, %s232
      %p234 = pneg %p77
      %p235 = pneg %p74
      %p236 = pneg %p98
      %p237 = pneg %p95
      %p238 = pneg %p119
      %p239 = pneg %p116
      %p240 = pneg %p140
      %p241 = pneg %p137
      %p242 = pneg %p168
      %p243 = pneg %p165
      %s244 = sadd.s32 %s20, %s21
      %p245 = scmp.lt.s32.totalorder %s244, 1
      %s246 = scalar_select %p245, %s244, 1
      %s247 = smul.addr %s246, 2
      %s248 = smul.addr %s247, 4
      %s249 = scalar_lea.vmem %s5, %s248
      %s250 = sadd.s32 %s20, %s21
      %p251 = scmp.lt.s32.totalorder %s250, 1
      %s252 = scalar_select %p251, %s250, 1
      %s253 = smul.addr %s252, 2
      %s254 = smul.addr %s253, 4
      %s255 = scalar_lea.vmem %s0, %s254
      %s256 = sadd.s32 %s20, %s21
      %p257 = scmp.lt.s32.totalorder %s21, 0
      %s258 = scalar_select %p257, %s21, 0
      %s259 = smul.addr %s258, 2
      %s260 = smul.addr %s259, 4
      %s261 = scalar_lea.vmem %s1, %s260
      %s262 = sadd.s32 %s20, %s21
      %p263 = scmp.lt.s32.totalorder %s262, 1
      %s264 = scalar_select %p263, %s262, 1
      %s265 = smul.addr %s264, 2
      %s266 = smul.addr %s265, 4
      %s267 = scalar_lea.vmem %s5, %s266
      %s268 = sadd.s32 %s20, %s21
      %v269 = vld [vmem:[%s255] sm:$0xff]
      %v270 = vunpack.c.l.bf16 %v269
      %v271 = vunpack.c.h.bf16 %v269
      %v272 = vld [vmem:[%s261] sm:$0xff]
      %v273 = vunpack.c.l.bf16 %v272
      %v274 = vunpack.c.h.bf16 %v272
      %v275 = vadd.f32 %v270, %v273
      %v276 = vadd.f32 %v271, %v274
      %v277 = vld [vmem:[%s2] sm:$0x3]
      %v278 = vunpack.c.l.bf16 %v277
      %v280 = vlaneseq
      %v281 = vshrl.u32 %v280, 7
      %v282 = vsub.s32 0, %v281
      %v283 = vrot.slane %v278, %v282
      %v284 = vlaneseq
      %v285 = vshrl.u32 %v284, 7
      %v286 = vsub.s32 2, %v285
      %v287 = vrot.slane %v278, %v286
      %v290 = vlaneseq
      %v291 = vshrl.u32 %v290, 7
      %v292 = vsub.s32 0, %v291
      %v293 = vrot.slane %v283, %v292
      %v294 = vlaneseq
      %v295 = vshrl.u32 %v294, 7
      %v296 = vsub.s32 0, %v295
      %v297 = vrot.slane %v287, %v296
      %v298 = vadd.f32 %v275, %v293
      %v299 = vadd.f32 %v276, %v297
      %v300 = vadd.f32 %v298, %v299
      %301 = vadd.xlane.f32.xlu0 %v300
      %v302 = vpop.xlane.xlu0 %301
      %v303 = vrcp.pop 256.0
      %v304 = vmul.f32 %v302, %v303
      %v305 = vsub.f32 %v298, %v304
      %v306 = vsub.f32 %v299, %v304
      %v307 = vmul.f32 %v305, %v305
      %v308 = vmul.f32 %v306, %v306
      %v309 = vadd.f32 %v307, %v308
      %310 = vadd.xlane.f32.xlu0 %v309
      %v311 = vpop.xlane.xlu0 %310
      %v312 = vmul.f32 %v311, %v303
      %v313 = vadd.f32 %v312, 1e-12
      %v314 = vrsqrt.pop %v313
      %v315 = vmul.f32 %v305, %v314
      %v316 = vmul.f32 %v306, %v314
      %v317 = vld [vmem:[%s3] sm:$0x3]
      %v319 = vlaneseq
      %v320 = vshrl.u32 %v319, 7
      %v321 = vsub.s32 0, %v320
      %v322 = vrot.slane %v317, %v321
      %v323 = vlaneseq
      %v324 = vshrl.u32 %v323, 7
      %v325 = vsub.s32 1, %v324
      %v326 = vrot.slane %v317, %v325
      %v329 = vmul.f32 %v315, %v322
      %v330 = vmul.f32 %v316, %v326
      %v331 = vld [vmem:[%s4] sm:$0x3]
      %v333 = vlaneseq
      %v334 = vshrl.u32 %v333, 7
      %v335 = vsub.s32 0, %v334
      %v336 = vrot.slane %v331, %v335
      %v337 = vlaneseq
      %v338 = vshrl.u32 %v337, 7
      %v339 = vsub.s32 1, %v338
      %v340 = vrot.slane %v331, %v339
      %v343 = vadd.f32 %v329, %v336
      %v344 = vadd.f32 %v330, %v340
      %v345 = vpack.c.bf16 %v343, %v343
      %v346 = vpack.c.bf16 %v344, %v344
      %v349 = vunpack.c.l.b16 %v345
      %v350 = vunpack.c.l.b16 %v346
      %v351 = vpack.c.b16 %v350, %v349
      %353 = vst [vmem:[%s267] sm:$0xff] %v351
      %s354 = sadd.s32 %s20, %s21
      %p355 = scmp.lt.s32.totalorder %s354, 1
      %s356 = scalar_select %p355, %s354, 1
      %s357 = smul.addr %s356, 2
      %s358 = smul.addr %s357, 4
      %s359 = scalar_lea.vmem %s5, %s358
      // Predicated region
      $region41: #{macbert_forward.10} parent=39 // pred_check
        %p360 = pneg %p165
      $region42: #{macbert_forward.10} parent=39 // pred_check_branch
        %362 = sbr.rel (%p360) target = $region44
      $region43: #{macbert_forward.10} parent=39 // pred_region
        %s363 = sadd.s32 %s20, %s21
      $region44: #{macbert_forward.10} parent=39 // pred_fallthru
        _
    $region40: #{macbert_forward.10} parent=5 // pred_fallthru
      _
    %p364 = scmp.le.s32.totalorder 2, %s11
    // Predicated region
    $region45: #{macbert_forward.10} parent=5 // pred_check
      %p365 = pneg %p364
    $region46: #{macbert_forward.10} parent=5 // pred_check_branch
      %367 = sbr.rel (%p365) target = $region48
    $region47: #{macbert_forward.10} parent=5 // pred_region
      %s368 = ssub.s32 %s11, 2
      // Predicated region
      $region49: #{macbert_forward.10} parent=47 // pred_check
        %p369 = pneg %p171
      $region50: #{macbert_forward.10} parent=47 // pred_check_branch
        %371 = sbr.rel (%p369) target = $region52
      $region51: #{macbert_forward.10} parent=47 // pred_region
        %s372 = sadd.s32 %s22, %s23
        %p373 = scmp.lt.s32.totalorder %s372, 1
        %s374 = scalar_select %p373, %s372, 1
        %s375 = smul.addr %s374, 2
        %s376 = smul.addr %s375, 4
        %s377 = scalar_lea.vmem %s5, %s376
      $region52: #{macbert_forward.10} parent=47 // pred_fallthru
        _
    $region48: #{macbert_forward.10} parent=5 // pred_fallthru
      _
  $region6: #{macbert_forward.10} parent=0 // loop_footer
    %s15 = sadd.s32 1, %s11
  $region7: #{macbert_forward.10} parent=0 // loop_footer_branch
    %10 = sbr.rel target = $region3
  $region8: #{macbert_forward.10} parent=0 // loop_exit
    _

// kernel: macbert_forward.11
$region0: #{macbert_forward.11}
  #allocation0 [shape = 'u32[]', space=smem, size = 0x4, offset = 0x4, fixed_abs, tag = 'smem constant byte address 0x4 - core index']
  #allocation1 [shape = 'u32[144,128]{1,0:T(1,128)}', space=vmem, size = 0x12000, scoped, tag = 'internal scratch']
  #allocation2 [shape = 'f32[16,256]{1,0:T(8,128)}', space=vmem, size = 0x4000, scoped, tag = 'scratch operand']
  %s0 = inlined_call_operand.vmem [shape: bf16[16,256], index: 0, kind: input, shape index: {}]
  %s1 = inlined_call_operand.hbm [shape: bf16[256,768], index: 1, kind: input, shape index: {}]
  %s2 = inlined_call_operand.vmem [shape: f32[1,768], index: 2, kind: input, shape index: {}]
  %s3 = inlined_call_operand.vmem [shape: bf16[16,768], index: 3, kind: output, shape index: {}]
  %s4 = sld [smem:[#allocation0]]
  $region91: #{macbert_forward.11} parent=0
    _
  %s6 = ssub.s32 1, %s4
  %s7 = scalar_select 0, %s6, %s4
  $region1: #{macbert_forward.11} parent=0
    #allocation3 [shape = 'u8[262144]{0}', space=vmem, size = 0x40000, scoped, tag = 'input window, operand 1']
    #allocation4 [shape = 's32[2]{0}', space=sflag, size = 0x8, scoped, tag = 'scoped memory for macbert_forward.11']
    #allocation5 [shape = 'u8[16384]{0}', space=vmem, size = 0x4000, scoped, tag = 'output window, operand 0']
    %8 = vsyncpa [#allocation4], 0
    %s9 = scalar_lea.sflag [#allocation4], 1
    %10 = vsyncpa %s9, 0
    loop: start=0, step=1, limit=5
    $region2: #{macbert_forward.11} parent=1 // loop_pre_header
      _
    $region3: #{macbert_forward.11} parent=1 // loop_header
      %s12 = sphi 0, %s16
      %p13 = scmp.ge.s32.totalorder %s12, 5
      %s19 = sphi 0, %s38
      %s20 = sphi 0, %s34
      %s21 = sphi 0, %s30
      %s22 = sphi 0, %s19
      %s23 = sphi 0, %s20
      %s24 = sphi 0, %s21
      %s25 = sphi 0, %s22
      %s26 = sphi 0, %s23
      %s27 = sphi 0, %s24
      %s43 = sphi 0, %s45
      %s46 = sphi 0, %s43
      %s47 = sphi 0, %s46
      %s63 = sphi 0, %s47
      %s71 = sphi 0, %s73
      %s74 = sphi 0, %s71
      %s75 = sphi 0, %s74
      %s91 = sphi 0, %s75
      %s97 = sphi 0, %s99
      %s100 = sphi 0, %s97
      %s101 = sphi 0, %s100
      %s117 = sphi 0, %s101
      %s125 = sphi 0, %s127
      %s128 = sphi 0, %s125
      %s129 = sphi 0, %s128
      %s145 = sphi 0, %s129
    $region4: #{macbert_forward.11} parent=1 // loop_header_branch
      %15 = sbr.rel (%p13) target = $region8
    $region5: #{macbert_forward.11} parent=1 // loop_body
      %s17 = ssub.s32 %s12, 1
      %s18 = ssub.s32 %s12, 2
      %s28 = sadd.s32 1, %s21
      %p29 = scmp.ge.s32.totalorder %s28, 1
      %s30 = scalar_select %p29, 0, %s28
      %s31 = sadd.s32 1, %s20
      %s32 = scalar_select %p29, %s31, %s20
      %p33 = scmp.ge.s32.totalorder %s32, 3
      %s34 = scalar_select %p33, 0, %s32
      %s35 = sadd.s32 1, %s19
      %s36 = scalar_select %p33, %s35, %s19
      %p37 = scmp.ge.s32.totalorder %s36, 1
      %s38 = scalar_select %p37, 0, %s36
      %s39 = ssub.s32 %s19, %s38
      %s40 = ssub.s32 %s21, %s30
      %s41 = sor.u32 %s39, %s40
      %p42 = scmp.eq.s32.totalorder %s41, 0
      %s44 = sadd.s32 %s43, 1
      %s45 = scalar_select %p42, %s43, %s44
      %p48 = pneg %p42
      %p49 = scmp.eq.s32.totalorder %s12, 2
      %p50 = por %p48, %p49
      %p51 = scmp.ne.s32.totalorder %s43, %s46
      %p52 = scmp.eq.s32.totalorder %s12, 0
      %p53 = por %p51, %p52
      %p54 = scmp.ne.s32.totalorder %s43, %s46
      %p55 = scmp.eq.s32.totalorder %s17, 2
      %p56 = por %p54, %p55
      %p57 = scmp.ne.s32.totalorder %s46, %s47
      %p58 = scmp.eq.s32.totalorder %s17, 0
      %p59 = por %p57, %p58
      %p60 = scmp.ne.s32.totalorder %s46, %s47
      %p61 = scmp.eq.s32.totalorder %s18, 2
      %p62 = por %p60, %p61
      %p64 = scmp.ne.s32.totalorder %s47, %s63
      %p65 = scmp.eq.s32.totalorder %s18, 0
      %p66 = por %p64, %p65
      %s67 = ssub.s32 %s21, %s30
      %s68 = ssub.s32 %s20, %s34
      %s69 = sor.u32 %s67, %s68
      %p70 = scmp.eq.s32.totalorder %s69, 0
      %s72 = sadd.s32 %s71, 1
      %s73 = scalar_select %p70, %s71, %s72
      %p76 = pneg %p70
      %p77 = scmp.eq.s32.totalorder %s12, 2
      %p78 = por %p76, %p77
      %p79 = scmp.ne.s32.totalorder %s71, %s74
      %p80 = scmp.eq.s32.totalorder %s12, 0
      %p81 = por %p79, %p80
      %p82 = scmp.ne.s32.totalorder %s71, %s74
      %p83 = scmp.eq.s32.totalorder %s17, 2
      %p84 = por %p82, %p83
      %p85 = scmp.ne.s32.totalorder %s74, %s75
      %p86 = scmp.eq.s32.totalorder %s17, 0
      %p87 = por %p85, %p86
      %p88 = scmp.ne.s32.totalorder %s74, %s75
      %p89 = scmp.eq.s32.totalorder %s18, 2
      %p90 = por %p88, %p89
      %p92 = scmp.ne.s32.totalorder %s75, %s91
      %p93 = scmp.eq.s32.totalorder %s18, 0
      %p94 = por %p92, %p93
      %s95 = ssub.s32 %s20, %s34
      %p96 = scmp.eq.s32.totalorder %s95, 0
      %s98 = sadd.s32 %s97, 1
      %s99 = scalar_select %p96, %s97, %s98
      %p102 = pneg %p96
      %p103 = scmp.eq.s32.totalorder %s12, 2
      %p104 = por %p102, %p103
      %p105 = scmp.ne.s32.totalorder %s97, %s100
      %p106 = scmp.eq.s32.totalorder %s12, 0
      %p107 = por %p105, %p106
      %p108 = scmp.ne.s32.totalorder %s97, %s100
      %p109 = scmp.eq.s32.totalorder %s17, 2
      %p110 = por %p108, %p109
      %p111 = scmp.ne.s32.totalorder %s100, %s101
      %p112 = scmp.eq.s32.totalorder %s17, 0
      %p113 = por %p111, %p112
      %p114 = scmp.ne.s32.totalorder %s100, %s101
      %p115 = scmp.eq.s32.totalorder %s18, 2
      %p116 = por %p114, %p115
      %p118 = scmp.ne.s32.totalorder %s101, %s117
      %p119 = scmp.eq.s32.totalorder %s18, 0
      %p120 = por %p118, %p119
      %s121 = ssub.s32 %s19, %s38
      %s122 = ssub.s32 %s20, %s34
      %s123 = sor.u32 %s121, %s122
      %p124 = scmp.eq.s32.totalorder %s123, 0
      %s126 = sadd.s32 %s125, 1
      %s127 = scalar_select %p124, %s125, %s126
      %p130 = pneg %p124
      %p131 = scmp.eq.s32.totalorder %s12, 2
      %p132 = por %p130, %p131
      %p133 = scmp.ne.s32.totalorder %s125, %s128
      %p134 = scmp.eq.s32.totalorder %s12, 0
      %p135 = por %p133, %p134
      %p136 = scmp.ne.s32.totalorder %s125, %s128
      %p137 = scmp.eq.s32.totalorder %s17, 2
      %p138 = por %p136, %p137
      %p139 = scmp.ne.s32.totalorder %s128, %s129
      %p140 = scmp.eq.s32.totalorder %s17, 0
      %p141 = por %p139, %p140
      %p142 = scmp.ne.s32.totalorder %s128, %s129
      %p143 = scmp.eq.s32.totalorder %s18, 2
      %p144 = por %p142, %p143
      %p146 = scmp.ne.s32.totalorder %s129, %s145
      %p147 = scmp.eq.s32.totalorder %s18, 0
      %p148 = por %p146, %p147
      %p149 = scmp.le.s32.totalorder 1, %s12
      %p150 = scmp.lt.s32.totalorder %s12, 4
      %p151 = pnand %p149, %p150
      %p152 = pneg %p151
      // Predicated region
      $region9: #{macbert_forward.11} parent=5 // pred_check
        _
      $region10: #{macbert_forward.11} parent=5 // pred_check_branch
        %154 = sbr.rel (%p151) target = $region12
      $region11: #{macbert_forward.11} parent=5 // pred_region
        %s155 = ssub.s32 %s12, 1
        // Predicated region
        $region13: #{macbert_forward.11} parent=11 // pred_check
          %p156 = pneg %p59
        $region14: #{macbert_forward.11} parent=11 // pred_check_branch
          %158 = sbr.rel (%p156) target = $region16
        $region15: #{macbert_forward.11} parent=11 // pred_region
          %s159 = smul.u32 2, %s22
          %s160 = smul.u32 2, %s24
          %p161 = scmp.lt.s32.totalorder %s159, 1
          %s162 = scalar_select %p161, %s159, 1
          %p163 = scmp.lt.s32.totalorder %s160, 1
          %s164 = scalar_select %p163, %s160, 1
          %s165 = smul.addr %s162, 2
          %s166 = sadd.s32 %s164, %s165
          %s167 = smul.addr %s166, 4
          %s168 = scalar_lea.vmem %s0, %s167
          %s169 = smul.u32 2, %s22
          %s170 = smul.u32 2, %s24
        $region16: #{macbert_forward.11} parent=11 // pred_fallthru
          _
      $region12: #{macbert_forward.11} parent=5 // pred_fallthru
        _
      %p171 = scmp.lt.s32.totalorder %s12, 3
      // Predicated region
      $region17: #{macbert_forward.11} parent=5 // pred_check
        %p172 = pneg %p171
      $region18: #{macbert_forward.11} parent=5 // pred_check_branch
        %174 = sbr.rel (%p172) target = $region20
      $region19: #{macbert_forward.11} parent=5 // pred_region
        // Predicated region
        $region21: #{macbert_forward.11} parent=19 // pred_check
          %p175 = pneg %p81
        $region22: #{macbert_forward.11} parent=19 // pred_check_branch
          %177 = sbr.rel (%p175) target = $region24
        $region23: #{macbert_forward.11} parent=19 // pred_region
          %s178 = sand.u32 %s71, 1
          %s179 = scalar_lea.sflag [#allocation4], %s178
          %s180 = sand.u32 %s71, 1
          %s181 = smul.addr %s180, 256
          %s182 = scalar_lea.vmem [#allocation3], %s181
          %s183 = smul.u32 32, %s21
          %s184 = smul.u32 2, %s20
          %s186 = ssub.s32 4096, 4096
          %187 = vsyncadd %s179, %s186
          %s188 = smul.addr %s183, 6
          %s189 = sadd.s32 %s184, %s188
          %s190 = smul.addr %s189, 64
          %s191 = scalar_lea.hbm %s1, %s190
          %s192 = sshll.u32 %s182, 4
          %s193 = int_to_ptr.vmem [resolvable:$true] %s192
          %198 = dma.hbm_to_vmem [thread:$0]  %s191, 4096, %s193, %s179, 384, 128, 8
        $region24: #{macbert_forward.11} parent=19 // pred_fallthru
          _
        // Predicated region
        $region25: #{macbert_forward.11} parent=19 // pred_check
          %p199 = pneg %p107
        $region26: #{macbert_forward.11} parent=19 // pred_check_branch
          %201 = sbr.rel (%p199) target = $region28
        $region27: #{macbert_forward.11} parent=19 // pred_region
          %s202 = smul.u32 2, %s20
          %p203 = scmp.lt.s32.totalorder %s202, 5
          %s204 = scalar_select %p203, %s202, 5
          %s205 = scalar_lea.vmem %s2, %s204
          %s206 = smul.u32 2, %s20
        $region28: #{macbert_forward.11} parent=19 // pred_fallthru
          _
      $region20: #{macbert_forward.11} parent=5 // pred_fallthru
        _
      %p207 = scmp.le.s32.totalorder 1, %s12
      %p208 = scmp.lt.s32.totalorder %s12, 4
      %p209 = pnand %p207, %p208
      %p210 = pneg %p209
      // Predicated region
      $region29: #{macbert_forward.11} parent=5 // pred_check
        _
      $region30: #{macbert_forward.11} parent=5 // pred_check_branch
        %212 = sbr.rel (%p209) target = $region32
      $region31: #{macbert_forward.11} parent=5 // pred_region
        %s213 = ssub.s32 %s12, 1
        %s214 = sand.u32 %s74, 1
        %s215 = scalar_lea.sflag [#allocation4], %s214
        %s216 = sand.u32 %s74, 1
        %s217 = smul.addr %s216, 256
        %s218 = scalar_lea.vmem [#allocation3], %s217
        // Predicated region
        $region33: #{macbert_forward.11} parent=31 // pred_check
          %p219 = pneg %p87
        $region34: #{macbert_forward.11} parent=31 // pred_check_branch
          %221 = sbr.rel (%p219) target = $region36
        $region35: #{macbert_forward.11} parent=31 // pred_region
          %222 = dma.done %s215, 4096
        $region36: #{macbert_forward.11} parent=31 // pred_fallthru
          _
        %s223 = smul.u32 2, %s22
        %s224 = smul.u32 2, %s24
        %p225 = scmp.lt.s32.totalorder %s223, 1
        %s226 = scalar_select %p225, %s223, 1
        %p227 = scmp.lt.s32.totalorder %s224, 1
        %s228 = scalar_select %p227, %s224, 1
        %s229 = smul.addr %s226, 2
        %s230 = sadd.s32 %s228, %s229
        %s231 = smul.addr %s230, 4
        %s232 = scalar_lea.vmem %s0, %s231
        %p233 = pneg %p59
        %p234 = pneg %p56
        %s235 = sand.u32 %s74, 1
        %s236 = scalar_lea.sflag [#allocation4], %s235
        %s237 = sand.u32 %s74, 1
        %s238 = smul.addr %s237, 256
        %s239 = scalar_lea.vmem [#allocation3], %s238
        %p240 = pneg %p87
        %p241 = pneg %p84
        %s242 = smul.u32 2, %s23
        %p243 = scmp.lt.s32.totalorder %s242, 5
        %s244 = scalar_select %p243, %s242, 5
        %s245 = scalar_lea.vmem %s2, %s244
        %p246 = pneg %p113
        %p247 = pneg %p110
        %p248 = pneg %p141
        %p249 = pneg %p138
        %s250 = sand.u32 %s128, 1
        %s251 = sand.u32 %s128, 1
        %s252 = smul.addr %s251, 16
        %s253 = scalar_lea.vmem [#allocation5], %s252
        %s254 = smul.u32 2, %s22
        %s255 = smul.u32 2, %s24
        %p256 = scmp.lt.s32.totalorder %s254, 1
        %s257 = scalar_select %p256, %s254, 1
        %p258 = scmp.lt.s32.totalorder %s255, 1
        %s259 = scalar_select %p258, %s255, 1
        %s260 = smul.addr %s257, 2
        %s261 = sadd.s32 %s259, %s260
        %s262 = smul.addr %s261, 4
        %s263 = scalar_lea.vmem %s0, %s262
        %s264 = smul.u32 2, %s22
        %s265 = smul.u32 2, %s24
        %s266 = smul.u32 32, %s24
        %s267 = smul.u32 2, %s23
        %s268 = smul.u32 2, %s23
        %p269 = scmp.lt.s32.totalorder %s268, 5
        %s270 = scalar_select %p269, %s268, 5
        %s271 = scalar_lea.vmem %s2, %s270
        %s272 = smul.u32 2, %s23
        %s273 = smul.u32 2, %s22
        %s274 = smul.u32 2, %s23
        %p275 = scmp.eq.s32.totalorder %s24, 0
        // Predicated region
        $region37: #{macbert_forward.11} parent=31 // pred_check
          %p276 = pneg %p275
        $region38: #{macbert_forward.11} parent=31 // pred_check_branch
          %278 = sbr.rel (%p276) target = $region40
        $region39: #{macbert_forward.11} parent=31 // pred_region
          %279 = vst [vmem:[#allocation2] sm:$0xff] 0.0
          %280 = vst [vmem:[#allocation2 + $0x8] sm:$0xff] 0.0
          %281 = vst [vmem:[#allocation2 + $0x10] sm:$0xff] 0.0
          %282 = vst [vmem:[#allocation2 + $0x18] sm:$0xff] 0.0
        $region40: #{macbert_forward.11} parent=31 // pred_fallthru
          _
        %v283 = vld [vmem:[#allocation2] sm:$0xff]
        %v284 = vld [vmem:[#allocation2 + $0x8] sm:$0xff]
        %v285 = vld [vmem:[#allocation2 + $0x10] sm:$0xff]
        %v286 = vld [vmem:[#allocation2 + $0x18] sm:$0xff]
        %v287 = vld [vmem:[%s263] sm:$0xff]
        %v288 = vld [vmem:[%s263 + $0x8] sm:$0xff]
        %v289 = vld [vmem:[%s218] sm:$0xff]
        %v290 = vld [vmem:[%s218 + $0x8] sm:$0xff]
        %v291 = vld [vmem:[%s218 + $0x10] sm:$0xff]
        %v292 = vld [vmem:[%s218 + $0x18] sm:$0xff]
        %v293 = vld [vmem:[%s218 + $0x20] sm:$0xff]
        %v294 = vld [vmem:[%s218 + $0x28] sm:$0xff]
        %v295 = vld [vmem:[%s218 + $0x30] sm:$0xff]
        %v296 = vld [vmem:[%s218 + $0x38] sm:$0xff]
        %v297 = vld [vmem:[%s218 + $0x40] sm:$0xff]
        %v298 = vld [vmem:[%s218 + $0x48] sm:$0xff]
        %v299 = vld [vmem:[%s218 + $0x50] sm:$0xff]
        %v300 = vld [vmem:[%s218 + $0x58] sm:$0xff]
        %v301 = vld [vmem:[%s218 + $0x60] sm:$0xff]
        %v302 = vld [vmem:[%s218 + $0x68] sm:$0xff]
        %v303 = vld [vmem:[%s218 + $0x70] sm:$0xff]
        %v304 = vld [vmem:[%s218 + $0x78] sm:$0xff]
        %v305 = vld [vmem:[%s218 + $0x80] sm:$0xff]
        %v306 = vld [vmem:[%s218 + $0x88] sm:$0xff]
        %v307 = vld [vmem:[%s218 + $0x90] sm:$0xff]
        %v308 = vld [vmem:[%s218 + $0x98] sm:$0xff]
        %v309 = vld [vmem:[%s218 + $0xa0] sm:$0xff]
        %v310 = vld [vmem:[%s218 + $0xa8] sm:$0xff]
        %v311 = vld [vmem:[%s218 + $0xb0] sm:$0xff]
        %v312 = vld [vmem:[%s218 + $0xb8] sm:$0xff]
        %v313 = vld [vmem:[%s218 + $0xc0] sm:$0xff]
        %v314 = vld [vmem:[%s218 + $0xc8] sm:$0xff]
        %v315 = vld [vmem:[%s218 + $0xd0] sm:$0xff]
        %v316 = vld [vmem:[%s218 + $0xd8] sm:$0xff]
        %v317 = vld [vmem:[%s218 + $0xe0] sm:$0xff]
        %v318 = vld [vmem:[%s218 + $0xe8] sm:$0xff]
        %v319 = vld [vmem:[%s218 + $0xf0] sm:$0xff]
        %v320 = vld [vmem:[%s218 + $0xf8] sm:$0xff]
        %v323 = vunpack.c.l.b16 %v287
        %v324 = vunpack.c.h.b16 %v287
        %v325 = vunpack.c.l.b16 %v288
        %v326 = vunpack.c.h.b16 %v288
        %v327 = vpack.c.b16 %v325, %v323
        %v328 = vpack.c.b16 %v326, %v324
        %v363 = vunpack.c.l.b16 %v289
        %v364 = vunpack.c.h.b16 %v289
        %v365 = vunpack.c.l.b16 %v290
        %v366 = vunpack.c.h.b16 %v290
        %v367 = vunpack.c.l.b16 %v291
        %v368 = vunpack.c.h.b16 %v291
        %v369 = vunpack.c.l.b16 %v292
        %v370 = vunpack.c.h.b16 %v292
        %v371 = vunpack.c.l.b16 %v293
        %v372 = vunpack.c.h.b16 %v293
        %v373 = vunpack.c.l.b16 %v294
        %v374 = vunpack.c.h.b16 %v294
        %v375 = vunpack.c.l.b16 %v295
        %v376 = vunpack.c.h.b16 %v295
        %v377 = vunpack.c.l.b16 %v296
        %v378 = vunpack.c.h.b16 %v296
        %v379 = vunpack.c.l.b16 %v297
        %v380 = vunpack.c.h.b16 %v297
        %v381 = vunpack.c.l.b16 %v298
        %v382 = vunpack.c.h.b16 %v298
        %v383 = vunpack.c.l.b16 %v299
        %v384 = vunpack.c.h.b16 %v299
        %v385 = vunpack.c.l.b16 %v300
        %v386 = vunpack.c.h.b16 %v300
        %v387 = vunpack.c.l.b16 %v301
        %v388 = vunpack.c.h.b16 %v301
        %v389 = vunpack.c.l.b16 %v302
        %v390 = vunpack.c.h.b16 %v302
        %v391 = vunpack.c.l.b16 %v303
        %v392 = vunpack.c.h.b16 %v303
        %v393 = vunpack.c.l.b16 %v304
        %v394 = vunpack.c.h.b16 %v304
        %v395 = vunpack.c.l.b16 %v305
        %v396 = vunpack.c.h.b16 %v305
        %v397 = vunpack.c.l.b16 %v306
        %v398 = vunpack.c.h.b16 %v306
        %v399 = vunpack.c.l.b16 %v307
        %v400 = vunpack.c.h.b16 %v307
        %v401 = vunpack.c.l.b16 %v308
        %v402 = vunpack.c.h.b16 %v308
        %v403 = vunpack.c.l.b16 %v309
        %v404 = vunpack.c.h.b16 %v309
        %v405 = vunpack.c.l.b16 %v310
        %v406 = vunpack.c.h.b16 %v310
        %v407 = vunpack.c.l.b16 %v311
        %v408 = vunpack.c.h.b16 %v311
        %v409 = vunpack.c.l.b16 %v312
        %v410 = vunpack.c.h.b16 %v312
        %v411 = vunpack.c.l.b16 %v313
        %v412 = vunpack.c.h.b16 %v313
        %v413 = vunpack.c.l.b16 %v314
        %v414 = vunpack.c.h.b16 %v314
        %v415 = vunpack.c.l.b16 %v315
        %v416 = vunpack.c.h.b16 %v315
        %v417 = vunpack.c.l.b16 %v316
        %v418 = vunpack.c.h.b16 %v316
        %v419 = vunpack.c.l.b16 %v317
        %v420 = vunpack.c.h.b16 %v317
        %v421 = vunpack.c.l.b16 %v318
        %v422 = vunpack.c.h.b16 %v318
        %v423 = vunpack.c.l.b16 %v319
        %v424 = vunpack.c.h.b16 %v319
        %v425 = vunpack.c.l.b16 %v320
        %v426 = vunpack.c.h.b16 %v320
        %v427 = vpack.c.b16 %v365, %v363
        %v428 = vpack.c.b16 %v366, %v364
        %v429 = vpack.c.b16 %v369, %v367
        %v430 = vpack.c.b16 %v370, %v368
        %v431 = vpack.c.b16 %v373, %v371
        %v432 = vpack.c.b16 %v374, %v372
        %v433 = vpack.c.b16 %v377, %v375
        %v434 = vpack.c.b16 %v378, %v376
        %v435 = vpack.c.b16 %v381, %v379
        %v436 = vpack.c.b16 %v382, %v380
        %v437 = vpack.c.b16 %v385, %v383
        %v438 = vpack.c.b16 %v386, %v384
        %v439 = vpack.c.b16 %v389, %v387
        %v440 = vpack.c.b16 %v390, %v388
        %v441 = vpack.c.b16 %v393, %v391
        %v442 = vpack.c.b16 %v394, %v392
        %v443 = vpack.c.b16 %v397, %v395
        %v444 = vpack.c.b16 %v398, %v396
        %v445 = vpack.c.b16 %v401, %v399
        %v446 = vpack.c.b16 %v402, %v400
        %v447 = vpack.c.b16 %v405, %v403
        %v448 = vpack.c.b16 %v406, %v404
        %v449 = vpack.c.b16 %v409, %v407
        %v450 = vpack.c.b16 %v410, %v408
        %v451 = vpack.c.b16 %v413, %v411
        %v452 = vpack.c.b16 %v414, %v412
        %v453 = vpack.c.b16 %v417, %v415
        %v454 = vpack.c.b16 %v418, %v416
        %v455 = vpack.c.b16 %v421, %v419
        %v456 = vpack.c.b16 %v422, %v420
        %v457 = vpack.c.b16 %v425, %v423
        %v458 = vpack.c.b16 %v426, %v424
        %491 = vmatprep.subr.bf16.mxu0 %v428
        %492 = vmatpush1.bf16.msra.mxu0 %v427
        %493 = vmatprep.subr.bf16.mxu0 %v430
        %494 = vmatpush1.bf16.msra.mxu0 %v429
        %495 = vmatprep.subr.bf16.mxu0 %v432
        %496 = vmatpush1.bf16.msra.mxu0 %v431
        %497 = vmatprep.subr.bf16.mxu0 %v434
        %498 = vmatpush1.bf16.msra.mxu0 %v433
        %499 = vmatprep.subr.bf16.mxu0 %v436
        %500 = vmatpush1.bf16.msra.mxu0 %v435
        %501 = vmatprep.subr.bf16.mxu0 %v438
        %502 = vmatpush1.bf16.msra.mxu0 %v437
        %503 = vmatprep.subr.bf16.mxu0 %v440
        %504 = vmatpush1.bf16.msra.mxu0 %v439
        %505 = vmatprep.subr.bf16.mxu0 %v442
        %506 = vmatpush1.bf16.msra.mxu0 %v441
        %507 = vmatprep.subr.bf16.mxu0 %v444
        %508 = vmatpush1.bf16.msra.mxu0 %v443
        %509 = vmatprep.subr.bf16.mxu0 %v446
        %510 = vmatpush1.bf16.msra.mxu0 %v445
        %511 = vmatprep.subr.bf16.mxu0 %v448
        %512 = vmatpush1.bf16.msra.mxu0 %v447
        %513 = vmatprep.subr.bf16.mxu0 %v450
        %514 = vmatpush1.bf16.msra.mxu0 %v449
        %515 = vmatprep.subr.bf16.mxu0 %v452
        %516 = vmatpush1.bf16.msra.mxu0 %v451
        %517 = vmatprep.subr.bf16.mxu0 %v454
        %518 = vmatpush1.bf16.msra.mxu0 %v453
        %519 = vmatprep.subr.bf16.mxu0 %v456
        %520 = vmatpush1.bf16.msra.mxu0 %v455
        %521 = vmatprep.subr.bf16.mxu0 %v458
        %522 = vmatpush1.bf16.msra.mxu0 %v457
        %523 = vmatprep.mubr.bf16.mxu0 %v328
        %524 = vmatmul.mubr.bf16.gmra.mrb[0].mxu0 %v327
        %v525 = vpop.f32.mrb[0].mxu0
        %v526 = vadd.f32 0.0, %v525
        %v527 = vpop.f32.mrb[0].mxu0
        %v528 = vadd.f32 0.0, %v527
        %v529 = vpop.f32.mrb[0].mxu0
        %v530 = vadd.f32 0.0, %v529
        %v531 = vpop.f32.mrb[0].mxu0
        %v532 = vadd.f32 0.0, %v531
        %533 = vdwg.mxu0
        %v534 = vadd.f32 %v283, %v526
        %v535 = vadd.f32 %v284, %v528
        %v536 = vadd.f32 %v285, %v530
        %v537 = vadd.f32 %v286, %v532
        %538 = vst [vmem:[#allocation2] sm:$0xff] %v534
        %539 = vst [vmem:[#allocation2 + $0x8] sm:$0xff] %v535
        %540 = vst [vmem:[#allocation2 + $0x10] sm:$0xff] %v536
        %541 = vst [vmem:[#allocation2 + $0x18] sm:$0xff] %v537
        // Predicated region
        $region41: #{macbert_forward.11} parent=31 // pred_check
          %p542 = pneg %p275
        $region42: #{macbert_forward.11} parent=31 // pred_check_branch
          %544 = sbr.rel (%p542) target = $region44
        $region43: #{macbert_forward.11} parent=31 // pred_region
          %v545 = vld [vmem:[#allocation2] sm:$0xff]
          %v546 = vld [vmem:[#allocation2 + $0x8] sm:$0xff]
          %v547 = vld [vmem:[#allocation2 + $0x10] sm:$0xff]
          %v548 = vld [vmem:[#allocation2 + $0x18] sm:$0xff]
          %v549 = vld [vmem:[%s271] sm:$0x3]
          %v551 = vlaneseq
          %v552 = vshrl.u32 %v551, 7
          %v553 = vsub.s32 0, %v552
          %v554 = vrot.slane %v549, %v553
          %v555 = vlaneseq
          %v556 = vshrl.u32 %v555, 7
          %v557 = vsub.s32 1, %v556
          %v558 = vrot.slane %v549, %v557
          %v561 = vadd.f32 %v545, %v554
          %v562 = vadd.f32 %v546, %v558
          %v563 = vadd.f32 %v547, %v554
          %v564 = vadd.f32 %v548, %v558
          %v565 = vpack.c.bf16 %v563, %v561
          %v566 = vpack.c.bf16 %v564, %v562
          %v569 = vunpack.c.l.b16 %v565
          %v570 = vunpack.c.l.b16 %v566
          %v571 = vunpack.c.h.b16 %v565
          %v572 = vunpack.c.h.b16 %v566
          %v573 = vpack.c.b16 %v570, %v569
          %v574 = vpack.c.b16 %v572, %v571
          %577 = vst [vmem:[%s253] sm:$0xff] %v573
          %578 = vst [vmem:[%s253 + $0x8] sm:$0xff] %v574
        $region44: #{macbert_forward.11} parent=31 // pred_fallthru
          _
        %s579 = sand.u32 %s128, 1
        %s580 = sand.u32 %s128, 1
        %s581 = smul.addr %s580, 16
        %s582 = scalar_lea.vmem [#allocation5], %s581
        // Predicated region
        $region45: #{macbert_forward.11} parent=31 // pred_check
          %p583 = pneg %p138
        $region46: #{macbert_forward.11} parent=31 // pred_check_branch
          %585 = sbr.rel (%p583) target = $region48
        $region47: #{macbert_forward.11} parent=31 // pred_region
          %s586 = smul.u32 2, %s22
          %s587 = smul.u32 2, %s23
          %s588 = smul.addr %s586, 6
          %s589 = sadd.s32 %s587, %s588
          %s590 = smul.addr %s589, 4
          %s591 = scalar_lea.vmem %s3, %s590
          // Predicated region
          $region49: #{macbert_forward.11} parent=47 // pred_check
            _
          $region50: #{macbert_forward.11} parent=47 // pred_check_branch
            %593 = sbr.rel (0) target = $region52
          $region51: #{macbert_forward.11} parent=47 // pred_region
            // Predicated region
            $region53: #{macbert_forward.11} parent=51 // pred_check
              _
            $region54: #{macbert_forward.11} parent=51 // pred_check_branch
              %595 = sbr.rel (0) target = $region56
            $region55: #{macbert_forward.11} parent=51 // pred_region
              // Predicated region
              $region68: #{macbert_forward.11} parent=55 // pred_check
                _
              $region69: #{macbert_forward.11} parent=55 // pred_check_branch
                %612 = sbr.rel (0) target = $region71
              $region70: #{macbert_forward.11} parent=55 // pred_region
                loop: start=0, step=1, limit=1
                $region72: #{macbert_forward.11} parent=70 // loop_pre_header
                  _
                $region73: #{macbert_forward.11} parent=70 // loop_header
                  %s614 = sphi 0, %s618
                  %p615 = scmp.ge.s32.totalorder %s614, 1
                  %s619 = sphi %s582, %s582
                  %s620 = sphi %s591, %s591
                $region74: #{macbert_forward.11} parent=70 // loop_header_branch
                  %617 = sbr.rel (%p615) target = $region78
                $region75: #{macbert_forward.11} parent=70 // loop_body
                  %v621 = vld [vmem:[%s619] sm:$0xff]
                  %622 = vst [vmem:[%s620] sm:$0xff] %v621
                  %v623 = vld [vmem:[%s619 + $0x8] sm:$0xff]
                  %624 = vst [vmem:[%s620 + $0x18] sm:$0xff] %v623
                $region76: #{macbert_forward.11} parent=70 // loop_footer
                  %s618 = sadd.s32 1, %s614
                $region77: #{macbert_forward.11} parent=70 // loop_footer_branch
                  %613 = sbr.rel target = $region73
                $region78: #{macbert_forward.11} parent=70 // loop_exit
                  _
              $region71: #{macbert_forward.11} parent=55 // pred_fallthru
                _
              // Predicated region
              $region79: #{macbert_forward.11} parent=55 // pred_check
                _
              $region80: #{macbert_forward.11} parent=55 // pred_check_branch
                %626 = sbr.rel target = $region82
              $region81: #{macbert_forward.11} parent=55 // pred_region
                _
              $region82: #{macbert_forward.11} parent=55 // pred_fallthru
                _
            $region56: #{macbert_forward.11} parent=51 // pred_fallthru
              _
            // Predicated region
            $region57: #{macbert_forward.11} parent=51 // pred_check
              _
            $region58: #{macbert_forward.11} parent=51 // pred_check_branch
              %597 = sbr.rel target = $region60
            $region59: #{macbert_forward.11} parent=51 // pred_region
              loop: start=0, step=1, limit=1
              $region61: #{macbert_forward.11} parent=59 // loop_pre_header
                _
              $region62: #{macbert_forward.11} parent=59 // loop_header
                %s600 = sphi 0, %s604
                %p601 = scmp.ge.s32.totalorder %s600, 1
                %s605 = sphi %s582, %s582
                %s606 = sphi %s591, %s591
              $region63: #{macbert_forward.11} parent=59 // loop_header_branch
                %603 = sbr.rel (%p601) target = $region67
              $region64: #{macbert_forward.11} parent=59 // loop_body
                %v607 = vld [vmem:[%s605] sm:$0xff]
                %608 = vst [vmem:[%s606] sm:$0xff] %v607
                %v609 = vld [vmem:[%s605 + $0x8] sm:$0xff]
                %610 = vst [vmem:[%s606 + $0x18] sm:$0xff] %v609
              $region65: #{macbert_forward.11} parent=59 // loop_footer
                %s604 = sadd.s32 1, %s600
              $region66: #{macbert_forward.11} parent=59 // loop_footer_branch
                %599 = sbr.rel target = $region62
              $region67: #{macbert_forward.11} parent=59 // loop_exit
                _
            $region60: #{macbert_forward.11} parent=51 // pred_fallthru
              _
          $region52: #{macbert_forward.11} parent=47 // pred_fallthru
            _
          %627 = vnop
        $region48: #{macbert_forward.11} parent=31 // pred_fallthru
          _
      $region32: #{macbert_forward.11} parent=5 // pred_fallthru
        _
      %p628 = scmp.le.s32.totalorder 2, %s12
      // Predicated region
      $region83: #{macbert_forward.11} parent=5 // pred_check
        %p629 = pneg %p628
      $region84: #{macbert_forward.11} parent=5 // pred_check_branch
        %631 = sbr.rel (%p629) target = $region86
      $region85: #{macbert_forward.11} parent=5 // pred_region
        %s632 = ssub.s32 %s12, 2
        // Predicated region
        $region87: #{macbert_forward.11} parent=85 // pred_check
          %p633 = pneg %p144
        $region88: #{macbert_forward.11} parent=85 // pred_check_branch
          %635 = sbr.rel (%p633) target = $region90
        $region89: #{macbert_forward.11} parent=85 // pred_region
          %s636 = sand.u32 %s129, 1
          %s637 = sand.u32 %s129, 1
          %s638 = smul.addr %s637, 16
          %s639 = scalar_lea.vmem [#allocation5], %s638
        $region90: #{macbert_forward.11} parent=85 // pred_fallthru
          _
      $region86: #{macbert_forward.11} parent=5 // pred_fallthru
        _
    $region6: #{macbert_forward.11} parent=1 // loop_footer
      %s16 = sadd.s32 1, %s12
    $region7: #{macbert_forward.11} parent=1 // loop_footer_branch
      %11 = sbr.rel target = $region3
    $region8: #{macbert_forward.11} parent=1 // loop_exit
      _
    %640 = vsyncpa [#allocation4], 1
    %s641 = scalar_lea.sflag [#allocation4], 1
    %642 = vsyncpa %s641, 1

// kernel: macbert_forward.13
$region0: #{macbert_forward.13}
  #allocation0 [shape = 'u32[]', space=smem, size = 0x4, offset = 0x4, fixed_abs, tag = 'smem constant byte address 0x4 - core index']
  #allocation1 [shape = 'u32[144,128]{1,0:T(1,128)}', space=vmem, size = 0x12000, scoped, tag = 'internal scratch']
  #allocation2 [shape = 'f32[16,256]{1,0:T(8,128)}', space=vmem, size = 0x4000, scoped, tag = 'scratch operand']
  %s0 = inlined_call_operand.vmem [shape: bf16[16,256], index: 0, kind: input, shape index: {}]
  %s1 = inlined_call_operand.vmem [shape: bf16[256,256], index: 1, kind: input, shape index: {}]
  %s2 = inlined_call_operand.vmem [shape: f32[1,256], index: 2, kind: input, shape index: {}]
  %s3 = inlined_call_operand.vmem [shape: bf16[16,256], index: 3, kind: input, shape index: {}]
  %s4 = inlined_call_operand.vmem [shape: f32[1,256], index: 4, kind: input, shape index: {}]
  %s5 = inlined_call_operand.vmem [shape: f32[1,256], index: 5, kind: input, shape index: {}]
  %s6 = inlined_call_operand.vmem [shape: bf16[16,256], index: 6, kind: output, shape index: {}]
  %s7 = sld [smem:[#allocation0]]
  $region42: #{macbert_forward.13} parent=0
    _
  %s9 = ssub.s32 1, %s7
  %s10 = scalar_select 0, %s9, %s7
  // Predicated region
  $region2: #{macbert_forward.13} parent=0 // pred_check
    _
  $region3: #{macbert_forward.13} parent=0 // pred_check_branch
    %12 = sbr.rel (0) target = $region5
  $region4: #{macbert_forward.13} parent=0 // pred_region
    _
  $region5: #{macbert_forward.13} parent=0 // pred_fallthru
    _
  // Predicated region
  $region6: #{macbert_forward.13} parent=0 // pred_check
    _
  $region7: #{macbert_forward.13} parent=0 // pred_check_branch
    %14 = sbr.rel (0) target = $region9
  $region8: #{macbert_forward.13} parent=0 // pred_region
    _
  $region9: #{macbert_forward.13} parent=0 // pred_fallthru
    _
  // Predicated region
  $region10: #{macbert_forward.13} parent=0 // pred_check
    _
  $region11: #{macbert_forward.13} parent=0 // pred_check_branch
    %16 = sbr.rel (0) target = $region13
  $region12: #{macbert_forward.13} parent=0 // pred_region
    _
  $region13: #{macbert_forward.13} parent=0 // pred_fallthru
    _
  // Predicated region
  $region14: #{macbert_forward.13} parent=0 // pred_check
    _
  $region15: #{macbert_forward.13} parent=0 // pred_check_branch
    %18 = sbr.rel (0) target = $region17
  $region16: #{macbert_forward.13} parent=0 // pred_region
    _
  $region17: #{macbert_forward.13} parent=0 // pred_fallthru
    _
  // Predicated region
  $region18: #{macbert_forward.13} parent=0 // pred_check
    _
  $region19: #{macbert_forward.13} parent=0 // pred_check_branch
    %20 = sbr.rel (0) target = $region21
  $region20: #{macbert_forward.13} parent=0 // pred_region
    _
  $region21: #{macbert_forward.13} parent=0 // pred_fallthru
    _
  // Predicated region
  $region22: #{macbert_forward.13} parent=0 // pred_check
    _
  $region23: #{macbert_forward.13} parent=0 // pred_check_branch
    %22 = sbr.rel (0) target = $region25
  $region24: #{macbert_forward.13} parent=0 // pred_region
    _
  $region25: #{macbert_forward.13} parent=0 // pred_fallthru
    _
  %p23 = scmp.eq.s32.totalorder 0, 0
  // Predicated region
  $region26: #{macbert_forward.13} parent=0 // pred_check
    %p24 = pneg %p23
  $region27: #{macbert_forward.13} parent=0 // pred_check_branch
    %26 = sbr.rel (%p24) target = $region29
  $region28: #{macbert_forward.13} parent=0 // pred_region
    %27 = vst [vmem:[#allocation2] sm:$0xff] 0.0
    %28 = vst [vmem:[#allocation2 + $0x8] sm:$0xff] 0.0
    %29 = vst [vmem:[#allocation2 + $0x10] sm:$0xff] 0.0
    %30 = vst [vmem:[#allocation2 + $0x18] sm:$0xff] 0.0
  $region29: #{macbert_forward.13} parent=0 // pred_fallthru
    _
  %v31 = vld [vmem:[#allocation2] sm:$0xff]
  %v32 = vld [vmem:[#allocation2 + $0x8] sm:$0xff]
  %v33 = vld [vmem:[#allocation2 + $0x10] sm:$0xff]
  %v34 = vld [vmem:[#allocation2 + $0x18] sm:$0xff]
  %v35 = vld [vmem:[%s0] sm:$0xff]
  %v36 = vld [vmem:[%s0 + $0x8] sm:$0xff]
  %v37 = vld [vmem:[%s1] sm:$0xff]
  %v38 = vld [vmem:[%s1 + $0x8] sm:$0xff]
  %v39 = vld [vmem:[%s1 + $0x10] sm:$0xff]
  %v40 = vld [vmem:[%s1 + $0x18] sm:$0xff]
  %v41 = vld [vmem:[%s1 + $0x20] sm:$0xff]
  %v42 = vld [vmem:[%s1 + $0x28] sm:$0xff]
  %v43 = vld [vmem:[%s1 + $0x30] sm:$0xff]
  %v44 = vld [vmem:[%s1 + $0x38] sm:$0xff]
  %v45 = vld [vmem:[%s1 + $0x40] sm:$0xff]
  %v46 = vld [vmem:[%s1 + $0x48] sm:$0xff]
  %v47 = vld [vmem:[%s1 + $0x50] sm:$0xff]
  %v48 = vld [vmem:[%s1 + $0x58] sm:$0xff]
  %v49 = vld [vmem:[%s1 + $0x60] sm:$0xff]
  %v50 = vld [vmem:[%s1 + $0x68] sm:$0xff]
  %v51 = vld [vmem:[%s1 + $0x70] sm:$0xff]
  %v52 = vld [vmem:[%s1 + $0x78] sm:$0xff]
  %v53 = vld [vmem:[%s1 + $0x80] sm:$0xff]
  %v54 = vld [vmem:[%s1 + $0x88] sm:$0xff]
  %v55 = vld [vmem:[%s1 + $0x90] sm:$0xff]
  %v56 = vld [vmem:[%s1 + $0x98] sm:$0xff]
  %v57 = vld [vmem:[%s1 + $0xa0] sm:$0xff]
  %v58 = vld [vmem:[%s1 + $0xa8] sm:$0xff]
  %v59 = vld [vmem:[%s1 + $0xb0] sm:$0xff]
  %v60 = vld [vmem:[%s1 + $0xb8] sm:$0xff]
  %v61 = vld [vmem:[%s1 + $0xc0] sm:$0xff]
  %v62 = vld [vmem:[%s1 + $0xc8] sm:$0xff]
  %v63 = vld [vmem:[%s1 + $0xd0] sm:$0xff]
  %v64 = vld [vmem:[%s1 + $0xd8] sm:$0xff]
  %v65 = vld [vmem:[%s1 + $0xe0] sm:$0xff]
  %v66 = vld [vmem:[%s1 + $0xe8] sm:$0xff]
  %v67 = vld [vmem:[%s1 + $0xf0] sm:$0xff]
  %v68 = vld [vmem:[%s1 + $0xf8] sm:$0xff]
  %v71 = vunpack.c.l.b16 %v35
  %v72 = vunpack.c.h.b16 %v35
  %v73 = vunpack.c.l.b16 %v36
  %v74 = vunpack.c.h.b16 %v36
  %v75 = vpack.c.b16 %v73, %v71
  %v76 = vpack.c.b16 %v74, %v72
  %v111 = vunpack.c.l.b16 %v37
  %v112 = vunpack.c.h.b16 %v37
  %v113 = vunpack.c.l.b16 %v38
  %v114 = vunpack.c.h.b16 %v38
  %v115 = vunpack.c.l.b16 %v39
  %v116 = vunpack.c.h.b16 %v39
  %v117 = vunpack.c.l.b16 %v40
  %v118 = vunpack.c.h.b16 %v40
  %v119 = vunpack.c.l.b16 %v41
  %v120 = vunpack.c.h.b16 %v41
  %v121 = vunpack.c.l.b16 %v42
  %v122 = vunpack.c.h.b16 %v42
  %v123 = vunpack.c.l.b16 %v43
  %v124 = vunpack.c.h.b16 %v43
  %v125 = vunpack.c.l.b16 %v44
  %v126 = vunpack.c.h.b16 %v44
  %v127 = vunpack.c.l.b16 %v45
  %v128 = vunpack.c.h.b16 %v45
  %v129 = vunpack.c.l.b16 %v46
  %v130 = vunpack.c.h.b16 %v46
  %v131 = vunpack.c.l.b16 %v47
  %v132 = vunpack.c.h.b16 %v47
  %v133 = vunpack.c.l.b16 %v48
  %v134 = vunpack.c.h.b16 %v48
  %v135 = vunpack.c.l.b16 %v49
  %v136 = vunpack.c.h.b16 %v49
  %v137 = vunpack.c.l.b16 %v50
  %v138 = vunpack.c.h.b16 %v50
  %v139 = vunpack.c.l.b16 %v51
  %v140 = vunpack.c.h.b16 %v51
  %v141 = vunpack.c.l.b16 %v52
  %v142 = vunpack.c.h.b16 %v52
  %v143 = vunpack.c.l.b16 %v53
  %v144 = vunpack.c.h.b16 %v53
  %v145 = vunpack.c.l.b16 %v54
  %v146 = vunpack.c.h.b16 %v54
  %v147 = vunpack.c.l.b16 %v55
  %v148 = vunpack.c.h.b16 %v55
  %v149 = vunpack.c.l.b16 %v56
  %v150 = vunpack.c.h.b16 %v56
  %v151 = vunpack.c.l.b16 %v57
  %v152 = vunpack.c.h.b16 %v57
  %v153 = vunpack.c.l.b16 %v58
  %v154 = vunpack.c.h.b16 %v58
  %v155 = vunpack.c.l.b16 %v59
  %v156 = vunpack.c.h.b16 %v59
  %v157 = vunpack.c.l.b16 %v60
  %v158 = vunpack.c.h.b16 %v60
  %v159 = vunpack.c.l.b16 %v61
  %v160 = vunpack.c.h.b16 %v61
  %v161 = vunpack.c.l.b16 %v62
  %v162 = vunpack.c.h.b16 %v62
  %v163 = vunpack.c.l.b16 %v63
  %v164 = vunpack.c.h.b16 %v63
  %v165 = vunpack.c.l.b16 %v64
  %v166 = vunpack.c.h.b16 %v64
  %v167 = vunpack.c.l.b16 %v65
  %v168 = vunpack.c.h.b16 %v65
  %v169 = vunpack.c.l.b16 %v66
  %v170 = vunpack.c.h.b16 %v66
  %v171 = vunpack.c.l.b16 %v67
  %v172 = vunpack.c.h.b16 %v67
  %v173 = vunpack.c.l.b16 %v68
  %v174 = vunpack.c.h.b16 %v68
  %v175 = vpack.c.b16 %v113, %v111
  %v176 = vpack.c.b16 %v114, %v112
  %v177 = vpack.c.b16 %v117, %v115
  %v178 = vpack.c.b16 %v118, %v116
  %v179 = vpack.c.b16 %v121, %v119
  %v180 = vpack.c.b16 %v122, %v120
  %v181 = vpack.c.b16 %v125, %v123
  %v182 = vpack.c.b16 %v126, %v124
  %v183 = vpack.c.b16 %v129, %v127
  %v184 = vpack.c.b16 %v130, %v128
  %v185 = vpack.c.b16 %v133, %v131
  %v186 = vpack.c.b16 %v134, %v132
  %v187 = vpack.c.b16 %v137, %v135
  %v188 = vpack.c.b16 %v138, %v136
  %v189 = vpack.c.b16 %v141, %v139
  %v190 = vpack.c.b16 %v142, %v140
  %v191 = vpack.c.b16 %v145, %v143
  %v192 = vpack.c.b16 %v146, %v144
  %v193 = vpack.c.b16 %v149, %v147
  %v194 = vpack.c.b16 %v150, %v148
  %v195 = vpack.c.b16 %v153, %v151
  %v196 = vpack.c.b16 %v154, %v152
  %v197 = vpack.c.b16 %v157, %v155
  %v198 = vpack.c.b16 %v158, %v156
  %v199 = vpack.c.b16 %v161, %v159
  %v200 = vpack.c.b16 %v162, %v160
  %v201 = vpack.c.b16 %v165, %v163
  %v202 = vpack.c.b16 %v166, %v164
  %v203 = vpack.c.b16 %v169, %v167
  %v204 = vpack.c.b16 %v170, %v168
  %v205 = vpack.c.b16 %v173, %v171
  %v206 = vpack.c.b16 %v174, %v172
  %239 = vmatprep.subr.bf16.mxu0 %v176
  %240 = vmatpush1.bf16.msra.mxu0 %v175
  %241 = vmatprep.subr.bf16.mxu0 %v178
  %242 = vmatpush1.bf16.msra.mxu0 %v177
  %243 = vmatprep.subr.bf16.mxu0 %v180
  %244 = vmatpush1.bf16.msra.mxu0 %v179
  %245 = vmatprep.subr.bf16.mxu0 %v182
  %246 = vmatpush1.bf16.msra.mxu0 %v181
  %247 = vmatprep.subr.bf16.mxu0 %v184
  %248 = vmatpush1.bf16.msra.mxu0 %v183
  %249 = vmatprep.subr.bf16.mxu0 %v186
  %250 = vmatpush1.bf16.msra.mxu0 %v185
  %251 = vmatprep.subr.bf16.mxu0 %v188
  %252 = vmatpush1.bf16.msra.mxu0 %v187
  %253 = vmatprep.subr.bf16.mxu0 %v190
  %254 = vmatpush1.bf16.msra.mxu0 %v189
  %255 = vmatprep.subr.bf16.mxu0 %v192
  %256 = vmatpush1.bf16.msra.mxu0 %v191
  %257 = vmatprep.subr.bf16.mxu0 %v194
  %258 = vmatpush1.bf16.msra.mxu0 %v193
  %259 = vmatprep.subr.bf16.mxu0 %v196
  %260 = vmatpush1.bf16.msra.mxu0 %v195
  %261 = vmatprep.subr.bf16.mxu0 %v198
  %262 = vmatpush1.bf16.msra.mxu0 %v197
  %263 = vmatprep.subr.bf16.mxu0 %v200
  %264 = vmatpush1.bf16.msra.mxu0 %v199
  %265 = vmatprep.subr.bf16.mxu0 %v202
  %266 = vmatpush1.bf16.msra.mxu0 %v201
  %267 = vmatprep.subr.bf16.mxu0 %v204
  %268 = vmatpush1.bf16.msra.mxu0 %v203
  %269 = vmatprep.subr.bf16.mxu0 %v206
  %270 = vmatpush1.bf16.msra.mxu0 %v205
  %271 = vmatprep.mubr.bf16.mxu0 %v76
  %272 = vmatmul.mubr.bf16.gmra.mrb[0].mxu0 %v75
  %v273 = vpop.f32.mrb[0].mxu0
  %v274 = vadd.f32 0.0, %v273
  %v275 = vpop.f32.mrb[0].mxu0
  %v276 = vadd.f32 0.0, %v275
  %v277 = vpop.f32.mrb[0].mxu0
  %v278 = vadd.f32 0.0, %v277
  %v279 = vpop.f32.mrb[0].mxu0
  %v280 = vadd.f32 0.0, %v279
  %281 = vdwg.mxu0
  %v282 = vadd.f32 %v31, %v274
  %v283 = vadd.f32 %v32, %v276
  %v284 = vadd.f32 %v33, %v278
  %v285 = vadd.f32 %v34, %v280
  %286 = vst [vmem:[#allocation2] sm:$0xff] %v282
  %287 = vst [vmem:[#allocation2 + $0x8] sm:$0xff] %v283
  %288 = vst [vmem:[#allocation2 + $0x10] sm:$0xff] %v284
  %289 = vst [vmem:[#allocation2 + $0x18] sm:$0xff] %v285
  // Predicated region
  $region30: #{macbert_forward.13} parent=0 // pred_check
    %p290 = pneg %p23
  $region31: #{macbert_forward.13} parent=0 // pred_check_branch
    %292 = sbr.rel (%p290) target = $region33
  $region32: #{macbert_forward.13} parent=0 // pred_region
    %v293 = vld [vmem:[#allocation2] sm:$0xff]
    %v294 = vld [vmem:[#allocation2 + $0x8] sm:$0xff]
    %v295 = vld [vmem:[#allocation2 + $0x10] sm:$0xff]
    %v296 = vld [vmem:[#allocation2 + $0x18] sm:$0xff]
    %v297 = vld [vmem:[%s2] sm:$0x3]
    %v299 = vlaneseq
    %v300 = vshrl.u32 %v299, 7
    %v301 = vsub.s32 0, %v300
    %v302 = vrot.slane %v297, %v301
    %v303 = vlaneseq
    %v304 = vshrl.u32 %v303, 7
    %v305 = vsub.s32 1, %v304
    %v306 = vrot.slane %v297, %v305
    %v309 = vadd.f32 %v293, %v302
    %v310 = vadd.f32 %v294, %v306
    %v311 = vadd.f32 %v295, %v302
    %v312 = vadd.f32 %v296, %v306
    %v313 = vld [vmem:[%s3] sm:$0xff]
    %v314 = vld [vmem:[%s3 + $0x8] sm:$0xff]
    %v315 = vunpack.c.l.bf16 %v313
    %v316 = vunpack.c.h.bf16 %v313
    %v317 = vunpack.c.l.bf16 %v314
    %v318 = vunpack.c.h.bf16 %v314
    %v319 = vadd.f32 %v309, %v315
    %v320 = vadd.f32 %v310, %v316
    %v321 = vadd.f32 %v311, %v317
    %v322 = vadd.f32 %v312, %v318
    %v323 = vadd.f32 %v319, %v320
    %324 = vadd.xlane.f32.xlu0 %v323
    %v325 = vpop.xlane.xlu0 %324
    %v326 = vadd.f32 %v321, %v322
    %327 = vadd.xlane.f32.xlu0 %v326
    %v328 = vpop.xlane.xlu0 %327
    %v329 = vrcp.pop 256.0
    %v330 = vmul.f32 %v325, %v329
    %v331 = vmul.f32 %v328, %v329
    %v332 = vsub.f32 %v319, %v330
    %v333 = vsub.f32 %v320, %v330
    %v334 = vsub.f32 %v321, %v331
    %v335 = vsub.f32 %v322, %v331
    %v336 = vmul.f32 %v332, %v332
    %v337 = vmul.f32 %v333, %v333
    %v338 = vmul.f32 %v334, %v334
    %v339 = vmul.f32 %v335, %v335
    %v340 = vadd.f32 %v336, %v337
    %341 = vadd.xlane.f32.xlu0 %v340
    %v342 = vpop.xlane.xlu0 %341
    %v343 = vadd.f32 %v338, %v339
    %344 = vadd.xlane.f32.xlu0 %v343
    %v345 = vpop.xlane.xlu0 %344
    %v346 = vmul.f32 %v342, %v329
    %v347 = vmul.f32 %v345, %v329
    %v348 = vadd.f32 %v346, 1e-12
    %v349 = vadd.f32 %v347, 1e-12
    %v350 = vrsqrt.pop %v348
    %v351 = vrsqrt.pop %v349
    %v352 = vmul.f32 %v332, %v350
    %v353 = vmul.f32 %v333, %v350
    %v354 = vmul.f32 %v334, %v351
    %v355 = vmul.f32 %v335, %v351
    %v356 = vld [vmem:[%s4] sm:$0x3]
    %v358 = vlaneseq
    %v359 = vshrl.u32 %v358, 7
    %v360 = vsub.s32 0, %v359
    %v361 = vrot.slane %v356, %v360
    %v362 = vlaneseq
    %v363 = vshrl.u32 %v362, 7
    %v364 = vsub.s32 1, %v363
    %v365 = vrot.slane %v356, %v364
    %v368 = vmul.f32 %v352, %v361
    %v369 = vmul.f32 %v353, %v365
    %v370 = vmul.f32 %v354, %v361
    %v371 = vmul.f32 %v355, %v365
    %v372 = vld [vmem:[%s5] sm:$0x3]
    %v374 = vlaneseq
    %v375 = vshrl.u32 %v374, 7
    %v376 = vsub.s32 0, %v375
    %v377 = vrot.slane %v372, %v376
    %v378 = vlaneseq
    %v379 = vshrl.u32 %v378, 7
    %v380 = vsub.s32 1, %v379
    %v381 = vrot.slane %v372, %v380
    %v384 = vadd.f32 %v368, %v377
    %v385 = vadd.f32 %v369, %v381
    %v386 = vadd.f32 %v370, %v377
    %v387 = vadd.f32 %v371, %v381
    %v388 = vpack.c.bf16 %v386, %v384
    %v389 = vpack.c.bf16 %v387, %v385
    %v392 = vunpack.c.l.b16 %v388
    %v393 = vunpack.c.l.b16 %v389
    %v394 = vunpack.c.h.b16 %v388
    %v395 = vunpack.c.h.b16 %v389
    %v396 = vpack.c.b16 %v393, %v392
    %v397 = vpack.c.b16 %v395, %v394
    %400 = vst [vmem:[%s6] sm:$0xff] %v396
    %401 = vst [vmem:[%s6 + $0x8] sm:$0xff] %v397
  $region33: #{macbert_forward.13} parent=0 // pred_fallthru
    _
  // Predicated region
  $region34: #{macbert_forward.13} parent=0 // pred_check
    _
  $region35: #{macbert_forward.13} parent=0 // pred_check_branch
    %403 = sbr.rel (0) target = $region37
  $region36: #{macbert_forward.13} parent=0 // pred_region
    _
  $region37: #{macbert_forward.13} parent=0 // pred_fallthru
    _
  // Predicated region
  $region38: #{macbert_forward.13} parent=0 // pred_check
    _
  $region39: #{macbert_forward.13} parent=0 // pred_check_branch
    %405 = sbr.rel (0) target = $region41
  $region40: #{macbert_forward.13} parent=0 // pred_region
    _
  $region41: #{macbert_forward.13} parent=0 // pred_fallthru
    _

// kernel: squeeze.3
$region0: #{squeeze.3}
  %s0 = inlined_call_operand.vmem [shape: s32[16], index: 0, kind: input, shape index: {}]
  %s1 = inlined_call_operand.hbm [shape: s32[2,8], index: 1, kind: output, shape index: {}]
  $region1: #{squeeze.3} parent=0
    #allocation0 [shape = 'u8[1024]{0}', space=vmem, size = 0x400, scoped, tag = 'operand span for operand 1']
    #allocation1 [shape = 's32[1]{0}', space=sflag, size = 0x4, scoped, tag = 'scoped memory for squeeze.3']
    #allocation2 [shape = 'u8[4096]{0}', space=vmem, size = 0x1000, scoped, tag = 'scoped mem for output reshape']
    #allocation3 [shape = 'u8[4096]{0}', space=vmem, size = 0x1000, scoped, tag = 'scoped mem for input reshape']
    %2 = vsyncpa [#allocation1], 0
    %s4 = sshllo.u32 0, 1
    %v5 = vld [vmem:[%s0] sm:%s4]
    %6 = vst [vmem:[#allocation3] sm:%s4] %v5
    %v7 = vld [vmem:[#allocation3] sm:$0x1]
    %vm8 = vcmask 64512
    %9 = vst.msk [vmem:[#allocation2] sm:$0x1] %vm8, %v7
    %v10 = vld [vmem:[#allocation3] sm:$0x1]
    %11 = vrot.lane.b32.xlu0 %v10, 120
    %v12 = vpop.permute.xlu0 %11
    %vm13 = vcmask 64512
    %s14 = scalar_lea.vmem [#allocation2], 1
    %15 = vst.msk [vmem:[%s14] sm:$0x1] %vm13, %v12
    %s17 = sshllo.u32 0, 2
    %v19 = vld [vmem:[#allocation2] sm:%s17]
    %s20 = sshllo.u32 0, 2
    %21 = vst [vmem:[#allocation0] sm:%s20] %v19
    %s23 = ssub.s32 32, 32
    %24 = vsyncadd [#allocation1], %s23
    %s26 = sshll.u32 [#allocation0], 4
    %s27 = int_to_ptr.vmem [resolvable:$true] %s26
    %29 = dma.vmem_to_hbm [thread:$0]  %s27, 32, %s1, [#allocation1]
    %30 = dma.done [#allocation1], 32
    %31 = vsyncpa [#allocation1], 1

// kernel: macbert_forward.15
$region0: #{macbert_forward.15}
  #allocation0 [shape = 'u32[]', space=smem, size = 0x4, offset = 0x4, fixed_abs, tag = 'smem constant byte address 0x4 - core index']
  #allocation1 [shape = 'u32[144,128]{1,0:T(1,128)}', space=vmem, size = 0x12000, scoped, tag = 'internal scratch']
  #allocation2 [shape = 'f32[16,256]{1,0:T(8,128)}', space=vmem, size = 0x4000, scoped, tag = 'scratch operand']
  %s0 = inlined_call_operand.vmem [shape: bf16[16,256], index: 0, kind: input, shape index: {}]
  %s1 = inlined_call_operand.vmem [shape: bf16[256,768], index: 1, kind: input, shape index: {}]
  %s2 = inlined_call_operand.vmem [shape: f32[1,768], index: 2, kind: input, shape index: {}]
  %s3 = inlined_call_operand.vmem [shape: bf16[16,768], index: 3, kind: output, shape index: {}]
  %s4 = sld [smem:[#allocation0]]
  $region125: #{macbert_forward.15} parent=0
    _
  %s6 = ssub.s32 1, %s4
  %s7 = scalar_select 0, %s6, %s4
  $region1: #{macbert_forward.15} parent=0
    #allocation3 [shape = 'u8[262144]{0}', space=vmem, size = 0x40000, scoped, tag = 'input window, operand 1']
    #allocation4 [shape = 'u8[16384]{0}', space=vmem, size = 0x4000, scoped, tag = 'output window, operand 0']
    loop: start=0, step=1, limit=5
    $region2: #{macbert_forward.15} parent=1 // loop_pre_header
      _
    $region3: #{macbert_forward.15} parent=1 // loop_header
      %s9 = sphi 0, %s13
      %p10 = scmp.ge.s32.totalorder %s9, 5
      %s16 = sphi 0, %s35
      %s17 = sphi 0, %s31
      %s18 = sphi 0, %s27
      %s19 = sphi 0, %s16
      %s20 = sphi 0, %s17
      %s21 = sphi 0, %s18
      %s22 = sphi 0, %s19
      %s23 = sphi 0, %s20
      %s24 = sphi 0, %s21
      %s40 = sphi 0, %s42
      %s43 = sphi 0, %s40
      %s44 = sphi 0, %s43
      %s60 = sphi 0, %s44
      %s68 = sphi 0, %s70
      %s71 = sphi 0, %s68
      %s72 = sphi 0, %s71
      %s88 = sphi 0, %s72
      %s94 = sphi 0, %s96
      %s97 = sphi 0, %s94
      %s98 = sphi 0, %s97
      %s114 = sphi 0, %s98
      %s122 = sphi 0, %s124
      %s125 = sphi 0, %s122
      %s126 = sphi 0, %s125
      %s142 = sphi 0, %s126
    $region4: #{macbert_forward.15} parent=1 // loop_header_branch
      %12 = sbr.rel (%p10) target = $region8
    $region5: #{macbert_forward.15} parent=1 // loop_body
      %s14 = ssub.s32 %s9, 1
      %s15 = ssub.s32 %s9, 2
      %s25 = sadd.s32 1, %s18
      %p26 = scmp.ge.s32.totalorder %s25, 1
      %s27 = scalar_select %p26, 0, %s25
      %s28 = sadd.s32 1, %s17
      %s29 = scalar_select %p26, %s28, %s17
      %p30 = scmp.ge.s32.totalorder %s29, 3
      %s31 = scalar_select %p30, 0, %s29
      %s32 = sadd.s32 1, %s16
      %s33 = scalar_select %p30, %s32, %s16
      %p34 = scmp.ge.s32.totalorder %s33, 1
      %s35 = scalar_select %p34, 0, %s33
      %s36 = ssub.s32 %s16, %s35
      %s37 = ssub.s32 %s18, %s27
      %s38 = sor.u32 %s36, %s37
      %p39 = scmp.eq.s32.totalorder %s38, 0
      %s41 = sadd.s32 %s40, 1
      %s42 = scalar_select %p39, %s40, %s41
      %p45 = pneg %p39
      %p46 = scmp.eq.s32.totalorder %s9, 2
      %p47 = por %p45, %p46
      %p48 = scmp.ne.s32.totalorder %s40, %s43
      %p49 = scmp.eq.s32.totalorder %s9, 0
      %p50 = por %p48, %p49
      %p51 = scmp.ne.s32.totalorder %s40, %s43
      %p52 = scmp.eq.s32.totalorder %s14, 2
      %p53 = por %p51, %p52
      %p54 = scmp.ne.s32.totalorder %s43, %s44
      %p55 = scmp.eq.s32.totalorder %s14, 0
      %p56 = por %p54, %p55
      %p57 = scmp.ne.s32.totalorder %s43, %s44
      %p58 = scmp.eq.s32.totalorder %s15, 2
      %p59 = por %p57, %p58
      %p61 = scmp.ne.s32.totalorder %s44, %s60
      %p62 = scmp.eq.s32.totalorder %s15, 0
      %p63 = por %p61, %p62
      %s64 = ssub.s32 %s18, %s27
      %s65 = ssub.s32 %s17, %s31
      %s66 = sor.u32 %s64, %s65
      %p67 = scmp.eq.s32.totalorder %s66, 0
      %s69 = sadd.s32 %s68, 1
      %s70 = scalar_select %p67, %s68, %s69
      %p73 = pneg %p67
      %p74 = scmp.eq.s32.totalorder %s9, 2
      %p75 = por %p73, %p74
      %p76 = scmp.ne.s32.totalorder %s68, %s71
      %p77 = scmp.eq.s32.totalorder %s9, 0
      %p78 = por %p76, %p77
      %p79 = scmp.ne.s32.totalorder %s68, %s71
      %p80 = scmp.eq.s32.totalorder %s14, 2
      %p81 = por %p79, %p80
      %p82 = scmp.ne.s32.totalorder %s71, %s72
      %p83 = scmp.eq.s32.totalorder %s14, 0
      %p84 = por %p82, %p83
      %p85 = scmp.ne.s32.totalorder %s71, %s72
      %p86 = scmp.eq.s32.totalorder %s15, 2
      %p87 = por %p85, %p86
      %p89 = scmp.ne.s32.totalorder %s72, %s88
      %p90 = scmp.eq.s32.totalorder %s15, 0
      %p91 = por %p89, %p90
      %s92 = ssub.s32 %s17, %s31
      %p93 = scmp.eq.s32.totalorder %s92, 0
      %s95 = sadd.s32 %s94, 1
      %s96 = scalar_select %p93, %s94, %s95
      %p99 = pneg %p93
      %p100 = scmp.eq.s32.totalorder %s9, 2
      %p101 = por %p99, %p100
      %p102 = scmp.ne.s32.totalorder %s94, %s97
      %p103 = scmp.eq.s32.totalorder %s9, 0
      %p104 = por %p102, %p103
      %p105 = scmp.ne.s32.totalorder %s94, %s97
      %p106 = scmp.eq.s32.totalorder %s14, 2
      %p107 = por %p105, %p106
      %p108 = scmp.ne.s32.totalorder %s97, %s98
      %p109 = scmp.eq.s32.totalorder %s14, 0
      %p110 = por %p108, %p109
      %p111 = scmp.ne.s32.totalorder %s97, %s98
      %p112 = scmp.eq.s32.totalorder %s15, 2
      %p113 = por %p111, %p112
      %p115 = scmp.ne.s32.totalorder %s98, %s114
      %p116 = scmp.eq.s32.totalorder %s15, 0
      %p117 = por %p115, %p116
      %s118 = ssub.s32 %s16, %s35
      %s119 = ssub.s32 %s17, %s31
      %s120 = sor.u32 %s118, %s119
      %p121 = scmp.eq.s32.totalorder %s120, 0
      %s123 = sadd.s32 %s122, 1
      %s124 = scalar_select %p121, %s122, %s123
      %p127 = pneg %p121
      %p128 = scmp.eq.s32.totalorder %s9, 2
      %p129 = por %p127, %p128
      %p130 = scmp.ne.s32.totalorder %s122, %s125
      %p131 = scmp.eq.s32.totalorder %s9, 0
      %p132 = por %p130, %p131
      %p133 = scmp.ne.s32.totalorder %s122, %s125
      %p134 = scmp.eq.s32.totalorder %s14, 2
      %p135 = por %p133, %p134
      %p136 = scmp.ne.s32.totalorder %s125, %s126
      %p137 = scmp.eq.s32.totalorder %s14, 0
      %p138 = por %p136, %p137
      %p139 = scmp.ne.s32.totalorder %s125, %s126
      %p140 = scmp.eq.s32.totalorder %s15, 2
      %p141 = por %p139, %p140
      %p143 = scmp.ne.s32.totalorder %s126, %s142
      %p144 = scmp.eq.s32.totalorder %s15, 0
      %p145 = por %p143, %p144
      %p146 = scmp.le.s32.totalorder 1, %s9
      %p147 = scmp.lt.s32.totalorder %s9, 4
      %p148 = pnand %p146, %p147
      %p149 = pneg %p148
      // Predicated region
      $region9: #{macbert_forward.15} parent=5 // pred_check
        _
      $region10: #{macbert_forward.15} parent=5 // pred_check_branch
        %151 = sbr.rel (%p148) target = $region12
      $region11: #{macbert_forward.15} parent=5 // pred_region
        %s152 = ssub.s32 %s9, 1
        // Predicated region
        $region13: #{macbert_forward.15} parent=11 // pred_check
          %p153 = pneg %p56
        $region14: #{macbert_forward.15} parent=11 // pred_check_branch
          %155 = sbr.rel (%p153) target = $region16
        $region15: #{macbert_forward.15} parent=11 // pred_region
          %s156 = smul.u32 2, %s19
          %s157 = smul.u32 2, %s21
          %p158 = scmp.lt.s32.totalorder %s156, 1
          %s159 = scalar_select %p158, %s156, 1
          %p160 = scmp.lt.s32.totalorder %s157, 1
          %s161 = scalar_select %p160, %s157, 1
          %s162 = smul.addr %s159, 2
          %s163 = sadd.s32 %s161, %s162
          %s164 = smul.addr %s163, 4
          %s165 = scalar_lea.vmem %s0, %s164
          %s166 = smul.u32 2, %s19
          %s167 = smul.u32 2, %s21
        $region16: #{macbert_forward.15} parent=11 // pred_fallthru
          _
      $region12: #{macbert_forward.15} parent=5 // pred_fallthru
        _
      %p168 = scmp.lt.s32.totalorder %s9, 3
      // Predicated region
      $region17: #{macbert_forward.15} parent=5 // pred_check
        %p169 = pneg %p168
      $region18: #{macbert_forward.15} parent=5 // pred_check_branch
        %171 = sbr.rel (%p169) target = $region20
      $region19: #{macbert_forward.15} parent=5 // pred_region
        // Predicated region
        $region21: #{macbert_forward.15} parent=19 // pred_check
          %p172 = pneg %p78
        $region22: #{macbert_forward.15} parent=19 // pred_check_branch
          %174 = sbr.rel (%p172) target = $region24
        $region23: #{macbert_forward.15} parent=19 // pred_region
          %s175 = sand.u32 %s68, 1
          %s176 = sand.u32 %s68, 1
          %s177 = smul.addr %s176, 256
          %s178 = scalar_lea.vmem [#allocation3], %s177
          %s179 = smul.u32 32, %s18
          %s180 = smul.u32 2, %s17
          %s181 = smul.addr %s179, 6
          %s182 = sadd.s32 %s180, %s181
          %s183 = smul.addr %s182, 4
          %s184 = scalar_lea.vmem %s1, %s183
          // Predicated region
          $region25: #{macbert_forward.15} parent=23 // pred_check
            _
          $region26: #{macbert_forward.15} parent=23 // pred_check_branch
            %186 = sbr.rel (0) target = $region28
          $region27: #{macbert_forward.15} parent=23 // pred_region
            // Predicated region
            $region29: #{macbert_forward.15} parent=27 // pred_check
              _
            $region30: #{macbert_forward.15} parent=27 // pred_check_branch
              %188 = sbr.rel (0) target = $region32
            $region31: #{macbert_forward.15} parent=27 // pred_region
              // Predicated region
              $region44: #{macbert_forward.15} parent=31 // pred_check
                _
              $region45: #{macbert_forward.15} parent=31 // pred_check_branch
                %265 = sbr.rel (0) target = $region47
              $region46: #{macbert_forward.15} parent=31 // pred_region
                loop: start=0, step=1, limit=1
                $region48: #{macbert_forward.15} parent=46 // loop_pre_header
                  _
                $region49: #{macbert_forward.15} parent=46 // loop_header
                  %s267 = sphi 0, %s271
                  %p268 = scmp.ge.s32.totalorder %s267, 1
                  %s272 = sphi %s184, %s184
                  %s273 = sphi %s178, %s178
                $region50: #{macbert_forward.15} parent=46 // loop_header_branch
                  %270 = sbr.rel (%p268) target = $region54
                $region51: #{macbert_forward.15} parent=46 // loop_body
                  %v274 = vld [vmem:[%s272] sm:$0xff]
                  %275 = vst [vmem:[%s273] sm:$0xff] %v274
                  %v276 = vld [vmem:[%s272 + $0x18] sm:$0xff]
                  %277 = vst [vmem:[%s273 + $0x8] sm:$0xff] %v276
                  %v278 = vld [vmem:[%s272 + $0x30] sm:$0xff]
                  %279 = vst [vmem:[%s273 + $0x10] sm:$0xff] %v278
                  %v280 = vld [vmem:[%s272 + $0x48] sm:$0xff]
                  %281 = vst [vmem:[%s273 + $0x18] sm:$0xff] %v280
                  %v282 = vld [vmem:[%s272 + $0x60] sm:$0xff]
                  %283 = vst [vmem:[%s273 + $0x20] sm:$0xff] %v282
                  %v284 = vld [vmem:[%s272 + $0x78] sm:$0xff]
                  %285 = vst [vmem:[%s273 + $0x28] sm:$0xff] %v284
                  %v286 = vld [vmem:[%s272 + $0x90] sm:$0xff]
                  %287 = vst [vmem:[%s273 + $0x30] sm:$0xff] %v286
                  %v288 = vld [vmem:[%s272 + $0xa8] sm:$0xff]
                  %289 = vst [vmem:[%s273 + $0x38] sm:$0xff] %v288
                  %v290 = vld [vmem:[%s272 + $0xc0] sm:$0xff]
                  %291 = vst [vmem:[%s273 + $0x40] sm:$0xff] %v290
                  %v292 = vld [vmem:[%s272 + $0xd8] sm:$0xff]
                  %293 = vst [vmem:[%s273 + $0x48] sm:$0xff] %v292
                  %v294 = vld [vmem:[%s272 + $0xf0] sm:$0xff]
                  %295 = vst [vmem:[%s273 + $0x50] sm:$0xff] %v294
                  %v296 = vld [vmem:[%s272 + $0x108] sm:$0xff]
                  %297 = vst [vmem:[%s273 + $0x58] sm:$0xff] %v296
                  %v298 = vld [vmem:[%s272 + $0x120] sm:$0xff]
                  %299 = vst [vmem:[%s273 + $0x60] sm:$0xff] %v298
                  %v300 = vld [vmem:[%s272 + $0x138] sm:$0xff]
                  %301 = vst [vmem:[%s273 + $0x68] sm:$0xff] %v300
                  %v302 = vld [vmem:[%s272 + $0x150] sm:$0xff]
                  %303 = vst [vmem:[%s273 + $0x70] sm:$0xff] %v302
                  %v304 = vld [vmem:[%s272 + $0x168] sm:$0xff]
                  %305 = vst [vmem:[%s273 + $0x78] sm:$0xff] %v304
                  %v306 = vld [vmem:[%s272 + $0x180] sm:$0xff]
                  %307 = vst [vmem:[%s273 + $0x80] sm:$0xff] %v306
                  %v308 = vld [vmem:[%s272 + $0x198] sm:$0xff]
                  %309 = vst [vmem:[%s273 + $0x88] sm:$0xff] %v308
                  %v310 = vld [vmem:[%s272 + $0x1b0] sm:$0xff]
                  %311 = vst [vmem:[%s273 + $0x90] sm:$0xff] %v310
                  %v312 = vld [vmem:[%s272 + $0x1c8] sm:$0xff]
                  %313 = vst [vmem:[%s273 + $0x98] sm:$0xff] %v312
                  %v314 = vld [vmem:[%s272 + $0x1e0] sm:$0xff]
                  %315 = vst [vmem:[%s273 + $0xa0] sm:$0xff] %v314
                  %v316 = vld [vmem:[%s272 + $0x1f8] sm:$0xff]
                  %317 = vst [vmem:[%s273 + $0xa8] sm:$0xff] %v316
                  %v318 = vld [vmem:[%s272 + $0x210] sm:$0xff]
                  %319 = vst [vmem:[%s273 + $0xb0] sm:$0xff] %v318
                  %v320 = vld [vmem:[%s272 + $0x228] sm:$0xff]
                  %321 = vst [vmem:[%s273 + $0xb8] sm:$0xff] %v320
                  %v322 = vld [vmem:[%s272 + $0x240] sm:$0xff]
                  %323 = vst [vmem:[%s273 + $0xc0] sm:$0xff] %v322
                  %v324 = vld [vmem:[%s272 + $0x258] sm:$0xff]
                  %325 = vst [vmem:[%s273 + $0xc8] sm:$0xff] %v324
                  %v326 = vld [vmem:[%s272 + $0x270] sm:$0xff]
                  %327 = vst [vmem:[%s273 + $0xd0] sm:$0xff] %v326
                  %v328 = vld [vmem:[%s272 + $0x288] sm:$0xff]
                  %329 = vst [vmem:[%s273 + $0xd8] sm:$0xff] %v328
                  %v330 = vld [vmem:[%s272 + $0x2a0] sm:$0xff]
                  %331 = vst [vmem:[%s273 + $0xe0] sm:$0xff] %v330
                  %v332 = vld [vmem:[%s272 + $0x2b8] sm:$0xff]
                  %333 = vst [vmem:[%s273 + $0xe8] sm:$0xff] %v332
                  %v334 = vld [vmem:[%s272 + $0x2d0] sm:$0xff]
                  %335 = vst [vmem:[%s273 + $0xf0] sm:$0xff] %v334
                  %v336 = vld [vmem:[%s272 + $0x2e8] sm:$0xff]
                  %337 = vst [vmem:[%s273 + $0xf8] sm:$0xff] %v336
                $region52: #{macbert_forward.15} parent=46 // loop_footer
                  %s271 = sadd.s32 1, %s267
                $region53: #{macbert_forward.15} parent=46 // loop_footer_branch
                  %266 = sbr.rel target = $region49
                $region54: #{macbert_forward.15} parent=46 // loop_exit
                  _
              $region47: #{macbert_forward.15} parent=31 // pred_fallthru
                _
              // Predicated region
              $region55: #{macbert_forward.15} parent=31 // pred_check
                _
              $region56: #{macbert_forward.15} parent=31 // pred_check_branch
                %339 = sbr.rel target = $region58
              $region57: #{macbert_forward.15} parent=31 // pred_region
                _
              $region58: #{macbert_forward.15} parent=31 // pred_fallthru
                _
            $region32: #{macbert_forward.15} parent=27 // pred_fallthru
              _
            // Predicated region
            $region33: #{macbert_forward.15} parent=27 // pred_check
              _
            $region34: #{macbert_forward.15} parent=27 // pred_check_branch
              %190 = sbr.rel target = $region36
            $region35: #{macbert_forward.15} parent=27 // pred_region
              loop: start=0, step=1, limit=1
              $region37: #{macbert_forward.15} parent=35 // loop_pre_header
                _
              $region38: #{macbert_forward.15} parent=35 // loop_header
                %s193 = sphi 0, %s197
                %p194 = scmp.ge.s32.totalorder %s193, 1
                %s198 = sphi %s184, %s184
                %s199 = sphi %s178, %s178
              $region39: #{macbert_forward.15} parent=35 // loop_header_branch
                %196 = sbr.rel (%p194) target = $region43
              $region40: #{macbert_forward.15} parent=35 // loop_body
                %v200 = vld [vmem:[%s198] sm:$0xff]
                %201 = vst [vmem:[%s199] sm:$0xff] %v200
                %v202 = vld [vmem:[%s198 + $0x18] sm:$0xff]
                %203 = vst [vmem:[%s199 + $0x8] sm:$0xff] %v202
                %v204 = vld [vmem:[%s198 + $0x30] sm:$0xff]
                %205 = vst [vmem:[%s199 + $0x10] sm:$0xff] %v204
                %v206 = vld [vmem:[%s198 + $0x48] sm:$0xff]
                %207 = vst [vmem:[%s199 + $0x18] sm:$0xff] %v206
                %v208 = vld [vmem:[%s198 + $0x60] sm:$0xff]
                %209 = vst [vmem:[%s199 + $0x20] sm:$0xff] %v208
                %v210 = vld [vmem:[%s198 + $0x78] sm:$0xff]
                %211 = vst [vmem:[%s199 + $0x28] sm:$0xff] %v210
                %v212 = vld [vmem:[%s198 + $0x90] sm:$0xff]
                %213 = vst [vmem:[%s199 + $0x30] sm:$0xff] %v212
                %v214 = vld [vmem:[%s198 + $0xa8] sm:$0xff]
                %215 = vst [vmem:[%s199 + $0x38] sm:$0xff] %v214
                %v216 = vld [vmem:[%s198 + $0xc0] sm:$0xff]
                %217 = vst [vmem:[%s199 + $0x40] sm:$0xff] %v216
                %v218 = vld [vmem:[%s198 + $0xd8] sm:$0xff]
                %219 = vst [vmem:[%s199 + $0x48] sm:$0xff] %v218
                %v220 = vld [vmem:[%s198 + $0xf0] sm:$0xff]
                %221 = vst [vmem:[%s199 + $0x50] sm:$0xff] %v220
                %v222 = vld [vmem:[%s198 + $0x108] sm:$0xff]
                %223 = vst [vmem:[%s199 + $0x58] sm:$0xff] %v222
                %v224 = vld [vmem:[%s198 + $0x120] sm:$0xff]
                %225 = vst [vmem:[%s199 + $0x60] sm:$0xff] %v224
                %v226 = vld [vmem:[%s198 + $0x138] sm:$0xff]
                %227 = vst [vmem:[%s199 + $0x68] sm:$0xff] %v226
                %v228 = vld [vmem:[%s198 + $0x150] sm:$0xff]
                %229 = vst [vmem:[%s199 + $0x70] sm:$0xff] %v228
                %v230 = vld [vmem:[%s198 + $0x168] sm:$0xff]
                %231 = vst [vmem:[%s199 + $0x78] sm:$0xff] %v230
                %v232 = vld [vmem:[%s198 + $0x180] sm:$0xff]
                %233 = vst [vmem:[%s199 + $0x80] sm:$0xff] %v232
                %v234 = vld [vmem:[%s198 + $0x198] sm:$0xff]
                %235 = vst [vmem:[%s199 + $0x88] sm:$0xff] %v234
                %v236 = vld [vmem:[%s198 + $0x1b0] sm:$0xff]
                %237 = vst [vmem:[%s199 + $0x90] sm:$0xff] %v236
                %v238 = vld [vmem:[%s198 + $0x1c8] sm:$0xff]
                %239 = vst [vmem:[%s199 + $0x98] sm:$0xff] %v238
                %v240 = vld [vmem:[%s198 + $0x1e0] sm:$0xff]
                %241 = vst [vmem:[%s199 + $0xa0] sm:$0xff] %v240
                %v242 = vld [vmem:[%s198 + $0x1f8] sm:$0xff]
                %243 = vst [vmem:[%s199 + $0xa8] sm:$0xff] %v242
                %v244 = vld [vmem:[%s198 + $0x210] sm:$0xff]
                %245 = vst [vmem:[%s199 + $0xb0] sm:$0xff] %v244
                %v246 = vld [vmem:[%s198 + $0x228] sm:$0xff]
                %247 = vst [vmem:[%s199 + $0xb8] sm:$0xff] %v246
                %v248 = vld [vmem:[%s198 + $0x240] sm:$0xff]
                %249 = vst [vmem:[%s199 + $0xc0] sm:$0xff] %v248
                %v250 = vld [vmem:[%s198 + $0x258] sm:$0xff]
                %251 = vst [vmem:[%s199 + $0xc8] sm:$0xff] %v250
                %v252 = vld [vmem:[%s198 + $0x270] sm:$0xff]
                %253 = vst [vmem:[%s199 + $0xd0] sm:$0xff] %v252
                %v254 = vld [vmem:[%s198 + $0x288] sm:$0xff]
                %255 = vst [vmem:[%s199 + $0xd8] sm:$0xff] %v254
                %v256 = vld [vmem:[%s198 + $0x2a0] sm:$0xff]
                %257 = vst [vmem:[%s199 + $0xe0] sm:$0xff] %v256
                %v258 = vld [vmem:[%s198 + $0x2b8] sm:$0xff]
                %259 = vst [vmem:[%s199 + $0xe8] sm:$0xff] %v258
                %v260 = vld [vmem:[%s198 + $0x2d0] sm:$0xff]
                %261 = vst [vmem:[%s199 + $0xf0] sm:$0xff] %v260
                %v262 = vld [vmem:[%s198 + $0x2e8] sm:$0xff]
                %263 = vst [vmem:[%s199 + $0xf8] sm:$0xff] %v262
              $region41: #{macbert_forward.15} parent=35 // loop_footer
                %s197 = sadd.s32 1, %s193
              $region42: #{macbert_forward.15} parent=35 // loop_footer_branch
                %192 = sbr.rel target = $region38
              $region43: #{macbert_forward.15} parent=35 // loop_exit
                _
            $region36: #{macbert_forward.15} parent=27 // pred_fallthru
              _
          $region28: #{macbert_forward.15} parent=23 // pred_fallthru
            _
          %340 = vnop
        $region24: #{macbert_forward.15} parent=19 // pred_fallthru
          _
        // Predicated region
        $region59: #{macbert_forward.15} parent=19 // pred_check
          %p341 = pneg %p104
        $region60: #{macbert_forward.15} parent=19 // pred_check_branch
          %343 = sbr.rel (%p341) target = $region62
        $region61: #{macbert_forward.15} parent=19 // pred_region
          %s344 = smul.u32 2, %s17
          %p345 = scmp.lt.s32.totalorder %s344, 5
          %s346 = scalar_select %p345, %s344, 5
          %s347 = scalar_lea.vmem %s2, %s346
          %s348 = smul.u32 2, %s17
        $region62: #{macbert_forward.15} parent=19 // pred_fallthru
          _
      $region20: #{macbert_forward.15} parent=5 // pred_fallthru
        _
      %p349 = scmp.le.s32.totalorder 1, %s9
      %p350 = scmp.lt.s32.totalorder %s9, 4
      %p351 = pnand %p349, %p350
      %p352 = pneg %p351
      // Predicated region
      $region63: #{macbert_forward.15} parent=5 // pred_check
        _
      $region64: #{macbert_forward.15} parent=5 // pred_check_branch
        %354 = sbr.rel (%p351) target = $region66
      $region65: #{macbert_forward.15} parent=5 // pred_region
        %s355 = ssub.s32 %s9, 1
        %s356 = sand.u32 %s71, 1
        %s357 = sand.u32 %s71, 1
        %s358 = smul.addr %s357, 256
        %s359 = scalar_lea.vmem [#allocation3], %s358
        // Predicated region
        $region67: #{macbert_forward.15} parent=65 // pred_check
          %p360 = pneg %p84
        $region68: #{macbert_forward.15} parent=65 // pred_check_branch
          %362 = sbr.rel (%p360) target = $region70
        $region69: #{macbert_forward.15} parent=65 // pred_region
          _
        $region70: #{macbert_forward.15} parent=65 // pred_fallthru
          _
        %s363 = smul.u32 2, %s19
        %s364 = smul.u32 2, %s21
        %p365 = scmp.lt.s32.totalorder %s363, 1
        %s366 = scalar_select %p365, %s363, 1
        %p367 = scmp.lt.s32.totalorder %s364, 1
        %s368 = scalar_select %p367, %s364, 1
        %s369 = smul.addr %s366, 2
        %s370 = sadd.s32 %s368, %s369
        %s371 = smul.addr %s370, 4
        %s372 = scalar_lea.vmem %s0, %s371
        %p373 = pneg %p56
        %p374 = pneg %p53
        %s375 = sand.u32 %s71, 1
        %s376 = sand.u32 %s71, 1
        %s377 = smul.addr %s376, 256
        %s378 = scalar_lea.vmem [#allocation3], %s377
        %p379 = pneg %p84
        %p380 = pneg %p81
        %s381 = smul.u32 2, %s20
        %p382 = scmp.lt.s32.totalorder %s381, 5
        %s383 = scalar_select %p382, %s381, 5
        %s384 = scalar_lea.vmem %s2, %s383
        %p385 = pneg %p110
        %p386 = pneg %p107
        %p387 = pneg %p138
        %p388 = pneg %p135
        %s389 = sand.u32 %s125, 1
        %s390 = sand.u32 %s125, 1
        %s391 = smul.addr %s390, 16
        %s392 = scalar_lea.vmem [#allocation4], %s391
        %s393 = smul.u32 2, %s19
        %s394 = smul.u32 2, %s21
        %p395 = scmp.lt.s32.totalorder %s393, 1
        %s396 = scalar_select %p395, %s393, 1
        %p397 = scmp.lt.s32.totalorder %s394, 1
        %s398 = scalar_select %p397, %s394, 1
        %s399 = smul.addr %s396, 2
        %s400 = sadd.s32 %s398, %s399
        %s401 = smul.addr %s400, 4
        %s402 = scalar_lea.vmem %s0, %s401
        %s403 = smul.u32 2, %s19
        %s404 = smul.u32 2, %s21
        %s405 = smul.u32 32, %s21
        %s406 = smul.u32 2, %s20
        %s407 = smul.u32 2, %s20
        %p408 = scmp.lt.s32.totalorder %s407, 5
        %s409 = scalar_select %p408, %s407, 5
        %s410 = scalar_lea.vmem %s2, %s409
        %s411 = smul.u32 2, %s20
        %s412 = smul.u32 2, %s19
        %s413 = smul.u32 2, %s20
        %p414 = scmp.eq.s32.totalorder %s21, 0
        // Predicated region
        $region71: #{macbert_forward.15} parent=65 // pred_check
          %p415 = pneg %p414
        $region72: #{macbert_forward.15} parent=65 // pred_check_branch
          %417 = sbr.rel (%p415) target = $region74
        $region73: #{macbert_forward.15} parent=65 // pred_region
          %418 = vst [vmem:[#allocation2] sm:$0xff] 0.0
          %419 = vst [vmem:[#allocation2 + $0x8] sm:$0xff] 0.0
          %420 = vst [vmem:[#allocation2 + $0x10] sm:$0xff] 0.0
          %421 = vst [vmem:[#allocation2 + $0x18] sm:$0xff] 0.0
        $region74: #{macbert_forward.15} parent=65 // pred_fallthru
          _
        %v422 = vld [vmem:[#allocation2] sm:$0xff]
        %v423 = vld [vmem:[#allocation2 + $0x8] sm:$0xff]
        %v424 = vld [vmem:[#allocation2 + $0x10] sm:$0xff]
        %v425 = vld [vmem:[#allocation2 + $0x18] sm:$0xff]
        %v426 = vld [vmem:[%s402] sm:$0xff]
        %v427 = vld [vmem:[%s402 + $0x8] sm:$0xff]
        %v428 = vld [vmem:[%s359] sm:$0xff]
        %v429 = vld [vmem:[%s359 + $0x8] sm:$0xff]
        %v430 = vld [vmem:[%s359 + $0x10] sm:$0xff]
        %v431 = vld [vmem:[%s359 + $0x18] sm:$0xff]
        %v432 = vld [vmem:[%s359 + $0x20] sm:$0xff]
        %v433 = vld [vmem:[%s359 + $0x28] sm:$0xff]
        %v434 = vld [vmem:[%s359 + $0x30] sm:$0xff]
        %v435 = vld [vmem:[%s359 + $0x38] sm:$0xff]
        %v436 = vld [vmem:[%s359 + $0x40] sm:$0xff]
        %v437 = vld [vmem:[%s359 + $0x48] sm:$0xff]
        %v438 = vld [vmem:[%s359 + $0x50] sm:$0xff]
        %v439 = vld [vmem:[%s359 + $0x58] sm:$0xff]
        %v440 = vld [vmem:[%s359 + $0x60] sm:$0xff]
        %v441 = vld [vmem:[%s359 + $0x68] sm:$0xff]
        %v442 = vld [vmem:[%s359 + $0x70] sm:$0xff]
        %v443 = vld [vmem:[%s359 + $0x78] sm:$0xff]
        %v444 = vld [vmem:[%s359 + $0x80] sm:$0xff]
        %v445 = vld [vmem:[%s359 + $0x88] sm:$0xff]
        %v446 = vld [vmem:[%s359 + $0x90] sm:$0xff]
        %v447 = vld [vmem:[%s359 + $0x98] sm:$0xff]
        %v448 = vld [vmem:[%s359 + $0xa0] sm:$0xff]
        %v449 = vld [vmem:[%s359 + $0xa8] sm:$0xff]
        %v450 = vld [vmem:[%s359 + $0xb0] sm:$0xff]
        %v451 = vld [vmem:[%s359 + $0xb8] sm:$0xff]
        %v452 = vld [vmem:[%s359 + $0xc0] sm:$0xff]
        %v453 = vld [vmem:[%s359 + $0xc8] sm:$0xff]
        %v454 = vld [vmem:[%s359 + $0xd0] sm:$0xff]
        %v455 = vld [vmem:[%s359 + $0xd8] sm:$0xff]
        %v456 = vld [vmem:[%s359 + $0xe0] sm:$0xff]
        %v457 = vld [vmem:[%s359 + $0xe8] sm:$0xff]
        %v458 = vld [vmem:[%s359 + $0xf0] sm:$0xff]
        %v459 = vld [vmem:[%s359 + $0xf8] sm:$0xff]
        %v462 = vunpack.c.l.b16 %v426
        %v463 = vunpack.c.h.b16 %v426
        %v464 = vunpack.c.l.b16 %v427
        %v465 = vunpack.c.h.b16 %v427
        %v466 = vpack.c.b16 %v464, %v462
        %v467 = vpack.c.b16 %v465, %v463
        %v502 = vunpack.c.l.b16 %v428
        %v503 = vunpack.c.h.b16 %v428
        %v504 = vunpack.c.l.b16 %v429
        %v505 = vunpack.c.h.b16 %v429
        %v506 = vunpack.c.l.b16 %v430
        %v507 = vunpack.c.h.b16 %v430
        %v508 = vunpack.c.l.b16 %v431
        %v509 = vunpack.c.h.b16 %v431
        %v510 = vunpack.c.l.b16 %v432
        %v511 = vunpack.c.h.b16 %v432
        %v512 = vunpack.c.l.b16 %v433
        %v513 = vunpack.c.h.b16 %v433
        %v514 = vunpack.c.l.b16 %v434
        %v515 = vunpack.c.h.b16 %v434
        %v516 = vunpack.c.l.b16 %v435
        %v517 = vunpack.c.h.b16 %v435
        %v518 = vunpack.c.l.b16 %v436
        %v519 = vunpack.c.h.b16 %v436
        %v520 = vunpack.c.l.b16 %v437
        %v521 = vunpack.c.h.b16 %v437
        %v522 = vunpack.c.l.b16 %v438
        %v523 = vunpack.c.h.b16 %v438
        %v524 = vunpack.c.l.b16 %v439
        %v525 = vunpack.c.h.b16 %v439
        %v526 = vunpack.c.l.b16 %v440
        %v527 = vunpack.c.h.b16 %v440
        %v528 = vunpack.c.l.b16 %v441
        %v529 = vunpack.c.h.b16 %v441
        %v530 = vunpack.c.l.b16 %v442
        %v531 = vunpack.c.h.b16 %v442
        %v532 = vunpack.c.l.b16 %v443
        %v533 = vunpack.c.h.b16 %v443
        %v534 = vunpack.c.l.b16 %v444
        %v535 = vunpack.c.h.b16 %v444
        %v536 = vunpack.c.l.b16 %v445
        %v537 = vunpack.c.h.b16 %v445
        %v538 = vunpack.c.l.b16 %v446
        %v539 = vunpack.c.h.b16 %v446
        %v540 = vunpack.c.l.b16 %v447
        %v541 = vunpack.c.h.b16 %v447
        %v542 = vunpack.c.l.b16 %v448
        %v543 = vunpack.c.h.b16 %v448
        %v544 = vunpack.c.l.b16 %v449
        %v545 = vunpack.c.h.b16 %v449
        %v546 = vunpack.c.l.b16 %v450
        %v547 = vunpack.c.h.b16 %v450
        %v548 = vunpack.c.l.b16 %v451
        %v549 = vunpack.c.h.b16 %v451
        %v550 = vunpack.c.l.b16 %v452
        %v551 = vunpack.c.h.b16 %v452
        %v552 = vunpack.c.l.b16 %v453
        %v553 = vunpack.c.h.b16 %v453
        %v554 = vunpack.c.l.b16 %v454
        %v555 = vunpack.c.h.b16 %v454
        %v556 = vunpack.c.l.b16 %v455
        %v557 = vunpack.c.h.b16 %v455
        %v558 = vunpack.c.l.b16 %v456
        %v559 = vunpack.c.h.b16 %v456
        %v560 = vunpack.c.l.b16 %v457
        %v561 = vunpack.c.h.b16 %v457
        %v562 = vunpack.c.l.b16 %v458
        %v563 = vunpack.c.h.b16 %v458
        %v564 = vunpack.c.l.b16 %v459
        %v565 = vunpack.c.h.b16 %v459
        %v566 = vpack.c.b16 %v504, %v502
        %v567 = vpack.c.b16 %v505, %v503
        %v568 = vpack.c.b16 %v508, %v506
        %v569 = vpack.c.b16 %v509, %v507
        %v570 = vpack.c.b16 %v512, %v510
        %v571 = vpack.c.b16 %v513, %v511
        %v572 = vpack.c.b16 %v516, %v514
        %v573 = vpack.c.b16 %v517, %v515
        %v574 = vpack.c.b16 %v520, %v518
        %v575 = vpack.c.b16 %v521, %v519
        %v576 = vpack.c.b16 %v524, %v522
        %v577 = vpack.c.b16 %v525, %v523
        %v578 = vpack.c.b16 %v528, %v526
        %v579 = vpack.c.b16 %v529, %v527
        %v580 = vpack.c.b16 %v532, %v530
        %v581 = vpack.c.b16 %v533, %v531
        %v582 = vpack.c.b16 %v536, %v534
        %v583 = vpack.c.b16 %v537, %v535
        %v584 = vpack.c.b16 %v540, %v538
        %v585 = vpack.c.b16 %v541, %v539
        %v586 = vpack.c.b16 %v544, %v542
        %v587 = vpack.c.b16 %v545, %v543
        %v588 = vpack.c.b16 %v548, %v546
        %v589 = vpack.c.b16 %v549, %v547
        %v590 = vpack.c.b16 %v552, %v550
        %v591 = vpack.c.b16 %v553, %v551
        %v592 = vpack.c.b16 %v556, %v554
        %v593 = vpack.c.b16 %v557, %v555
        %v594 = vpack.c.b16 %v560, %v558
        %v595 = vpack.c.b16 %v561, %v559
        %v596 = vpack.c.b16 %v564, %v562
        %v597 = vpack.c.b16 %v565, %v563
        %630 = vmatprep.subr.bf16.mxu0 %v567
        %631 = vmatpush1.bf16.msra.mxu0 %v566
        %632 = vmatprep.subr.bf16.mxu0 %v569
        %633 = vmatpush1.bf16.msra.mxu0 %v568
        %634 = vmatprep.subr.bf16.mxu0 %v571
        %635 = vmatpush1.bf16.msra.mxu0 %v570
        %636 = vmatprep.subr.bf16.mxu0 %v573
        %637 = vmatpush1.bf16.msra.mxu0 %v572
        %638 = vmatprep.subr.bf16.mxu0 %v575
        %639 = vmatpush1.bf16.msra.mxu0 %v574
        %640 = vmatprep.subr.bf16.mxu0 %v577
        %641 = vmatpush1.bf16.msra.mxu0 %v576
        %642 = vmatprep.subr.bf16.mxu0 %v579
        %643 = vmatpush1.bf16.msra.mxu0 %v578
        %644 = vmatprep.subr.bf16.mxu0 %v581
        %645 = vmatpush1.bf16.msra.mxu0 %v580
        %646 = vmatprep.subr.bf16.mxu0 %v583
        %647 = vmatpush1.bf16.msra.mxu0 %v582
        %648 = vmatprep.subr.bf16.mxu0 %v585
        %649 = vmatpush1.bf16.msra.mxu0 %v584
        %650 = vmatprep.subr.bf16.mxu0 %v587
        %651 = vmatpush1.bf16.msra.mxu0 %v586
        %652 = vmatprep.subr.bf16.mxu0 %v589
        %653 = vmatpush1.bf16.msra.mxu0 %v588
        %654 = vmatprep.subr.bf16.mxu0 %v591
        %655 = vmatpush1.bf16.msra.mxu0 %v590
        %656 = vmatprep.subr.bf16.mxu0 %v593
        %657 = vmatpush1.bf16.msra.mxu0 %v592
        %658 = vmatprep.subr.bf16.mxu0 %v595
        %659 = vmatpush1.bf16.msra.mxu0 %v594
        %660 = vmatprep.subr.bf16.mxu0 %v597
        %661 = vmatpush1.bf16.msra.mxu0 %v596
        %662 = vmatprep.mubr.bf16.mxu0 %v467
        %663 = vmatmul.mubr.bf16.gmra.mrb[0].mxu0 %v466
        %v664 = vpop.f32.mrb[0].mxu0
        %v665 = vadd.f32 0.0, %v664
        %v666 = vpop.f32.mrb[0].mxu0
        %v667 = vadd.f32 0.0, %v666
        %v668 = vpop.f32.mrb[0].mxu0
        %v669 = vadd.f32 0.0, %v668
        %v670 = vpop.f32.mrb[0].mxu0
        %v671 = vadd.f32 0.0, %v670
        %672 = vdwg.mxu0
        %v673 = vadd.f32 %v422, %v665
        %v674 = vadd.f32 %v423, %v667
        %v675 = vadd.f32 %v424, %v669
        %v676 = vadd.f32 %v425, %v671
        %677 = vst [vmem:[#allocation2] sm:$0xff] %v673
        %678 = vst [vmem:[#allocation2 + $0x8] sm:$0xff] %v674
        %679 = vst [vmem:[#allocation2 + $0x10] sm:$0xff] %v675
        %680 = vst [vmem:[#allocation2 + $0x18] sm:$0xff] %v676
        // Predicated region
        $region75: #{macbert_forward.15} parent=65 // pred_check
          %p681 = pneg %p414
        $region76: #{macbert_forward.15} parent=65 // pred_check_branch
          %683 = sbr.rel (%p681) target = $region78
        $region77: #{macbert_forward.15} parent=65 // pred_region
          %v684 = vld [vmem:[#allocation2] sm:$0xff]
          %v685 = vld [vmem:[#allocation2 + $0x8] sm:$0xff]
          %v686 = vld [vmem:[#allocation2 + $0x10] sm:$0xff]
          %v687 = vld [vmem:[#allocation2 + $0x18] sm:$0xff]
          %v688 = vld [vmem:[%s410] sm:$0x3]
          %v690 = vlaneseq
          %v691 = vshrl.u32 %v690, 7
          %v692 = vsub.s32 0, %v691
          %v693 = vrot.slane %v688, %v692
          %v694 = vlaneseq
          %v695 = vshrl.u32 %v694, 7
          %v696 = vsub.s32 1, %v695
          %v697 = vrot.slane %v688, %v696
          %v700 = vadd.f32 %v684, %v693
          %v701 = vadd.f32 %v685, %v697
          %v702 = vadd.f32 %v686, %v693
          %v703 = vadd.f32 %v687, %v697
          %v704 = vpack.c.bf16 %v702, %v700
          %v705 = vpack.c.bf16 %v703, %v701
          %v708 = vunpack.c.l.b16 %v704
          %v709 = vunpack.c.l.b16 %v705
          %v710 = vunpack.c.h.b16 %v704
          %v711 = vunpack.c.h.b16 %v705
          %v712 = vpack.c.b16 %v709, %v708
          %v713 = vpack.c.b16 %v711, %v710
          %716 = vst [vmem:[%s392] sm:$0xff] %v712
          %717 = vst [vmem:[%s392 + $0x8] sm:$0xff] %v713
        $region78: #{macbert_forward.15} parent=65 // pred_fallthru
          _
        %s718 = sand.u32 %s125, 1
        %s719 = sand.u32 %s125, 1
        %s720 = smul.addr %s719, 16
        %s721 = scalar_lea.vmem [#allocation4], %s720
        // Predicated region
        $region79: #{macbert_forward.15} parent=65 // pred_check
          %p722 = pneg %p135
        $region80: #{macbert_forward.15} parent=65 // pred_check_branch
          %724 = sbr.rel (%p722) target = $region82
        $region81: #{macbert_forward.15} parent=65 // pred_region
          %s725 = smul.u32 2, %s19
          %s726 = smul.u32 2, %s20
          %s727 = smul.addr %s725, 6
          %s728 = sadd.s32 %s726, %s727
          %s729 = smul.addr %s728, 4
          %s730 = scalar_lea.vmem %s3, %s729
          // Predicated region
          $region83: #{macbert_forward.15} parent=81 // pred_check
            _
          $region84: #{macbert_forward.15} parent=81 // pred_check_branch
            %732 = sbr.rel (0) target = $region86
          $region85: #{macbert_forward.15} parent=81 // pred_region
            // Predicated region
            $region87: #{macbert_forward.15} parent=85 // pred_check
              _
            $region88: #{macbert_forward.15} parent=85 // pred_check_branch
              %734 = sbr.rel (0) target = $region90
            $region89: #{macbert_forward.15} parent=85 // pred_region
              // Predicated region
              $region102: #{macbert_forward.15} parent=89 // pred_check
                _
              $region103: #{macbert_forward.15} parent=89 // pred_check_branch
                %751 = sbr.rel (0) target = $region105
              $region104: #{macbert_forward.15} parent=89 // pred_region
                loop: start=0, step=1, limit=1
                $region106: #{macbert_forward.15} parent=104 // loop_pre_header
                  _
                $region107: #{macbert_forward.15} parent=104 // loop_header
                  %s753 = sphi 0, %s757
                  %p754 = scmp.ge.s32.totalorder %s753, 1
                  %s758 = sphi %s721, %s721
                  %s759 = sphi %s730, %s730
                $region108: #{macbert_forward.15} parent=104 // loop_header_branch
                  %756 = sbr.rel (%p754) target = $region112
                $region109: #{macbert_forward.15} parent=104 // loop_body
                  %v760 = vld [vmem:[%s758] sm:$0xff]
                  %761 = vst [vmem:[%s759] sm:$0xff] %v760
                  %v762 = vld [vmem:[%s758 + $0x8] sm:$0xff]
                  %763 = vst [vmem:[%s759 + $0x18] sm:$0xff] %v762
                $region110: #{macbert_forward.15} parent=104 // loop_footer
                  %s757 = sadd.s32 1, %s753
                $region111: #{macbert_forward.15} parent=104 // loop_footer_branch
                  %752 = sbr.rel target = $region107
                $region112: #{macbert_forward.15} parent=104 // loop_exit
                  _
              $region105: #{macbert_forward.15} parent=89 // pred_fallthru
                _
              // Predicated region
              $region113: #{macbert_forward.15} parent=89 // pred_check
                _
              $region114: #{macbert_forward.15} parent=89 // pred_check_branch
                %765 = sbr.rel target = $region116
              $region115: #{macbert_forward.15} parent=89 // pred_region
                _
              $region116: #{macbert_forward.15} parent=89 // pred_fallthru
                _
            $region90: #{macbert_forward.15} parent=85 // pred_fallthru
              _
            // Predicated region
            $region91: #{macbert_forward.15} parent=85 // pred_check
              _
            $region92: #{macbert_forward.15} parent=85 // pred_check_branch
              %736 = sbr.rel target = $region94
            $region93: #{macbert_forward.15} parent=85 // pred_region
              loop: start=0, step=1, limit=1
              $region95: #{macbert_forward.15} parent=93 // loop_pre_header
                _
              $region96: #{macbert_forward.15} parent=93 // loop_header
                %s739 = sphi 0, %s743
                %p740 = scmp.ge.s32.totalorder %s739, 1
                %s744 = sphi %s721, %s721
                %s745 = sphi %s730, %s730
              $region97: #{macbert_forward.15} parent=93 // loop_header_branch
                %742 = sbr.rel (%p740) target = $region101
              $region98: #{macbert_forward.15} parent=93 // loop_body
                %v746 = vld [vmem:[%s744] sm:$0xff]
                %747 = vst [vmem:[%s745] sm:$0xff] %v746
                %v748 = vld [vmem:[%s744 + $0x8] sm:$0xff]
                %749 = vst [vmem:[%s745 + $0x18] sm:$0xff] %v748
              $region99: #{macbert_forward.15} parent=93 // loop_footer
                %s743 = sadd.s32 1, %s739
              $region100: #{macbert_forward.15} parent=93 // loop_footer_branch
                %738 = sbr.rel target = $region96
              $region101: #{macbert_forward.15} parent=93 // loop_exit
                _
            $region94: #{macbert_forward.15} parent=85 // pred_fallthru
              _
          $region86: #{macbert_forward.15} parent=81 // pred_fallthru
            _
          %766 = vnop
        $region82: #{macbert_forward.15} parent=65 // pred_fallthru
          _
      $region66: #{macbert_forward.15} parent=5 // pred_fallthru
        _
      %p767 = scmp.le.s32.totalorder 2, %s9
      // Predicated region
      $region117: #{macbert_forward.15} parent=5 // pred_check
        %p768 = pneg %p767
      $region118: #{macbert_forward.15} parent=5 // pred_check_branch
        %770 = sbr.rel (%p768) target = $region120
      $region119: #{macbert_forward.15} parent=5 // pred_region
        %s771 = ssub.s32 %s9, 2
        // Predicated region
        $region121: #{macbert_forward.15} parent=119 // pred_check
          %p772 = pneg %p141
        $region122: #{macbert_forward.15} parent=119 // pred_check_branch
          %774 = sbr.rel (%p772) target = $region124
        $region123: #{macbert_forward.15} parent=119 // pred_region
          %s775 = sand.u32 %s126, 1
          %s776 = sand.u32 %s126, 1
          %s777 = smul.addr %s776, 16
          %s778 = scalar_lea.vmem [#allocation4], %s777
        $region124: #{macbert_forward.15} parent=119 // pred_fallthru
          _
      $region120: #{macbert_forward.15} parent=5 // pred_fallthru
        _
    $region6: #{macbert_forward.15} parent=1 // loop_footer
      %s13 = sadd.s32 1, %s9
    $region7: #{macbert_forward.15} parent=1 // loop_footer_branch
      %8 = sbr.rel target = $region3
    $region8: #{macbert_forward.15} parent=1 // loop_exit
      _

// kernel: macbert_forward.14
$region0: #{macbert_forward.14}
  #allocation0 [shape = 'u32[]', space=smem, size = 0x4, offset = 0x4, fixed_abs, tag = 'smem constant byte address 0x4 - core index']
  #allocation1 [shape = 'u32[144,128]{1,0:T(1,128)}', space=vmem, size = 0x12000, scoped, tag = 'internal scratch']
  %s0 = inlined_call_operand.vmem [shape: bf16[16,256], index: 0, kind: input, shape index: {}]
  %s1 = inlined_call_operand.vmem [shape: bf16[256,512], index: 1, kind: input, shape index: {}]
  %s2 = inlined_call_operand.vmem [shape: f32[1,512], index: 2, kind: input, shape index: {}]
  %s3 = inlined_call_operand.vmem [shape: bf16[512,256], index: 3, kind: input, shape index: {}]
  %s4 = inlined_call_operand.vmem [shape: f32[1,256], index: 4, kind: input, shape index: {}]
  %s5 = inlined_call_operand.vmem [shape: f32[1,256], index: 5, kind: input, shape index: {}]
  %s6 = inlined_call_operand.vmem [shape: f32[1,256], index: 6, kind: input, shape index: {}]
  %s7 = inlined_call_operand.vmem [shape: bf16[16,256], index: 7, kind: output, shape index: {}]
  %s8 = sld [smem:[#allocation0]]
  $region38: #{macbert_forward.14} parent=0
    _
  %s10 = ssub.s32 1, %s8
  %s11 = scalar_select 0, %s10, %s8
  // Predicated region
  $region2: #{macbert_forward.14} parent=0 // pred_check
    _
  $region3: #{macbert_forward.14} parent=0 // pred_check_branch
    %13 = sbr.rel (0) target = $region5
  $region4: #{macbert_forward.14} parent=0 // pred_region
    _
  $region5: #{macbert_forward.14} parent=0 // pred_fallthru
    _
  // Predicated region
  $region6: #{macbert_forward.14} parent=0 // pred_check
    _
  $region7: #{macbert_forward.14} parent=0 // pred_check_branch
    %15 = sbr.rel (0) target = $region9
  $region8: #{macbert_forward.14} parent=0 // pred_region
    _
  $region9: #{macbert_forward.14} parent=0 // pred_fallthru
    _
  // Predicated region
  $region10: #{macbert_forward.14} parent=0 // pred_check
    _
  $region11: #{macbert_forward.14} parent=0 // pred_check_branch
    %17 = sbr.rel (0) target = $region13
  $region12: #{macbert_forward.14} parent=0 // pred_region
    _
  $region13: #{macbert_forward.14} parent=0 // pred_fallthru
    _
  // Predicated region
  $region14: #{macbert_forward.14} parent=0 // pred_check
    _
  $region15: #{macbert_forward.14} parent=0 // pred_check_branch
    %19 = sbr.rel (0) target = $region17
  $region16: #{macbert_forward.14} parent=0 // pred_region
    _
  $region17: #{macbert_forward.14} parent=0 // pred_fallthru
    _
  // Predicated region
  $region18: #{macbert_forward.14} parent=0 // pred_check
    _
  $region19: #{macbert_forward.14} parent=0 // pred_check_branch
    %21 = sbr.rel (0) target = $region21
  $region20: #{macbert_forward.14} parent=0 // pred_region
    _
  $region21: #{macbert_forward.14} parent=0 // pred_fallthru
    _
  // Predicated region
  $region22: #{macbert_forward.14} parent=0 // pred_check
    _
  $region23: #{macbert_forward.14} parent=0 // pred_check_branch
    %23 = sbr.rel (0) target = $region25
  $region24: #{macbert_forward.14} parent=0 // pred_region
    _
  $region25: #{macbert_forward.14} parent=0 // pred_fallthru
    _
  // Predicated region
  $region26: #{macbert_forward.14} parent=0 // pred_check
    _
  $region27: #{macbert_forward.14} parent=0 // pred_check_branch
    %25 = sbr.rel (0) target = $region29
  $region28: #{macbert_forward.14} parent=0 // pred_region
    _
  $region29: #{macbert_forward.14} parent=0 // pred_fallthru
    _
  %v26 = vld [vmem:[%s0] sm:$0xff]
  %v27 = vld [vmem:[%s0 + $0x8] sm:$0xff]
  %v28 = vld [vmem:[%s1] sm:$0xff]
  %v29 = vld [vmem:[%s1 + $0x8] sm:$0xff]
  %v30 = vld [vmem:[%s1 + $0x10] sm:$0xff]
  %v31 = vld [vmem:[%s1 + $0x18] sm:$0xff]
  %v32 = vld [vmem:[%s1 + $0x20] sm:$0xff]
  %v33 = vld [vmem:[%s1 + $0x28] sm:$0xff]
  %v34 = vld [vmem:[%s1 + $0x30] sm:$0xff]
  %v35 = vld [vmem:[%s1 + $0x38] sm:$0xff]
  %v36 = vld [vmem:[%s1 + $0x40] sm:$0xff]
  %v37 = vld [vmem:[%s1 + $0x48] sm:$0xff]
  %v38 = vld [vmem:[%s1 + $0x50] sm:$0xff]
  %v39 = vld [vmem:[%s1 + $0x58] sm:$0xff]
  %v40 = vld [vmem:[%s1 + $0x60] sm:$0xff]
  %v41 = vld [vmem:[%s1 + $0x68] sm:$0xff]
  %v42 = vld [vmem:[%s1 + $0x70] sm:$0xff]
  %v43 = vld [vmem:[%s1 + $0x78] sm:$0xff]
  %v44 = vld [vmem:[%s1 + $0x80] sm:$0xff]
  %v45 = vld [vmem:[%s1 + $0x88] sm:$0xff]
  %v46 = vld [vmem:[%s1 + $0x90] sm:$0xff]
  %v47 = vld [vmem:[%s1 + $0x98] sm:$0xff]
  %v48 = vld [vmem:[%s1 + $0xa0] sm:$0xff]
  %v49 = vld [vmem:[%s1 + $0xa8] sm:$0xff]
  %v50 = vld [vmem:[%s1 + $0xb0] sm:$0xff]
  %v51 = vld [vmem:[%s1 + $0xb8] sm:$0xff]
  %v52 = vld [vmem:[%s1 + $0xc0] sm:$0xff]
  %v53 = vld [vmem:[%s1 + $0xc8] sm:$0xff]
  %v54 = vld [vmem:[%s1 + $0xd0] sm:$0xff]
  %v55 = vld [vmem:[%s1 + $0xd8] sm:$0xff]
  %v56 = vld [vmem:[%s1 + $0xe0] sm:$0xff]
  %v57 = vld [vmem:[%s1 + $0xe8] sm:$0xff]
  %v58 = vld [vmem:[%s1 + $0xf0] sm:$0xff]
  %v59 = vld [vmem:[%s1 + $0xf8] sm:$0xff]
  %v60 = vld [vmem:[%s1 + $0x100] sm:$0xff]
  %v61 = vld [vmem:[%s1 + $0x108] sm:$0xff]
  %v62 = vld [vmem:[%s1 + $0x110] sm:$0xff]
  %v63 = vld [vmem:[%s1 + $0x118] sm:$0xff]
  %v64 = vld [vmem:[%s1 + $0x120] sm:$0xff]
  %v65 = vld [vmem:[%s1 + $0x128] sm:$0xff]
  %v66 = vld [vmem:[%s1 + $0x130] sm:$0xff]
  %v67 = vld [vmem:[%s1 + $0x138] sm:$0xff]
  %v68 = vld [vmem:[%s1 + $0x140] sm:$0xff]
  %v69 = vld [vmem:[%s1 + $0x148] sm:$0xff]
  %v70 = vld [vmem:[%s1 + $0x150] sm:$0xff]
  %v71 = vld [vmem:[%s1 + $0x158] sm:$0xff]
  %v72 = vld [vmem:[%s1 + $0x160] sm:$0xff]
  %v73 = vld [vmem:[%s1 + $0x168] sm:$0xff]
  %v74 = vld [vmem:[%s1 + $0x170] sm:$0xff]
  %v75 = vld [vmem:[%s1 + $0x178] sm:$0xff]
  %v76 = vld [vmem:[%s1 + $0x180] sm:$0xff]
  %v77 = vld [vmem:[%s1 + $0x188] sm:$0xff]
  %v78 = vld [vmem:[%s1 + $0x190] sm:$0xff]
  %v79 = vld [vmem:[%s1 + $0x198] sm:$0xff]
  %v80 = vld [vmem:[%s1 + $0x1a0] sm:$0xff]
  %v81 = vld [vmem:[%s1 + $0x1a8] sm:$0xff]
  %v82 = vld [vmem:[%s1 + $0x1b0] sm:$0xff]
  %v83 = vld [vmem:[%s1 + $0x1b8] sm:$0xff]
  %v84 = vld [vmem:[%s1 + $0x1c0] sm:$0xff]
  %v85 = vld [vmem:[%s1 + $0x1c8] sm:$0xff]
  %v86 = vld [vmem:[%s1 + $0x1d0] sm:$0xff]
  %v87 = vld [vmem:[%s1 + $0x1d8] sm:$0xff]
  %v88 = vld [vmem:[%s1 + $0x1e0] sm:$0xff]
  %v89 = vld [vmem:[%s1 + $0x1e8] sm:$0xff]
  %v90 = vld [vmem:[%s1 + $0x1f0] sm:$0xff]
  %v91 = vld [vmem:[%s1 + $0x1f8] sm:$0xff]
  %v92 = vld [vmem:[%s2] sm:$0xf]
  %v94 = vlaneseq
  %v95 = vshrl.u32 %v94, 7
  %v96 = vsub.s32 0, %v95
  %v97 = vrot.slane %v92, %v96
  %v98 = vlaneseq
  %v99 = vshrl.u32 %v98, 7
  %v100 = vsub.s32 1, %v99
  %v101 = vrot.slane %v92, %v100
  %v102 = vlaneseq
  %v103 = vshrl.u32 %v102, 7
  %v104 = vsub.s32 2, %v103
  %v105 = vrot.slane %v92, %v104
  %v106 = vlaneseq
  %v107 = vshrl.u32 %v106, 7
  %v108 = vsub.s32 3, %v107
  %v109 = vrot.slane %v92, %v108
  %v116 = vunpack.c.l.b16 %v26
  %v117 = vunpack.c.h.b16 %v26
  %v118 = vunpack.c.l.b16 %v27
  %v119 = vunpack.c.h.b16 %v27
  %v120 = vpack.c.b16 %v118, %v116
  %v121 = vpack.c.b16 %v119, %v117
  %v188 = vunpack.c.l.b16 %v28
  %v189 = vunpack.c.h.b16 %v28
  %v190 = vunpack.c.l.b16 %v29
  %v191 = vunpack.c.h.b16 %v29
  %v192 = vunpack.c.l.b16 %v30
  %v193 = vunpack.c.h.b16 %v30
  %v194 = vunpack.c.l.b16 %v31
  %v195 = vunpack.c.h.b16 %v31
  %v196 = vunpack.c.l.b16 %v32
  %v197 = vunpack.c.h.b16 %v32
  %v198 = vunpack.c.l.b16 %v33
  %v199 = vunpack.c.h.b16 %v33
  %v200 = vunpack.c.l.b16 %v34
  %v201 = vunpack.c.h.b16 %v34
  %v202 = vunpack.c.l.b16 %v35
  %v203 = vunpack.c.h.b16 %v35
  %v204 = vunpack.c.l.b16 %v36
  %v205 = vunpack.c.h.b16 %v36
  %v206 = vunpack.c.l.b16 %v37
  %v207 = vunpack.c.h.b16 %v37
  %v208 = vunpack.c.l.b16 %v38
  %v209 = vunpack.c.h.b16 %v38
  %v210 = vunpack.c.l.b16 %v39
  %v211 = vunpack.c.h.b16 %v39
  %v212 = vunpack.c.l.b16 %v40
  %v213 = vunpack.c.h.b16 %v40
  %v214 = vunpack.c.l.b16 %v41
  %v215 = vunpack.c.h.b16 %v41
  %v216 = vunpack.c.l.b16 %v42
  %v217 = vunpack.c.h.b16 %v42
  %v218 = vunpack.c.l.b16 %v43
  %v219 = vunpack.c.h.b16 %v43
  %v220 = vunpack.c.l.b16 %v44
  %v221 = vunpack.c.h.b16 %v44
  %v222 = vunpack.c.l.b16 %v45
  %v223 = vunpack.c.h.b16 %v45
  %v224 = vunpack.c.l.b16 %v46
  %v225 = vunpack.c.h.b16 %v46
  %v226 = vunpack.c.l.b16 %v47
  %v227 = vunpack.c.h.b16 %v47
  %v228 = vunpack.c.l.b16 %v48
  %v229 = vunpack.c.h.b16 %v48
  %v230 = vunpack.c.l.b16 %v49
  %v231 = vunpack.c.h.b16 %v49
  %v232 = vunpack.c.l.b16 %v50
  %v233 = vunpack.c.h.b16 %v50
  %v234 = vunpack.c.l.b16 %v51
  %v235 = vunpack.c.h.b16 %v51
  %v236 = vunpack.c.l.b16 %v52
  %v237 = vunpack.c.h.b16 %v52
  %v238 = vunpack.c.l.b16 %v53
  %v239 = vunpack.c.h.b16 %v53
  %v240 = vunpack.c.l.b16 %v54
  %v241 = vunpack.c.h.b16 %v54
  %v242 = vunpack.c.l.b16 %v55
  %v243 = vunpack.c.h.b16 %v55
  %v244 = vunpack.c.l.b16 %v56
  %v245 = vunpack.c.h.b16 %v56
  %v246 = vunpack.c.l.b16 %v57
  %v247 = vunpack.c.h.b16 %v57
  %v248 = vunpack.c.l.b16 %v58
  %v249 = vunpack.c.h.b16 %v58
  %v250 = vunpack.c.l.b16 %v59
  %v251 = vunpack.c.h.b16 %v59
  %v252 = vunpack.c.l.b16 %v60
  %v253 = vunpack.c.h.b16 %v60
  %v254 = vunpack.c.l.b16 %v61
  %v255 = vunpack.c.h.b16 %v61
  %v256 = vunpack.c.l.b16 %v62
  %v257 = vunpack.c.h.b16 %v62
  %v258 = vunpack.c.l.b16 %v63
  %v259 = vunpack.c.h.b16 %v63
  %v260 = vunpack.c.l.b16 %v64
  %v261 = vunpack.c.h.b16 %v64
  %v262 = vunpack.c.l.b16 %v65
  %v263 = vunpack.c.h.b16 %v65
  %v264 = vunpack.c.l.b16 %v66
  %v265 = vunpack.c.h.b16 %v66
  %v266 = vunpack.c.l.b16 %v67
  %v267 = vunpack.c.h.b16 %v67
  %v268 = vunpack.c.l.b16 %v68
  %v269 = vunpack.c.h.b16 %v68
  %v270 = vunpack.c.l.b16 %v69
  %v271 = vunpack.c.h.b16 %v69
  %v272 = vunpack.c.l.b16 %v70
  %v273 = vunpack.c.h.b16 %v70
  %v274 = vunpack.c.l.b16 %v71
  %v275 = vunpack.c.h.b16 %v71
  %v276 = vunpack.c.l.b16 %v72
  %v277 = vunpack.c.h.b16 %v72
  %v278 = vunpack.c.l.b16 %v73
  %v279 = vunpack.c.h.b16 %v73
  %v280 = vunpack.c.l.b16 %v74
  %v281 = vunpack.c.h.b16 %v74
  %v282 = vunpack.c.l.b16 %v75
  %v283 = vunpack.c.h.b16 %v75
  %v284 = vunpack.c.l.b16 %v76
  %v285 = vunpack.c.h.b16 %v76
  %v286 = vunpack.c.l.b16 %v77
  %v287 = vunpack.c.h.b16 %v77
  %v288 = vunpack.c.l.b16 %v78
  %v289 = vunpack.c.h.b16 %v78
  %v290 = vunpack.c.l.b16 %v79
  %v291 = vunpack.c.h.b16 %v79
  %v292 = vunpack.c.l.b16 %v80
  %v293 = vunpack.c.h.b16 %v80
  %v294 = vunpack.c.l.b16 %v81
  %v295 = vunpack.c.h.b16 %v81
  %v296 = vunpack.c.l.b16 %v82
  %v297 = vunpack.c.h.b16 %v82
  %v298 = vunpack.c.l.b16 %v83
  %v299 = vunpack.c.h.b16 %v83
  %v300 = vunpack.c.l.b16 %v84
  %v301 = vunpack.c.h.b16 %v84
  %v302 = vunpack.c.l.b16 %v85
  %v303 = vunpack.c.h.b16 %v85
  %v304 = vunpack.c.l.b16 %v86
  %v305 = vunpack.c.h.b16 %v86
  %v306 = vunpack.c.l.b16 %v87
  %v307 = vunpack.c.h.b16 %v87
  %v308 = vunpack.c.l.b16 %v88
  %v309 = vunpack.c.h.b16 %v88
  %v310 = vunpack.c.l.b16 %v89
  %v311 = vunpack.c.h.b16 %v89
  %v312 = vunpack.c.l.b16 %v90
  %v313 = vunpack.c.h.b16 %v90
  %v314 = vunpack.c.l.b16 %v91
  %v315 = vunpack.c.h.b16 %v91
  %v316 = vpack.c.b16 %v192, %v188
  %v317 = vpack.c.b16 %v193, %v189
  %v318 = vpack.c.b16 %v194, %v190
  %v319 = vpack.c.b16 %v195, %v191
  %v320 = vpack.c.b16 %v200, %v196
  %v321 = vpack.c.b16 %v201, %v197
  %v322 = vpack.c.b16 %v202, %v198
  %v323 = vpack.c.b16 %v203, %v199
  %v324 = vpack.c.b16 %v208, %v204
  %v325 = vpack.c.b16 %v209, %v205
  %v326 = vpack.c.b16 %v210, %v206
  %v327 = vpack.c.b16 %v211, %v207
  %v328 = vpack.c.b16 %v216, %v212
  %v329 = vpack.c.b16 %v217, %v213
  %v330 = vpack.c.b16 %v218, %v214
  %v331 = vpack.c.b16 %v219, %v215
  %v332 = vpack.c.b16 %v224, %v220
  %v333 = vpack.c.b16 %v225, %v221
  %v334 = vpack.c.b16 %v226, %v222
  %v335 = vpack.c.b16 %v227, %v223
  %v336 = vpack.c.b16 %v232, %v228
  %v337 = vpack.c.b16 %v233, %v229
  %v338 = vpack.c.b16 %v234, %v230
  %v339 = vpack.c.b16 %v235, %v231
  %v340 = vpack.c.b16 %v240, %v236
  %v341 = vpack.c.b16 %v241, %v237
  %v342 = vpack.c.b16 %v242, %v238
  %v343 = vpack.c.b16 %v243, %v239
  %v344 = vpack.c.b16 %v248, %v244
  %v345 = vpack.c.b16 %v249, %v245
  %v346 = vpack.c.b16 %v250, %v246
  %v347 = vpack.c.b16 %v251, %v247
  %v348 = vpack.c.b16 %v256, %v252
  %v349 = vpack.c.b16 %v257, %v253
  %v350 = vpack.c.b16 %v258, %v254
  %v351 = vpack.c.b16 %v259, %v255
  %v352 = vpack.c.b16 %v264, %v260
  %v353 = vpack.c.b16 %v265, %v261
  %v354 = vpack.c.b16 %v266, %v262
  %v355 = vpack.c.b16 %v267, %v263
  %v356 = vpack.c.b16 %v272, %v268
  %v357 = vpack.c.b16 %v273, %v269
  %v358 = vpack.c.b16 %v274, %v270
  %v359 = vpack.c.b16 %v275, %v271
  %v360 = vpack.c.b16 %v280, %v276
  %v361 = vpack.c.b16 %v281, %v277
  %v362 = vpack.c.b16 %v282, %v278
  %v363 = vpack.c.b16 %v283, %v279
  %v364 = vpack.c.b16 %v288, %v284
  %v365 = vpack.c.b16 %v289, %v285
  %v366 = vpack.c.b16 %v290, %v286
  %v367 = vpack.c.b16 %v291, %v287
  %v368 = vpack.c.b16 %v296, %v292
  %v369 = vpack.c.b16 %v297, %v293
  %v370 = vpack.c.b16 %v298, %v294
  %v371 = vpack.c.b16 %v299, %v295
  %v372 = vpack.c.b16 %v304, %v300
  %v373 = vpack.c.b16 %v305, %v301
  %v374 = vpack.c.b16 %v306, %v302
  %v375 = vpack.c.b16 %v307, %v303
  %v376 = vpack.c.b16 %v312, %v308
  %v377 = vpack.c.b16 %v313, %v309
  %v378 = vpack.c.b16 %v314, %v310
  %v379 = vpack.c.b16 %v315, %v311
  %444 = vmatprep.subr.bf16.mxu0 %v317
  %445 = vmatpush1.bf16.msra.mxu0 %v316
  %446 = vmatprep.subr.bf16.mxu0 %v321
  %447 = vmatpush1.bf16.msra.mxu0 %v320
  %448 = vmatprep.subr.bf16.mxu0 %v325
  %449 = vmatpush1.bf16.msra.mxu0 %v324
  %450 = vmatprep.subr.bf16.mxu0 %v329
  %451 = vmatpush1.bf16.msra.mxu0 %v328
  %452 = vmatprep.subr.bf16.mxu0 %v333
  %453 = vmatpush1.bf16.msra.mxu0 %v332
  %454 = vmatprep.subr.bf16.mxu0 %v337
  %455 = vmatpush1.bf16.msra.mxu0 %v336
  %456 = vmatprep.subr.bf16.mxu0 %v341
  %457 = vmatpush1.bf16.msra.mxu0 %v340
  %458 = vmatprep.subr.bf16.mxu0 %v345
  %459 = vmatpush1.bf16.msra.mxu0 %v344
  %460 = vmatprep.subr.bf16.mxu0 %v349
  %461 = vmatpush1.bf16.msra.mxu0 %v348
  %462 = vmatprep.subr.bf16.mxu0 %v353
  %463 = vmatpush1.bf16.msra.mxu0 %v352
  %464 = vmatprep.subr.bf16.mxu0 %v357
  %465 = vmatpush1.bf16.msra.mxu0 %v356
  %466 = vmatprep.subr.bf16.mxu0 %v361
  %467 = vmatpush1.bf16.msra.mxu0 %v360
  %468 = vmatprep.subr.bf16.mxu0 %v365
  %469 = vmatpush1.bf16.msra.mxu0 %v364
  %470 = vmatprep.subr.bf16.mxu0 %v369
  %471 = vmatpush1.bf16.msra.mxu0 %v368
  %472 = vmatprep.subr.bf16.mxu0 %v373
  %473 = vmatpush1.bf16.msra.mxu0 %v372
  %474 = vmatprep.subr.bf16.mxu0 %v377
  %475 = vmatpush1.bf16.msra.mxu0 %v376
  %476 = vmatprep.mubr.bf16.mxu0 %v121
  %477 = vmatmul.mubr.bf16.gmra.mrb[0].mxu0 %v120
  %v478 = vpop.f32.mrb[0].mxu0
  %v479 = vadd.f32 %v97, %v478
  %v480 = vpop.f32.mrb[0].mxu0
  %v481 = vadd.f32 %v101, %v480
  %v482 = vpop.f32.mrb[0].mxu0
  %v483 = vadd.f32 %v97, %v482
  %v484 = vpop.f32.mrb[0].mxu0
  %v485 = vadd.f32 %v101, %v484
  %486 = vdwg.mxu0
  %487 = vmatprep.subr.bf16.mxu0 %v319
  %488 = vmatpush1.bf16.msra.mxu0 %v318
  %489 = vmatprep.subr.bf16.mxu0 %v323
  %490 = vmatpush1.bf16.msra.mxu0 %v322
  %491 = vmatprep.subr.bf16.mxu0 %v327
  %492 = vmatpush1.bf16.msra.mxu0 %v326
  %493 = vmatprep.subr.bf16.mxu0 %v331
  %494 = vmatpush1.bf16.msra.mxu0 %v330
  %495 = vmatprep.subr.bf16.mxu0 %v335
  %496 = vmatpush1.bf16.msra.mxu0 %v334
  %497 = vmatprep.subr.bf16.mxu0 %v339
  %498 = vmatpush1.bf16.msra.mxu0 %v338
  %499 = vmatprep.subr.bf16.mxu0 %v343
  %500 = vmatpush1.bf16.msra.mxu0 %v342
  %501 = vmatprep.subr.bf16.mxu0 %v347
  %502 = vmatpush1.bf16.msra.mxu0 %v346
  %503 = vmatprep.subr.bf16.mxu0 %v351
  %504 = vmatpush1.bf16.msra.mxu0 %v350
  %505 = vmatprep.subr.bf16.mxu0 %v355
  %506 = vmatpush1.bf16.msra.mxu0 %v354
  %507 = vmatprep.subr.bf16.mxu0 %v359
  %508 = vmatpush1.bf16.msra.mxu0 %v358
  %509 = vmatprep.subr.bf16.mxu0 %v363
  %510 = vmatpush1.bf16.msra.mxu0 %v362
  %511 = vmatprep.subr.bf16.mxu0 %v367
  %512 = vmatpush1.bf16.msra.mxu0 %v366
  %513 = vmatprep.subr.bf16.mxu0 %v371
  %514 = vmatpush1.bf16.msra.mxu0 %v370
  %515 = vmatprep.subr.bf16.mxu0 %v375
  %516 = vmatpush1.bf16.msra.mxu0 %v374
  %517 = vmatprep.subr.bf16.mxu0 %v379
  %518 = vmatpush1.bf16.msra.mxu0 %v378
  %519 = vmatprep.mubr.bf16.mxu0 %v121
  %520 = vmatmul.mubr.bf16.gmra.mrb[0].mxu0 %v120
  %v521 = vpop.f32.mrb[0].mxu0
  %v522 = vadd.f32 %v105, %v521
  %v523 = vpop.f32.mrb[0].mxu0
  %v524 = vadd.f32 %v109, %v523
  %v525 = vpop.f32.mrb[0].mxu0
  %v526 = vadd.f32 %v105, %v525
  %v527 = vpop.f32.mrb[0].mxu0
  %v528 = vadd.f32 %v109, %v527
  %529 = vdwg.mxu0
  %v530 = vmul.f32 %v479, %v479
  %v531 = vmul.f32 %v481, %v481
  %v532 = vmul.f32 %v522, %v522
  %v533 = vmul.f32 %v524, %v524
  %v534 = vmul.f32 %v483, %v483
  %v535 = vmul.f32 %v485, %v485
  %v536 = vmul.f32 %v526, %v526
  %v537 = vmul.f32 %v528, %v528
  %v538 = vmul.f32 %v479, %v530
  %v539 = vmul.f32 %v481, %v531
  %v540 = vmul.f32 %v522, %v532
  %v541 = vmul.f32 %v524, %v533
  %v542 = vmul.f32 %v483, %v534
  %v543 = vmul.f32 %v485, %v535
  %v544 = vmul.f32 %v526, %v536
  %v545 = vmul.f32 %v528, %v537
  %v546 = vmul.f32 %v538, 0.044715
  %v547 = vmul.f32 %v539, 0.044715
  %v548 = vmul.f32 %v540, 0.044715
  %v549 = vmul.f32 %v541, 0.044715
  %v550 = vmul.f32 %v542, 0.044715
  %v551 = vmul.f32 %v543, 0.044715
  %v552 = vmul.f32 %v544, 0.044715
  %v553 = vmul.f32 %v545, 0.044715
  %v554 = vadd.f32 %v479, %v546
  %v555 = vadd.f32 %v481, %v547
  %v556 = vadd.f32 %v522, %v548
  %v557 = vadd.f32 %v524, %v549
  %v558 = vadd.f32 %v483, %v550
  %v559 = vadd.f32 %v485, %v551
  %v560 = vadd.f32 %v526, %v552
  %v561 = vadd.f32 %v528, %v553
  %v562 = vmul.f32 %v554, 0.7978846
  %v563 = vmul.f32 %v555, 0.7978846
  %v564 = vmul.f32 %v556, 0.7978846
  %v565 = vmul.f32 %v557, 0.7978846
  %v566 = vmul.f32 %v558, 0.7978846
  %v567 = vmul.f32 %v559, 0.7978846
  %v568 = vmul.f32 %v560, 0.7978846
  %v569 = vmul.f32 %v561, 0.7978846
  %v570 = vtanh.pop %v562
  %v571 = vtanh.pop %v563
  %v572 = vtanh.pop %v564
  %v573 = vtanh.pop %v565
  %v574 = vtanh.pop %v566
  %v575 = vtanh.pop %v567
  %v576 = vtanh.pop %v568
  %v577 = vtanh.pop %v569
  %v578 = vadd.f32 %v570, 1.0
  %v579 = vadd.f32 %v571, 1.0
  %v580 = vadd.f32 %v572, 1.0
  %v581 = vadd.f32 %v573, 1.0
  %v582 = vadd.f32 %v574, 1.0
  %v583 = vadd.f32 %v575, 1.0
  %v584 = vadd.f32 %v576, 1.0
  %v585 = vadd.f32 %v577, 1.0
  %v586 = vmul.f32 %v578, 0.5
  %v587 = vmul.f32 %v579, 0.5
  %v588 = vmul.f32 %v580, 0.5
  %v589 = vmul.f32 %v581, 0.5
  %v590 = vmul.f32 %v582, 0.5
  %v591 = vmul.f32 %v583, 0.5
  %v592 = vmul.f32 %v584, 0.5
  %v593 = vmul.f32 %v585, 0.5
  %v594 = vmul.f32 %v479, %v586
  %v595 = vmul.f32 %v481, %v587
  %v596 = vmul.f32 %v522, %v588
  %v597 = vmul.f32 %v524, %v589
  %v598 = vmul.f32 %v483, %v590
  %v599 = vmul.f32 %v485, %v591
  %v600 = vmul.f32 %v526, %v592
  %v601 = vmul.f32 %v528, %v593
  %v602 = vpack.c.bf16 %v598, %v594
  %v603 = vpack.c.bf16 %v599, %v595
  %v604 = vpack.c.bf16 %v600, %v596
  %v605 = vpack.c.bf16 %v601, %v597
  %v606 = vld [vmem:[%s3] sm:$0xff]
  %v607 = vld [vmem:[%s3 + $0x8] sm:$0xff]
  %v608 = vld [vmem:[%s3 + $0x10] sm:$0xff]
  %v609 = vld [vmem:[%s3 + $0x18] sm:$0xff]
  %v610 = vld [vmem:[%s3 + $0x20] sm:$0xff]
  %v611 = vld [vmem:[%s3 + $0x28] sm:$0xff]
  %v612 = vld [vmem:[%s3 + $0x30] sm:$0xff]
  %v613 = vld [vmem:[%s3 + $0x38] sm:$0xff]
  %v614 = vld [vmem:[%s3 + $0x40] sm:$0xff]
  %v615 = vld [vmem:[%s3 + $0x48] sm:$0xff]
  %v616 = vld [vmem:[%s3 + $0x50] sm:$0xff]
  %v617 = vld [vmem:[%s3 + $0x58] sm:$0xff]
  %v618 = vld [vmem:[%s3 + $0x60] sm:$0xff]
  %v619 = vld [vmem:[%s3 + $0x68] sm:$0xff]
  %v620 = vld [vmem:[%s3 + $0x70] sm:$0xff]
  %v621 = vld [vmem:[%s3 + $0x78] sm:$0xff]
  %v622 = vld [vmem:[%s3 + $0x80] sm:$0xff]
  %v623 = vld [vmem:[%s3 + $0x88] sm:$0xff]
  %v624 = vld [vmem:[%s3 + $0x90] sm:$0xff]
  %v625 = vld [vmem:[%s3 + $0x98] sm:$0xff]
  %v626 = vld [vmem:[%s3 + $0xa0] sm:$0xff]
  %v627 = vld [vmem:[%s3 + $0xa8] sm:$0xff]
  %v628 = vld [vmem:[%s3 + $0xb0] sm:$0xff]
  %v629 = vld [vmem:[%s3 + $0xb8] sm:$0xff]
  %v630 = vld [vmem:[%s3 + $0xc0] sm:$0xff]
  %v631 = vld [vmem:[%s3 + $0xc8] sm:$0xff]
  %v632 = vld [vmem:[%s3 + $0xd0] sm:$0xff]
  %v633 = vld [vmem:[%s3 + $0xd8] sm:$0xff]
  %v634 = vld [vmem:[%s3 + $0xe0] sm:$0xff]
  %v635 = vld [vmem:[%s3 + $0xe8] sm:$0xff]
  %v636 = vld [vmem:[%s3 + $0xf0] sm:$0xff]
  %v637 = vld [vmem:[%s3 + $0xf8] sm:$0xff]
  %v638 = vld [vmem:[%s3 + $0x100] sm:$0xff]
  %v639 = vld [vmem:[%s3 + $0x108] sm:$0xff]
  %v640 = vld [vmem:[%s3 + $0x110] sm:$0xff]
  %v641 = vld [vmem:[%s3 + $0x118] sm:$0xff]
  %v642 = vld [vmem:[%s3 + $0x120] sm:$0xff]
  %v643 = vld [vmem:[%s3 + $0x128] sm:$0xff]
  %v644 = vld [vmem:[%s3 + $0x130] sm:$0xff]
  %v645 = vld [vmem:[%s3 + $0x138] sm:$0xff]
  %v646 = vld [vmem:[%s3 + $0x140] sm:$0xff]
  %v647 = vld [vmem:[%s3 + $0x148] sm:$0xff]
  %v648 = vld [vmem:[%s3 + $0x150] sm:$0xff]
  %v649 = vld [vmem:[%s3 + $0x158] sm:$0xff]
  %v650 = vld [vmem:[%s3 + $0x160] sm:$0xff]
  %v651 = vld [vmem:[%s3 + $0x168] sm:$0xff]
  %v652 = vld [vmem:[%s3 + $0x170] sm:$0xff]
  %v653 = vld [vmem:[%s3 + $0x178] sm:$0xff]
  %v654 = vld [vmem:[%s3 + $0x180] sm:$0xff]
  %v655 = vld [vmem:[%s3 + $0x188] sm:$0xff]
  %v656 = vld [vmem:[%s3 + $0x190] sm:$0xff]
  %v657 = vld [vmem:[%s3 + $0x198] sm:$0xff]
  %v658 = vld [vmem:[%s3 + $0x1a0] sm:$0xff]
  %v659 = vld [vmem:[%s3 + $0x1a8] sm:$0xff]
  %v660 = vld [vmem:[%s3 + $0x1b0] sm:$0xff]
  %v661 = vld [vmem:[%s3 + $0x1b8] sm:$0xff]
  %v662 = vld [vmem:[%s3 + $0x1c0] sm:$0xff]
  %v663 = vld [vmem:[%s3 + $0x1c8] sm:$0xff]
  %v664 = vld [vmem:[%s3 + $0x1d0] sm:$0xff]
  %v665 = vld [vmem:[%s3 + $0x1d8] sm:$0xff]
  %v666 = vld [vmem:[%s3 + $0x1e0] sm:$0xff]
  %v667 = vld [vmem:[%s3 + $0x1e8] sm:$0xff]
  %v668 = vld [vmem:[%s3 + $0x1f0] sm:$0xff]
  %v669 = vld [vmem:[%s3 + $0x1f8] sm:$0xff]
  %v670 = vld [vmem:[%s4] sm:$0x3]
  %v672 = vlaneseq
  %v673 = vshrl.u32 %v672, 7
  %v674 = vsub.s32 0, %v673
  %v675 = vrot.slane %v670, %v674
  %v676 = vlaneseq
  %v677 = vshrl.u32 %v676, 7
  %v678 = vsub.s32 1, %v677
  %v679 = vrot.slane %v670, %v678
  %v746 = vunpack.c.l.b16 %v606
  %v747 = vunpack.c.h.b16 %v606
  %v748 = vunpack.c.l.b16 %v607
  %v749 = vunpack.c.h.b16 %v607
  %v750 = vunpack.c.l.b16 %v608
  %v751 = vunpack.c.h.b16 %v608
  %v752 = vunpack.c.l.b16 %v609
  %v753 = vunpack.c.h.b16 %v609
  %v754 = vunpack.c.l.b16 %v610
  %v755 = vunpack.c.h.b16 %v610
  %v756 = vunpack.c.l.b16 %v611
  %v757 = vunpack.c.h.b16 %v611
  %v758 = vunpack.c.l.b16 %v612
  %v759 = vunpack.c.h.b16 %v612
  %v760 = vunpack.c.l.b16 %v613
  %v761 = vunpack.c.h.b16 %v613
  %v762 = vunpack.c.l.b16 %v614
  %v763 = vunpack.c.h.b16 %v614
  %v764 = vunpack.c.l.b16 %v615
  %v765 = vunpack.c.h.b16 %v615
  %v766 = vunpack.c.l.b16 %v616
  %v767 = vunpack.c.h.b16 %v616
  %v768 = vunpack.c.l.b16 %v617
  %v769 = vunpack.c.h.b16 %v617
  %v770 = vunpack.c.l.b16 %v618
  %v771 = vunpack.c.h.b16 %v618
  %v772 = vunpack.c.l.b16 %v619
  %v773 = vunpack.c.h.b16 %v619
  %v774 = vunpack.c.l.b16 %v620
  %v775 = vunpack.c.h.b16 %v620
  %v776 = vunpack.c.l.b16 %v621
  %v777 = vunpack.c.h.b16 %v621
  %v778 = vunpack.c.l.b16 %v622
  %v779 = vunpack.c.h.b16 %v622
  %v780 = vunpack.c.l.b16 %v623
  %v781 = vunpack.c.h.b16 %v623
  %v782 = vunpack.c.l.b16 %v624
  %v783 = vunpack.c.h.b16 %v624
  %v784 = vunpack.c.l.b16 %v625
  %v785 = vunpack.c.h.b16 %v625
  %v786 = vunpack.c.l.b16 %v626
  %v787 = vunpack.c.h.b16 %v626
  %v788 = vunpack.c.l.b16 %v627
  %v789 = vunpack.c.h.b16 %v627
  %v790 = vunpack.c.l.b16 %v628
  %v791 = vunpack.c.h.b16 %v628
  %v792 = vunpack.c.l.b16 %v629
  %v793 = vunpack.c.h.b16 %v629
  %v794 = vunpack.c.l.b16 %v630
  %v795 = vunpack.c.h.b16 %v630
  %v796 = vunpack.c.l.b16 %v631
  %v797 = vunpack.c.h.b16 %v631
  %v798 = vunpack.c.l.b16 %v632
  %v799 = vunpack.c.h.b16 %v632
  %v800 = vunpack.c.l.b16 %v633
  %v801 = vunpack.c.h.b16 %v633
  %v802 = vunpack.c.l.b16 %v634
  %v803 = vunpack.c.h.b16 %v634
  %v804 = vunpack.c.l.b16 %v635
  %v805 = vunpack.c.h.b16 %v635
  %v806 = vunpack.c.l.b16 %v636
  %v807 = vunpack.c.h.b16 %v636
  %v808 = vunpack.c.l.b16 %v637
  %v809 = vunpack.c.h.b16 %v637
  %v810 = vunpack.c.l.b16 %v638
  %v811 = vunpack.c.h.b16 %v638
  %v812 = vunpack.c.l.b16 %v639
  %v813 = vunpack.c.h.b16 %v639
  %v814 = vunpack.c.l.b16 %v640
  %v815 = vunpack.c.h.b16 %v640
  %v816 = vunpack.c.l.b16 %v641
  %v817 = vunpack.c.h.b16 %v641
  %v818 = vunpack.c.l.b16 %v642
  %v819 = vunpack.c.h.b16 %v642
  %v820 = vunpack.c.l.b16 %v643
  %v821 = vunpack.c.h.b16 %v643
  %v822 = vunpack.c.l.b16 %v644
  %v823 = vunpack.c.h.b16 %v644
  %v824 = vunpack.c.l.b16 %v645
  %v825 = vunpack.c.h.b16 %v645
  %v826 = vunpack.c.l.b16 %v646
  %v827 = vunpack.c.h.b16 %v646
  %v828 = vunpack.c.l.b16 %v647
  %v829 = vunpack.c.h.b16 %v647
  %v830 = vunpack.c.l.b16 %v648
  %v831 = vunpack.c.h.b16 %v648
  %v832 = vunpack.c.l.b16 %v649
  %v833 = vunpack.c.h.b16 %v649
  %v834 = vunpack.c.l.b16 %v650
  %v835 = vunpack.c.h.b16 %v650
  %v836 = vunpack.c.l.b16 %v651
  %v837 = vunpack.c.h.b16 %v651
  %v838 = vunpack.c.l.b16 %v652
  %v839 = vunpack.c.h.b16 %v652
  %v840 = vunpack.c.l.b16 %v653
  %v841 = vunpack.c.h.b16 %v653
  %v842 = vunpack.c.l.b16 %v654
  %v843 = vunpack.c.h.b16 %v654
  %v844 = vunpack.c.l.b16 %v655
  %v845 = vunpack.c.h.b16 %v655
  %v846 = vunpack.c.l.b16 %v656
  %v847 = vunpack.c.h.b16 %v656
  %v848 = vunpack.c.l.b16 %v657
  %v849 = vunpack.c.h.b16 %v657
  %v850 = vunpack.c.l.b16 %v658
  %v851 = vunpack.c.h.b16 %v658
  %v852 = vunpack.c.l.b16 %v659
  %v853 = vunpack.c.h.b16 %v659
  %v854 = vunpack.c.l.b16 %v660
  %v855 = vunpack.c.h.b16 %v660
  %v856 = vunpack.c.l.b16 %v661
  %v857 = vunpack.c.h.b16 %v661
  %v858 = vunpack.c.l.b16 %v662
  %v859 = vunpack.c.h.b16 %v662
  %v860 = vunpack.c.l.b16 %v663
  %v861 = vunpack.c.h.b16 %v663
  %v862 = vunpack.c.l.b16 %v664
  %v863 = vunpack.c.h.b16 %v664
  %v864 = vunpack.c.l.b16 %v665
  %v865 = vunpack.c.h.b16 %v665
  %v866 = vunpack.c.l.b16 %v666
  %v867 = vunpack.c.h.b16 %v666
  %v868 = vunpack.c.l.b16 %v667
  %v869 = vunpack.c.h.b16 %v667
  %v870 = vunpack.c.l.b16 %v668
  %v871 = vunpack.c.h.b16 %v668
  %v872 = vunpack.c.l.b16 %v669
  %v873 = vunpack.c.h.b16 %v669
  %v874 = vpack.c.b16 %v748, %v746
  %v875 = vpack.c.b16 %v749, %v747
  %v876 = vpack.c.b16 %v752, %v750
  %v877 = vpack.c.b16 %v753, %v751
  %v878 = vpack.c.b16 %v756, %v754
  %v879 = vpack.c.b16 %v757, %v755
  %v880 = vpack.c.b16 %v760, %v758
  %v881 = vpack.c.b16 %v761, %v759
  %v882 = vpack.c.b16 %v764, %v762
  %v883 = vpack.c.b16 %v765, %v763
  %v884 = vpack.c.b16 %v768, %v766
  %v885 = vpack.c.b16 %v769, %v767
  %v886 = vpack.c.b16 %v772, %v770
  %v887 = vpack.c.b16 %v773, %v771
  %v888 = vpack.c.b16 %v776, %v774
  %v889 = vpack.c.b16 %v777, %v775
  %v890 = vpack.c.b16 %v780, %v778
  %v891 = vpack.c.b16 %v781, %v779
  %v892 = vpack.c.b16 %v784, %v782
  %v893 = vpack.c.b16 %v785, %v783
  %v894 = vpack.c.b16 %v788, %v786
  %v895 = vpack.c.b16 %v789, %v787
  %v896 = vpack.c.b16 %v792, %v790
  %v897 = vpack.c.b16 %v793, %v791
  %v898 = vpack.c.b16 %v796, %v794
  %v899 = vpack.c.b16 %v797, %v795
  %v900 = vpack.c.b16 %v800, %v798
  %v901 = vpack.c.b16 %v801, %v799
  %v902 = vpack.c.b16 %v804, %v802
  %v903 = vpack.c.b16 %v805, %v803
  %v904 = vpack.c.b16 %v808, %v806
  %v905 = vpack.c.b16 %v809, %v807
  %v906 = vpack.c.b16 %v812, %v810
  %v907 = vpack.c.b16 %v813, %v811
  %v908 = vpack.c.b16 %v816, %v814
  %v909 = vpack.c.b16 %v817, %v815
  %v910 = vpack.c.b16 %v820, %v818
  %v911 = vpack.c.b16 %v821, %v819
  %v912 = vpack.c.b16 %v824, %v822
  %v913 = vpack.c.b16 %v825, %v823
  %v914 = vpack.c.b16 %v828, %v826
  %v915 = vpack.c.b16 %v829, %v827
  %v916 = vpack.c.b16 %v832, %v830
  %v917 = vpack.c.b16 %v833, %v831
  %v918 = vpack.c.b16 %v836, %v834
  %v919 = vpack.c.b16 %v837, %v835
  %v920 = vpack.c.b16 %v840, %v838
  %v921 = vpack.c.b16 %v841, %v839
  %v922 = vpack.c.b16 %v844, %v842
  %v923 = vpack.c.b16 %v845, %v843
  %v924 = vpack.c.b16 %v848, %v846
  %v925 = vpack.c.b16 %v849, %v847
  %v926 = vpack.c.b16 %v852, %v850
  %v927 = vpack.c.b16 %v853, %v851
  %v928 = vpack.c.b16 %v856, %v854
  %v929 = vpack.c.b16 %v857, %v855
  %v930 = vpack.c.b16 %v860, %v858
  %v931 = vpack.c.b16 %v861, %v859
  %v932 = vpack.c.b16 %v864, %v862
  %v933 = vpack.c.b16 %v865, %v863
  %v934 = vpack.c.b16 %v868, %v866
  %v935 = vpack.c.b16 %v869, %v867
  %v936 = vpack.c.b16 %v872, %v870
  %v937 = vpack.c.b16 %v873, %v871
  %1002 = vmatprep.subr.bf16.mxu0 %v875
  %1003 = vmatpush1.bf16.msra.mxu0 %v874
  %1004 = vmatprep.subr.bf16.mxu0 %v877
  %1005 = vmatpush1.bf16.msra.mxu0 %v876
  %1006 = vmatprep.subr.bf16.mxu0 %v879
  %1007 = vmatpush1.bf16.msra.mxu0 %v878
  %1008 = vmatprep.subr.bf16.mxu0 %v881
  %1009 = vmatpush1.bf16.msra.mxu0 %v880
  %1010 = vmatprep.subr.bf16.mxu0 %v883
  %1011 = vmatpush1.bf16.msra.mxu0 %v882
  %1012 = vmatprep.subr.bf16.mxu0 %v885
  %1013 = vmatpush1.bf16.msra.mxu0 %v884
  %1014 = vmatprep.subr.bf16.mxu0 %v887
  %1015 = vmatpush1.bf16.msra.mxu0 %v886
  %1016 = vmatprep.subr.bf16.mxu0 %v889
  %1017 = vmatpush1.bf16.msra.mxu0 %v888
  %1018 = vmatprep.subr.bf16.mxu0 %v891
  %1019 = vmatpush1.bf16.msra.mxu0 %v890
  %1020 = vmatprep.subr.bf16.mxu0 %v893
  %1021 = vmatpush1.bf16.msra.mxu0 %v892
  %1022 = vmatprep.subr.bf16.mxu0 %v895
  %1023 = vmatpush1.bf16.msra.mxu0 %v894
  %1024 = vmatprep.subr.bf16.mxu0 %v897
  %1025 = vmatpush1.bf16.msra.mxu0 %v896
  %1026 = vmatprep.subr.bf16.mxu0 %v899
  %1027 = vmatpush1.bf16.msra.mxu0 %v898
  %1028 = vmatprep.subr.bf16.mxu0 %v901
  %1029 = vmatpush1.bf16.msra.mxu0 %v900
  %1030 = vmatprep.subr.bf16.mxu0 %v903
  %1031 = vmatpush1.bf16.msra.mxu0 %v902
  %1032 = vmatprep.subr.bf16.mxu0 %v905
  %1033 = vmatpush1.bf16.msra.mxu0 %v904
  %1034 = vmatprep.mubr.bf16.mxu0 %v603
  %1035 = vmatmul.mubr.bf16.gmra.mrb[0].mxu0 %v602
  %v1036 = vpop.f32.mrb[0].mxu0
  %v1037 = vadd.f32 %v675, %v1036
  %v1038 = vpop.f32.mrb[0].mxu0
  %v1039 = vadd.f32 %v679, %v1038
  %v1040 = vpop.f32.mrb[0].mxu0
  %v1041 = vadd.f32 %v675, %v1040
  %v1042 = vpop.f32.mrb[0].mxu0
  %v1043 = vadd.f32 %v679, %v1042
  %1044 = vdwg.mxu0
  %1045 = vmatprep.subr.bf16.mxu0 %v907
  %1046 = vmatpush1.bf16.msra.mxu0 %v906
  %1047 = vmatprep.subr.bf16.mxu0 %v909
  %1048 = vmatpush1.bf16.msra.mxu0 %v908
  %1049 = vmatprep.subr.bf16.mxu0 %v911
  %1050 = vmatpush1.bf16.msra.mxu0 %v910
  %1051 = vmatprep.subr.bf16.mxu0 %v913
  %1052 = vmatpush1.bf16.msra.mxu0 %v912
  %1053 = vmatprep.subr.bf16.mxu0 %v915
  %1054 = vmatpush1.bf16.msra.mxu0 %v914
  %1055 = vmatprep.subr.bf16.mxu0 %v917
  %1056 = vmatpush1.bf16.msra.mxu0 %v916
  %1057 = vmatprep.subr.bf16.mxu0 %v919
  %1058 = vmatpush1.bf16.msra.mxu0 %v918
  %1059 = vmatprep.subr.bf16.mxu0 %v921
  %1060 = vmatpush1.bf16.msra.mxu0 %v920
  %1061 = vmatprep.subr.bf16.mxu0 %v923
  %1062 = vmatpush1.bf16.msra.mxu0 %v922
  %1063 = vmatprep.subr.bf16.mxu0 %v925
  %1064 = vmatpush1.bf16.msra.mxu0 %v924
  %1065 = vmatprep.subr.bf16.mxu0 %v927
  %1066 = vmatpush1.bf16.msra.mxu0 %v926
  %1067 = vmatprep.subr.bf16.mxu0 %v929
  %1068 = vmatpush1.bf16.msra.mxu0 %v928
  %1069 = vmatprep.subr.bf16.mxu0 %v931
  %1070 = vmatpush1.bf16.msra.mxu0 %v930
  %1071 = vmatprep.subr.bf16.mxu0 %v933
  %1072 = vmatpush1.bf16.msra.mxu0 %v932
  %1073 = vmatprep.subr.bf16.mxu0 %v935
  %1074 = vmatpush1.bf16.msra.mxu0 %v934
  %1075 = vmatprep.subr.bf16.mxu0 %v937
  %1076 = vmatpush1.bf16.msra.mxu0 %v936
  %1077 = vmatprep.mubr.bf16.mxu0 %v605
  %1078 = vmatmul.mubr.bf16.gmra.mrb[0].mxu0 %v604
  %v1079 = vpop.f32.mrb[0].mxu0
  %v1080 = vadd.f32 %v1037, %v1079
  %v1081 = vpop.f32.mrb[0].mxu0
  %v1082 = vadd.f32 %v1039, %v1081
  %v1083 = vpop.f32.mrb[0].mxu0
  %v1084 = vadd.f32 %v1041, %v1083
  %v1085 = vpop.f32.mrb[0].mxu0
  %v1086 = vadd.f32 %v1043, %v1085
  %1087 = vdwg.mxu0
  %v1088 = vunpack.c.l.bf16 %v26
  %v1089 = vunpack.c.h.bf16 %v26
  %v1090 = vunpack.c.l.bf16 %v27
  %v1091 = vunpack.c.h.bf16 %v27
  %v1092 = vadd.f32 %v1080, %v1088
  %v1093 = vadd.f32 %v1082, %v1089
  %v1094 = vadd.f32 %v1084, %v1090
  %v1095 = vadd.f32 %v1086, %v1091
  %v1096 = vadd.f32 %v1092, %v1093
  %1097 = vadd.xlane.f32.xlu0 %v1096
  %v1098 = vpop.xlane.xlu0 %1097
  %v1099 = vadd.f32 %v1094, %v1095
  %1100 = vadd.xlane.f32.xlu0 %v1099
  %v1101 = vpop.xlane.xlu0 %1100
  %v1102 = vrcp.pop 256.0
  %v1103 = vmul.f32 %v1098, %v1102
  %v1104 = vmul.f32 %v1101, %v1102
  %v1105 = vsub.f32 %v1092, %v1103
  %v1106 = vsub.f32 %v1093, %v1103
  %v1107 = vsub.f32 %v1094, %v1104
  %v1108 = vsub.f32 %v1095, %v1104
  %v1109 = vmul.f32 %v1105, %v1105
  %v1110 = vmul.f32 %v1106, %v1106
  %v1111 = vmul.f32 %v1107, %v1107
  %v1112 = vmul.f32 %v1108, %v1108
  %v1113 = vadd.f32 %v1109, %v1110
  %1114 = vadd.xlane.f32.xlu0 %v1113
  %v1115 = vpop.xlane.xlu0 %1114
  %v1116 = vadd.f32 %v1111, %v1112
  %1117 = vadd.xlane.f32.xlu0 %v1116
  %v1118 = vpop.xlane.xlu0 %1117
  %v1119 = vmul.f32 %v1115, %v1102
  %v1120 = vmul.f32 %v1118, %v1102
  %v1121 = vadd.f32 %v1119, 1e-12
  %v1122 = vadd.f32 %v1120, 1e-12
  %v1123 = vrsqrt.pop %v1121
  %v1124 = vrsqrt.pop %v1122
  %v1125 = vmul.f32 %v1105, %v1123
  %v1126 = vmul.f32 %v1106, %v1123
  %v1127 = vmul.f32 %v1107, %v1124
  %v1128 = vmul.f32 %v1108, %v1124
  %v1129 = vld [vmem:[%s5] sm:$0x3]
  %v1131 = vlaneseq
  %v1132 = vshrl.u32 %v1131, 7
  %v1133 = vsub.s32 0, %v1132
  %v1134 = vrot.slane %v1129, %v1133
  %v1135 = vlaneseq
  %v1136 = vshrl.u32 %v1135, 7
  %v1137 = vsub.s32 1, %v1136
  %v1138 = vrot.slane %v1129, %v1137
  %v1141 = vmul.f32 %v1125, %v1134
  %v1142 = vmul.f32 %v1126, %v1138
  %v1143 = vmul.f32 %v1127, %v1134
  %v1144 = vmul.f32 %v1128, %v1138
  %v1145 = vld [vmem:[%s6] sm:$0x3]
  %v1147 = vlaneseq
  %v1148 = vshrl.u32 %v1147, 7
  %v1149 = vsub.s32 0, %v1148
  %v1150 = vrot.slane %v1145, %v1149
  %v1151 = vlaneseq
  %v1152 = vshrl.u32 %v1151, 7
  %v1153 = vsub.s32 1, %v1152
  %v1154 = vrot.slane %v1145, %v1153
  %v1157 = vadd.f32 %v1141, %v1150
  %v1158 = vadd.f32 %v1142, %v1154
  %v1159 = vadd.f32 %v1143, %v1150
  %v1160 = vadd.f32 %v1144, %v1154
  %v1161 = vpack.c.bf16 %v1159, %v1157
  %v1162 = vpack.c.bf16 %v1160, %v1158
  %v1165 = vunpack.c.l.b16 %v1161
  %v1166 = vunpack.c.l.b16 %v1162
  %v1167 = vunpack.c.h.b16 %v1161
  %v1168 = vunpack.c.h.b16 %v1162
  %v1169 = vpack.c.b16 %v1166, %v1165
  %v1170 = vpack.c.b16 %v1168, %v1167
  %1173 = vst [vmem:[%s7] sm:$0xff] %v1169
  %1174 = vst [vmem:[%s7 + $0x8] sm:$0xff] %v1170
  // Predicated region
  $region30: #{macbert_forward.14} parent=0 // pred_check
    _
  $region31: #{macbert_forward.14} parent=0 // pred_check_branch
    %1176 = sbr.rel (0) target = $region33
  $region32: #{macbert_forward.14} parent=0 // pred_region
    _
  $region33: #{macbert_forward.14} parent=0 // pred_fallthru
    _
  // Predicated region
  $region34: #{macbert_forward.14} parent=0 // pred_check
    _
  $region35: #{macbert_forward.14} parent=0 // pred_check_branch
    %1178 = sbr.rel (0) target = $region37
  $region36: #{macbert_forward.14} parent=0 // pred_region
    _
  $region37: #{macbert_forward.14} parent=0 // pred_fallthru
    _

// kernel: macbert_forward.19
$region0: #{macbert_forward.19}
  #allocation0 [shape = 'u32[]', space=smem, size = 0x4, offset = 0x4, fixed_abs, tag = 'smem constant byte address 0x4 - core index']
  #allocation1 [shape = 'u32[144,128]{1,0:T(1,128)}', space=vmem, size = 0x12000, scoped, tag = 'internal scratch']
  #allocation2 [shape = 'bf16[16,256]{1,0:T(16,128)(2,1)}', space=vmem, size = 0x2000, scoped, tag = 'scratch operand']
  #allocation3 [shape = 'f32[16,1]{1,0:T(8,128)}', space=vmem, size = 0x2000, scoped, tag = 'scratch operand']
  #allocation4 [shape = 'f32[16,1]{1,0:T(8,128)}', space=vmem, size = 0x2000, scoped, tag = 'scratch operand']
  #allocation5 [shape = 'f32[16,1]{1,0:T(8,128)}', space=vmem, size = 0x2000, scoped, tag = 'scratch operand']
  #allocation6 [shape = 's32[16,1]{1,0:T(8,128)}', space=vmem, size = 0x2000, scoped, tag = 'scratch operand']
  #allocation7 [shape = 'f32[16,1]{1,0:T(8,128)}', space=vmem, size = 0x2000, scoped, tag = 'scratch operand']
  %s0 = inlined_call_operand.vmem [shape: bf16[16,256], index: 0, kind: input, shape index: {}]
  %s1 = inlined_call_operand.vmem [shape: bf16[256,256], index: 1, kind: input, shape index: {}]
  %s2 = inlined_call_operand.vmem [shape: f32[1,256], index: 2, kind: input, shape index: {}]
  %s3 = inlined_call_operand.vmem [shape: f32[1,256], index: 3, kind: input, shape index: {}]
  %s4 = inlined_call_operand.vmem [shape: f32[1,256], index: 4, kind: input, shape index: {}]
  %s5 = inlined_call_operand.vmem [shape: bf16[256,512], index: 5, kind: input, shape index: {}]
  %s6 = inlined_call_operand.vmem [shape: f32[1,512], index: 6, kind: input, shape index: {}]
  %s7 = inlined_call_operand.vmem [shape: s32[16,1], index: 7, kind: input, shape index: {}]
  %s8 = inlined_call_operand.vmem [shape: s32[16,128], index: 8, kind: output, shape index: {0}]
  %s9 = inlined_call_operand.vmem [shape: f32[16,128], index: 9, kind: output, shape index: {1}]
  %10 = xla_tuple %s8, %s9
  %s11 = sld [smem:[#allocation0]]
  $region58: #{macbert_forward.19} parent=0
    _
  %s13 = ssub.s32 1, %s11
  %s14 = scalar_select 0, %s13, %s11
  // Predicated region
  $region2: #{macbert_forward.19} parent=0 // pred_check
    _
  $region3: #{macbert_forward.19} parent=0 // pred_check_branch
    %16 = sbr.rel (0) target = $region5
  $region4: #{macbert_forward.19} parent=0 // pred_region
    _
  $region5: #{macbert_forward.19} parent=0 // pred_fallthru
    _
  // Predicated region
  $region6: #{macbert_forward.19} parent=0 // pred_check
    _
  $region7: #{macbert_forward.19} parent=0 // pred_check_branch
    %18 = sbr.rel (0) target = $region9
  $region8: #{macbert_forward.19} parent=0 // pred_region
    _
  $region9: #{macbert_forward.19} parent=0 // pred_fallthru
    _
  // Predicated region
  $region10: #{macbert_forward.19} parent=0 // pred_check
    _
  $region11: #{macbert_forward.19} parent=0 // pred_check_branch
    %20 = sbr.rel (0) target = $region13
  $region12: #{macbert_forward.19} parent=0 // pred_region
    _
  $region13: #{macbert_forward.19} parent=0 // pred_fallthru
    _
  // Predicated region
  $region14: #{macbert_forward.19} parent=0 // pred_check
    _
  $region15: #{macbert_forward.19} parent=0 // pred_check_branch
    %22 = sbr.rel (0) target = $region17
  $region16: #{macbert_forward.19} parent=0 // pred_region
    _
  $region17: #{macbert_forward.19} parent=0 // pred_fallthru
    _
  // Predicated region
  $region18: #{macbert_forward.19} parent=0 // pred_check
    _
  $region19: #{macbert_forward.19} parent=0 // pred_check_branch
    %24 = sbr.rel (0) target = $region21
  $region20: #{macbert_forward.19} parent=0 // pred_region
    _
  $region21: #{macbert_forward.19} parent=0 // pred_fallthru
    _
  // Predicated region
  $region22: #{macbert_forward.19} parent=0 // pred_check
    _
  $region23: #{macbert_forward.19} parent=0 // pred_check_branch
    %26 = sbr.rel (0) target = $region25
  $region24: #{macbert_forward.19} parent=0 // pred_region
    _
  $region25: #{macbert_forward.19} parent=0 // pred_fallthru
    _
  // Predicated region
  $region26: #{macbert_forward.19} parent=0 // pred_check
    _
  $region27: #{macbert_forward.19} parent=0 // pred_check_branch
    %28 = sbr.rel (0) target = $region29
  $region28: #{macbert_forward.19} parent=0 // pred_region
    _
  $region29: #{macbert_forward.19} parent=0 // pred_fallthru
    _
  // Predicated region
  $region30: #{macbert_forward.19} parent=0 // pred_check
    _
  $region31: #{macbert_forward.19} parent=0 // pred_check_branch
    %30 = sbr.rel (0) target = $region33
  $region32: #{macbert_forward.19} parent=0 // pred_region
    _
  $region33: #{macbert_forward.19} parent=0 // pred_fallthru
    _
  %p31 = scmp.eq.s32.totalorder 0, 0
  // Predicated region
  $region34: #{macbert_forward.19} parent=0 // pred_check
    %p32 = pneg %p31
  $region35: #{macbert_forward.19} parent=0 // pred_check_branch
    %34 = sbr.rel (%p32) target = $region37
  $region36: #{macbert_forward.19} parent=0 // pred_region
    %v35 = vld [vmem:[%s0] sm:$0xff]
    %v36 = vld [vmem:[%s0 + $0x8] sm:$0xff]
    %v37 = vld [vmem:[%s1] sm:$0xff]
    %v38 = vld [vmem:[%s1 + $0x8] sm:$0xff]
    %v39 = vld [vmem:[%s1 + $0x10] sm:$0xff]
    %v40 = vld [vmem:[%s1 + $0x18] sm:$0xff]
    %v41 = vld [vmem:[%s1 + $0x20] sm:$0xff]
    %v42 = vld [vmem:[%s1 + $0x28] sm:$0xff]
    %v43 = vld [vmem:[%s1 + $0x30] sm:$0xff]
    %v44 = vld [vmem:[%s1 + $0x38] sm:$0xff]
    %v45 = vld [vmem:[%s1 + $0x40] sm:$0xff]
    %v46 = vld [vmem:[%s1 + $0x48] sm:$0xff]
    %v47 = vld [vmem:[%s1 + $0x50] sm:$0xff]
    %v48 = vld [vmem:[%s1 + $0x58] sm:$0xff]
    %v49 = vld [vmem:[%s1 + $0x60] sm:$0xff]
    %v50 = vld [vmem:[%s1 + $0x68] sm:$0xff]
    %v51 = vld [vmem:[%s1 + $0x70] sm:$0xff]
    %v52 = vld [vmem:[%s1 + $0x78] sm:$0xff]
    %v53 = vld [vmem:[%s1 + $0x80] sm:$0xff]
    %v54 = vld [vmem:[%s1 + $0x88] sm:$0xff]
    %v55 = vld [vmem:[%s1 + $0x90] sm:$0xff]
    %v56 = vld [vmem:[%s1 + $0x98] sm:$0xff]
    %v57 = vld [vmem:[%s1 + $0xa0] sm:$0xff]
    %v58 = vld [vmem:[%s1 + $0xa8] sm:$0xff]
    %v59 = vld [vmem:[%s1 + $0xb0] sm:$0xff]
    %v60 = vld [vmem:[%s1 + $0xb8] sm:$0xff]
    %v61 = vld [vmem:[%s1 + $0xc0] sm:$0xff]
    %v62 = vld [vmem:[%s1 + $0xc8] sm:$0xff]
    %v63 = vld [vmem:[%s1 + $0xd0] sm:$0xff]
    %v64 = vld [vmem:[%s1 + $0xd8] sm:$0xff]
    %v65 = vld [vmem:[%s1 + $0xe0] sm:$0xff]
    %v66 = vld [vmem:[%s1 + $0xe8] sm:$0xff]
    %v67 = vld [vmem:[%s1 + $0xf0] sm:$0xff]
    %v68 = vld [vmem:[%s1 + $0xf8] sm:$0xff]
    %v69 = vld [vmem:[%s2] sm:$0x3]
    %v71 = vlaneseq
    %v72 = vshrl.u32 %v71, 7
    %v73 = vsub.s32 0, %v72
    %v74 = vrot.slane %v69, %v73
    %v75 = vlaneseq
    %v76 = vshrl.u32 %v75, 7
    %v77 = vsub.s32 1, %v76
    %v78 = vrot.slane %v69, %v77
    %v83 = vunpack.c.l.b16 %v35
    %v84 = vunpack.c.h.b16 %v35
    %v85 = vunpack.c.l.b16 %v36
    %v86 = vunpack.c.h.b16 %v36
    %v87 = vpack.c.b16 %v85, %v83
    %v88 = vpack.c.b16 %v86, %v84
    %v123 = vunpack.c.l.b16 %v37
    %v124 = vunpack.c.h.b16 %v37
    %v125 = vunpack.c.l.b16 %v38
    %v126 = vunpack.c.h.b16 %v38
    %v127 = vunpack.c.l.b16 %v39
    %v128 = vunpack.c.h.b16 %v39
    %v129 = vunpack.c.l.b16 %v40
    %v130 = vunpack.c.h.b16 %v40
    %v131 = vunpack.c.l.b16 %v41
    %v132 = vunpack.c.h.b16 %v41
    %v133 = vunpack.c.l.b16 %v42
    %v134 = vunpack.c.h.b16 %v42
    %v135 = vunpack.c.l.b16 %v43
    %v136 = vunpack.c.h.b16 %v43
    %v137 = vunpack.c.l.b16 %v44
    %v138 = vunpack.c.h.b16 %v44
    %v139 = vunpack.c.l.b16 %v45
    %v140 = vunpack.c.h.b16 %v45
    %v141 = vunpack.c.l.b16 %v46
    %v142 = vunpack.c.h.b16 %v46
    %v143 = vunpack.c.l.b16 %v47
    %v144 = vunpack.c.h.b16 %v47
    %v145 = vunpack.c.l.b16 %v48
    %v146 = vunpack.c.h.b16 %v48
    %v147 = vunpack.c.l.b16 %v49
    %v148 = vunpack.c.h.b16 %v49
    %v149 = vunpack.c.l.b16 %v50
    %v150 = vunpack.c.h.b16 %v50
    %v151 = vunpack.c.l.b16 %v51
    %v152 = vunpack.c.h.b16 %v51
    %v153 = vunpack.c.l.b16 %v52
    %v154 = vunpack.c.h.b16 %v52
    %v155 = vunpack.c.l.b16 %v53
    %v156 = vunpack.c.h.b16 %v53
    %v157 = vunpack.c.l.b16 %v54
    %v158 = vunpack.c.h.b16 %v54
    %v159 = vunpack.c.l.b16 %v55
    %v160 = vunpack.c.h.b16 %v55
    %v161 = vunpack.c.l.b16 %v56
    %v162 = vunpack.c.h.b16 %v56
    %v163 = vunpack.c.l.b16 %v57
    %v164 = vunpack.c.h.b16 %v57
    %v165 = vunpack.c.l.b16 %v58
    %v166 = vunpack.c.h.b16 %v58
    %v167 = vunpack.c.l.b16 %v59
    %v168 = vunpack.c.h.b16 %v59
    %v169 = vunpack.c.l.b16 %v60
    %v170 = vunpack.c.h.b16 %v60
    %v171 = vunpack.c.l.b16 %v61
    %v172 = vunpack.c.h.b16 %v61
    %v173 = vunpack.c.l.b16 %v62
    %v174 = vunpack.c.h.b16 %v62
    %v175 = vunpack.c.l.b16 %v63
    %v176 = vunpack.c.h.b16 %v63
    %v177 = vunpack.c.l.b16 %v64
    %v178 = vunpack.c.h.b16 %v64
    %v179 = vunpack.c.l.b16 %v65
    %v180 = vunpack.c.h.b16 %v65
    %v181 = vunpack.c.l.b16 %v66
    %v182 = vunpack.c.h.b16 %v66
    %v183 = vunpack.c.l.b16 %v67
    %v184 = vunpack.c.h.b16 %v67
    %v185 = vunpack.c.l.b16 %v68
    %v186 = vunpack.c.h.b16 %v68
    %v187 = vpack.c.b16 %v125, %v123
    %v188 = vpack.c.b16 %v126, %v124
    %v189 = vpack.c.b16 %v129, %v127
    %v190 = vpack.c.b16 %v130, %v128
    %v191 = vpack.c.b16 %v133, %v131
    %v192 = vpack.c.b16 %v134, %v132
    %v193 = vpack.c.b16 %v137, %v135
    %v194 = vpack.c.b16 %v138, %v136
    %v195 = vpack.c.b16 %v141, %v139
    %v196 = vpack.c.b16 %v142, %v140
    %v197 = vpack.c.b16 %v145, %v143
    %v198 = vpack.c.b16 %v146, %v144
    %v199 = vpack.c.b16 %v149, %v147
    %v200 = vpack.c.b16 %v150, %v148
    %v201 = vpack.c.b16 %v153, %v151
    %v202 = vpack.c.b16 %v154, %v152
    %v203 = vpack.c.b16 %v157, %v155
    %v204 = vpack.c.b16 %v158, %v156
    %v205 = vpack.c.b16 %v161, %v159
    %v206 = vpack.c.b16 %v162, %v160
    %v207 = vpack.c.b16 %v165, %v163
    %v208 = vpack.c.b16 %v166, %v164
    %v209 = vpack.c.b16 %v169, %v167
    %v210 = vpack.c.b16 %v170, %v168
    %v211 = vpack.c.b16 %v173, %v171
    %v212 = vpack.c.b16 %v174, %v172
    %v213 = vpack.c.b16 %v177, %v175
    %v214 = vpack.c.b16 %v178, %v176
    %v215 = vpack.c.b16 %v181, %v179
    %v216 = vpack.c.b16 %v182, %v180
    %v217 = vpack.c.b16 %v185, %v183
    %v218 = vpack.c.b16 %v186, %v184
    %251 = vmatprep.subr.bf16.mxu0 %v188
    %252 = vmatpush1.bf16.msra.mxu0 %v187
    %253 = vmatprep.subr.bf16.mxu0 %v190
    %254 = vmatpush1.bf16.msra.mxu0 %v189
    %255 = vmatprep.subr.bf16.mxu0 %v192
    %256 = vmatpush1.bf16.msra.mxu0 %v191
    %257 = vmatprep.subr.bf16.mxu0 %v194
    %258 = vmatpush1.bf16.msra.mxu0 %v193
    %259 = vmatprep.subr.bf16.mxu0 %v196
    %260 = vmatpush1.bf16.msra.mxu0 %v195
    %261 = vmatprep.subr.bf16.mxu0 %v198
    %262 = vmatpush1.bf16.msra.mxu0 %v197
    %263 = vmatprep.subr.bf16.mxu0 %v200
    %264 = vmatpush1.bf16.msra.mxu0 %v199
    %265 = vmatprep.subr.bf16.mxu0 %v202
    %266 = vmatpush1.bf16.msra.mxu0 %v201
    %267 = vmatprep.subr.bf16.mxu0 %v204
    %268 = vmatpush1.bf16.msra.mxu0 %v203
    %269 = vmatprep.subr.bf16.mxu0 %v206
    %270 = vmatpush1.bf16.msra.mxu0 %v205
    %271 = vmatprep.subr.bf16.mxu0 %v208
    %272 = vmatpush1.bf16.msra.mxu0 %v207
    %273 = vmatprep.subr.bf16.mxu0 %v210
    %274 = vmatpush1.bf16.msra.mxu0 %v209
    %275 = vmatprep.subr.bf16.mxu0 %v212
    %276 = vmatpush1.bf16.msra.mxu0 %v211
    %277 = vmatprep.subr.bf16.mxu0 %v214
    %278 = vmatpush1.bf16.msra.mxu0 %v213
    %279 = vmatprep.subr.bf16.mxu0 %v216
    %280 = vmatpush1.bf16.msra.mxu0 %v215
    %281 = vmatprep.subr.bf16.mxu0 %v218
    %282 = vmatpush1.bf16.msra.mxu0 %v217
    %283 = vmatprep.mubr.bf16.mxu0 %v88
    %284 = vmatmul.mubr.bf16.gmra.mrb[0].mxu0 %v87
    %v285 = vpop.f32.mrb[0].mxu0
    %v286 = vadd.f32 %v74, %v285
    %v287 = vpop.f32.mrb[0].mxu0
    %v288 = vadd.f32 %v78, %v287
    %v289 = vpop.f32.mrb[0].mxu0
    %v290 = vadd.f32 %v74, %v289
    %v291 = vpop.f32.mrb[0].mxu0
    %v292 = vadd.f32 %v78, %v291
    %293 = vdwg.mxu0
    %v294 = vmul.f32 %v286, %v286
    %v295 = vmul.f32 %v288, %v288
    %v296 = vmul.f32 %v290, %v290
    %v297 = vmul.f32 %v292, %v292
    %v298 = vmul.f32 %v286, %v294
    %v299 = vmul.f32 %v288, %v295
    %v300 = vmul.f32 %v290, %v296
    %v301 = vmul.f32 %v292, %v297
    %v302 = vmul.f32 %v298, 0.044715
    %v303 = vmul.f32 %v299, 0.044715
    %v304 = vmul.f32 %v300, 0.044715
    %v305 = vmul.f32 %v301, 0.044715
    %v306 = vadd.f32 %v286, %v302
    %v307 = vadd.f32 %v288, %v303
    %v308 = vadd.f32 %v290, %v304
    %v309 = vadd.f32 %v292, %v305
    %v310 = vmul.f32 %v306, 0.7978846
    %v311 = vmul.f32 %v307, 0.7978846
    %v312 = vmul.f32 %v308, 0.7978846
    %v313 = vmul.f32 %v309, 0.7978846
    %v314 = vtanh.pop %v310
    %v315 = vtanh.pop %v311
    %v316 = vtanh.pop %v312
    %v317 = vtanh.pop %v313
    %v318 = vadd.f32 %v314, 1.0
    %v319 = vadd.f32 %v315, 1.0
    %v320 = vadd.f32 %v316, 1.0
    %v321 = vadd.f32 %v317, 1.0
    %v322 = vmul.f32 %v318, 0.5
    %v323 = vmul.f32 %v319, 0.5
    %v324 = vmul.f32 %v320, 0.5
    %v325 = vmul.f32 %v321, 0.5
    %v326 = vmul.f32 %v286, %v322
    %v327 = vmul.f32 %v288, %v323
    %v328 = vmul.f32 %v290, %v324
    %v329 = vmul.f32 %v292, %v325
    %v330 = vadd.f32 %v326, %v327
    %331 = vadd.xlane.f32.xlu0 %v330
    %v332 = vpop.xlane.xlu0 %331
    %v333 = vadd.f32 %v328, %v329
    %334 = vadd.xlane.f32.xlu0 %v333
    %v335 = vpop.xlane.xlu0 %334
    %v336 = vrcp.pop 256.0
    %v337 = vmul.f32 %v332, %v336
    %v338 = vmul.f32 %v335, %v336
    %v339 = vsub.f32 %v326, %v337
    %v340 = vsub.f32 %v327, %v337
    %v341 = vsub.f32 %v328, %v338
    %v342 = vsub.f32 %v329, %v338
    %v343 = vmul.f32 %v339, %v339
    %v344 = vmul.f32 %v340, %v340
    %v345 = vmul.f32 %v341, %v341
    %v346 = vmul.f32 %v342, %v342
    %v347 = vadd.f32 %v343, %v344
    %348 = vadd.xlane.f32.xlu0 %v347
    %v349 = vpop.xlane.xlu0 %348
    %v350 = vadd.f32 %v345, %v346
    %351 = vadd.xlane.f32.xlu0 %v350
    %v352 = vpop.xlane.xlu0 %351
    %v353 = vmul.f32 %v349, %v336
    %v354 = vmul.f32 %v352, %v336
    %v355 = vadd.f32 %v353, 1e-12
    %v356 = vadd.f32 %v354, 1e-12
    %v357 = vrsqrt.pop %v355
    %v358 = vrsqrt.pop %v356
    %v359 = vmul.f32 %v339, %v357
    %v360 = vmul.f32 %v340, %v357
    %v361 = vmul.f32 %v341, %v358
    %v362 = vmul.f32 %v342, %v358
    %v363 = vld [vmem:[%s3] sm:$0x3]
    %v365 = vlaneseq
    %v366 = vshrl.u32 %v365, 7
    %v367 = vsub.s32 0, %v366
    %v368 = vrot.slane %v363, %v367
    %v369 = vlaneseq
    %v370 = vshrl.u32 %v369, 7
    %v371 = vsub.s32 1, %v370
    %v372 = vrot.slane %v363, %v371
    %v375 = vmul.f32 %v359, %v368
    %v376 = vmul.f32 %v360, %v372
    %v377 = vmul.f32 %v361, %v368
    %v378 = vmul.f32 %v362, %v372
    %v379 = vld [vmem:[%s4] sm:$0x3]
    %v381 = vlaneseq
    %v382 = vshrl.u32 %v381, 7
    %v383 = vsub.s32 0, %v382
    %v384 = vrot.slane %v379, %v383
    %v385 = vlaneseq
    %v386 = vshrl.u32 %v385, 7
    %v387 = vsub.s32 1, %v386
    %v388 = vrot.slane %v379, %v387
    %v391 = vadd.f32 %v375, %v384
    %v392 = vadd.f32 %v376, %v388
    %v393 = vadd.f32 %v377, %v384
    %v394 = vadd.f32 %v378, %v388
    %v395 = vpack.c.bf16 %v393, %v391
    %v396 = vpack.c.bf16 %v394, %v392
    %397 = vst [vmem:[#allocation2] sm:$0xff] %v395
    %398 = vst [vmem:[#allocation2 + $0x8] sm:$0xff] %v396
    %vm399 = vcmask 7168
    %400 = vst.msk [vmem:[#allocation3] sm:$0xff] %vm399, -inf
    %401 = vst.msk [vmem:[#allocation3 + $0x8] sm:$0xff] %vm399, -inf
    %402 = vst.msk [vmem:[#allocation4] sm:$0xff] %vm399, 0.0
    %403 = vst.msk [vmem:[#allocation4 + $0x8] sm:$0xff] %vm399, 0.0
    %404 = vst.msk [vmem:[#allocation5] sm:$0xff] %vm399, -inf
    %405 = vst.msk [vmem:[#allocation5 + $0x8] sm:$0xff] %vm399, -inf
    %406 = vst.msk [vmem:[#allocation6] sm:$0xff] %vm399, 0
    %407 = vst.msk [vmem:[#allocation6 + $0x8] sm:$0xff] %vm399, 0
    %408 = vst.msk [vmem:[#allocation7] sm:$0xff] %vm399, 0.0
    %409 = vst.msk [vmem:[#allocation7 + $0x8] sm:$0xff] %vm399, 0.0
  $region37: #{macbert_forward.19} parent=0 // pred_fallthru
    _
  %v410 = vld [vmem:[#allocation2] sm:$0xff]
  %v411 = vld [vmem:[#allocation2 + $0x8] sm:$0xff]
  %v412 = vld [vmem:[%s5] sm:$0xff]
  %v413 = vld [vmem:[%s5 + $0x8] sm:$0xff]
  %v414 = vld [vmem:[%s5 + $0x10] sm:$0xff]
  %v415 = vld [vmem:[%s5 + $0x18] sm:$0xff]
  %v416 = vld [vmem:[%s5 + $0x20] sm:$0xff]
  %v417 = vld [vmem:[%s5 + $0x28] sm:$0xff]
  %v418 = vld [vmem:[%s5 + $0x30] sm:$0xff]
  %v419 = vld [vmem:[%s5 + $0x38] sm:$0xff]
  %v420 = vld [vmem:[%s5 + $0x40] sm:$0xff]
  %v421 = vld [vmem:[%s5 + $0x48] sm:$0xff]
  %v422 = vld [vmem:[%s5 + $0x50] sm:$0xff]
  %v423 = vld [vmem:[%s5 + $0x58] sm:$0xff]
  %v424 = vld [vmem:[%s5 + $0x60] sm:$0xff]
  %v425 = vld [vmem:[%s5 + $0x68] sm:$0xff]
  %v426 = vld [vmem:[%s5 + $0x70] sm:$0xff]
  %v427 = vld [vmem:[%s5 + $0x78] sm:$0xff]
  %v428 = vld [vmem:[%s5 + $0x80] sm:$0xff]
  %v429 = vld [vmem:[%s5 + $0x88] sm:$0xff]
  %v430 = vld [vmem:[%s5 + $0x90] sm:$0xff]
  %v431 = vld [vmem:[%s5 + $0x98] sm:$0xff]
  %v432 = vld [vmem:[%s5 + $0xa0] sm:$0xff]
  %v433 = vld [vmem:[%s5 + $0xa8] sm:$0xff]
  %v434 = vld [vmem:[%s5 + $0xb0] sm:$0xff]
  %v435 = vld [vmem:[%s5 + $0xb8] sm:$0xff]
  %v436 = vld [vmem:[%s5 + $0xc0] sm:$0xff]
  %v437 = vld [vmem:[%s5 + $0xc8] sm:$0xff]
  %v438 = vld [vmem:[%s5 + $0xd0] sm:$0xff]
  %v439 = vld [vmem:[%s5 + $0xd8] sm:$0xff]
  %v440 = vld [vmem:[%s5 + $0xe0] sm:$0xff]
  %v441 = vld [vmem:[%s5 + $0xe8] sm:$0xff]
  %v442 = vld [vmem:[%s5 + $0xf0] sm:$0xff]
  %v443 = vld [vmem:[%s5 + $0xf8] sm:$0xff]
  %v444 = vld [vmem:[%s5 + $0x100] sm:$0xff]
  %v445 = vld [vmem:[%s5 + $0x108] sm:$0xff]
  %v446 = vld [vmem:[%s5 + $0x110] sm:$0xff]
  %v447 = vld [vmem:[%s5 + $0x118] sm:$0xff]
  %v448 = vld [vmem:[%s5 + $0x120] sm:$0xff]
  %v449 = vld [vmem:[%s5 + $0x128] sm:$0xff]
  %v450 = vld [vmem:[%s5 + $0x130] sm:$0xff]
  %v451 = vld [vmem:[%s5 + $0x138] sm:$0xff]
  %v452 = vld [vmem:[%s5 + $0x140] sm:$0xff]
  %v453 = vld [vmem:[%s5 + $0x148] sm:$0xff]
  %v454 = vld [vmem:[%s5 + $0x150] sm:$0xff]
  %v455 = vld [vmem:[%s5 + $0x158] sm:$0xff]
  %v456 = vld [vmem:[%s5 + $0x160] sm:$0xff]
  %v457 = vld [vmem:[%s5 + $0x168] sm:$0xff]
  %v458 = vld [vmem:[%s5 + $0x170] sm:$0xff]
  %v459 = vld [vmem:[%s5 + $0x178] sm:$0xff]
  %v460 = vld [vmem:[%s5 + $0x180] sm:$0xff]
  %v461 = vld [vmem:[%s5 + $0x188] sm:$0xff]
  %v462 = vld [vmem:[%s5 + $0x190] sm:$0xff]
  %v463 = vld [vmem:[%s5 + $0x198] sm:$0xff]
  %v464 = vld [vmem:[%s5 + $0x1a0] sm:$0xff]
  %v465 = vld [vmem:[%s5 + $0x1a8] sm:$0xff]
  %v466 = vld [vmem:[%s5 + $0x1b0] sm:$0xff]
  %v467 = vld [vmem:[%s5 + $0x1b8] sm:$0xff]
  %v468 = vld [vmem:[%s5 + $0x1c0] sm:$0xff]
  %v469 = vld [vmem:[%s5 + $0x1c8] sm:$0xff]
  %v470 = vld [vmem:[%s5 + $0x1d0] sm:$0xff]
  %v471 = vld [vmem:[%s5 + $0x1d8] sm:$0xff]
  %v472 = vld [vmem:[%s5 + $0x1e0] sm:$0xff]
  %v473 = vld [vmem:[%s5 + $0x1e8] sm:$0xff]
  %v474 = vld [vmem:[%s5 + $0x1f0] sm:$0xff]
  %v475 = vld [vmem:[%s5 + $0x1f8] sm:$0xff]
  %v476 = vld [vmem:[%s6] sm:$0xf]
  %v478 = vlaneseq
  %v479 = vshrl.u32 %v478, 7
  %v480 = vsub.s32 0, %v479
  %v481 = vrot.slane %v476, %v480
  %v482 = vlaneseq
  %v483 = vshrl.u32 %v482, 7
  %v484 = vsub.s32 1, %v483
  %v485 = vrot.slane %v476, %v484
  %v486 = vlaneseq
  %v487 = vshrl.u32 %v486, 7
  %v488 = vsub.s32 2, %v487
  %v489 = vrot.slane %v476, %v488
  %v490 = vlaneseq
  %v491 = vshrl.u32 %v490, 7
  %v492 = vsub.s32 3, %v491
  %v493 = vrot.slane %v476, %v492
  %v562 = vunpack.c.l.b16 %v412
  %v563 = vunpack.c.h.b16 %v412
  %v564 = vunpack.c.l.b16 %v413
  %v565 = vunpack.c.h.b16 %v413
  %v566 = vunpack.c.l.b16 %v414
  %v567 = vunpack.c.h.b16 %v414
  %v568 = vunpack.c.l.b16 %v415
  %v569 = vunpack.c.h.b16 %v415
  %v570 = vunpack.c.l.b16 %v416
  %v571 = vunpack.c.h.b16 %v416
  %v572 = vunpack.c.l.b16 %v417
  %v573 = vunpack.c.h.b16 %v417
  %v574 = vunpack.c.l.b16 %v418
  %v575 = vunpack.c.h.b16 %v418
  %v576 = vunpack.c.l.b16 %v419
  %v577 = vunpack.c.h.b16 %v419
  %v578 = vunpack.c.l.b16 %v420
  %v579 = vunpack.c.h.b16 %v420
  %v580 = vunpack.c.l.b16 %v421
  %v581 = vunpack.c.h.b16 %v421
  %v582 = vunpack.c.l.b16 %v422
  %v583 = vunpack.c.h.b16 %v422
  %v584 = vunpack.c.l.b16 %v423
  %v585 = vunpack.c.h.b16 %v423
  %v586 = vunpack.c.l.b16 %v424
  %v587 = vunpack.c.h.b16 %v424
  %v588 = vunpack.c.l.b16 %v425
  %v589 = vunpack.c.h.b16 %v425
  %v590 = vunpack.c.l.b16 %v426
  %v591 = vunpack.c.h.b16 %v426
  %v592 = vunpack.c.l.b16 %v427
  %v593 = vunpack.c.h.b16 %v427
  %v594 = vunpack.c.l.b16 %v428
  %v595 = vunpack.c.h.b16 %v428
  %v596 = vunpack.c.l.b16 %v429
  %v597 = vunpack.c.h.b16 %v429
  %v598 = vunpack.c.l.b16 %v430
  %v599 = vunpack.c.h.b16 %v430
  %v600 = vunpack.c.l.b16 %v431
  %v601 = vunpack.c.h.b16 %v431
  %v602 = vunpack.c.l.b16 %v432
  %v603 = vunpack.c.h.b16 %v432
  %v604 = vunpack.c.l.b16 %v433
  %v605 = vunpack.c.h.b16 %v433
  %v606 = vunpack.c.l.b16 %v434
  %v607 = vunpack.c.h.b16 %v434
  %v608 = vunpack.c.l.b16 %v435
  %v609 = vunpack.c.h.b16 %v435
  %v610 = vunpack.c.l.b16 %v436
  %v611 = vunpack.c.h.b16 %v436
  %v612 = vunpack.c.l.b16 %v437
  %v613 = vunpack.c.h.b16 %v437
  %v614 = vunpack.c.l.b16 %v438
  %v615 = vunpack.c.h.b16 %v438
  %v616 = vunpack.c.l.b16 %v439
  %v617 = vunpack.c.h.b16 %v439
  %v618 = vunpack.c.l.b16 %v440
  %v619 = vunpack.c.h.b16 %v440
  %v620 = vunpack.c.l.b16 %v441
  %v621 = vunpack.c.h.b16 %v441
  %v622 = vunpack.c.l.b16 %v442
  %v623 = vunpack.c.h.b16 %v442
  %v624 = vunpack.c.l.b16 %v443
  %v625 = vunpack.c.h.b16 %v443
  %v626 = vunpack.c.l.b16 %v444
  %v627 = vunpack.c.h.b16 %v444
  %v628 = vunpack.c.l.b16 %v445
  %v629 = vunpack.c.h.b16 %v445
  %v630 = vunpack.c.l.b16 %v446
  %v631 = vunpack.c.h.b16 %v446
  %v632 = vunpack.c.l.b16 %v447
  %v633 = vunpack.c.h.b16 %v447
  %v634 = vunpack.c.l.b16 %v448
  %v635 = vunpack.c.h.b16 %v448
  %v636 = vunpack.c.l.b16 %v449
  %v637 = vunpack.c.h.b16 %v449
  %v638 = vunpack.c.l.b16 %v450
  %v639 = vunpack.c.h.b16 %v450
  %v640 = vunpack.c.l.b16 %v451
  %v641 = vunpack.c.h.b16 %v451
  %v642 = vunpack.c.l.b16 %v452
  %v643 = vunpack.c.h.b16 %v452
  %v644 = vunpack.c.l.b16 %v453
  %v645 = vunpack.c.h.b16 %v453
  %v646 = vunpack.c.l.b16 %v454
  %v647 = vunpack.c.h.b16 %v454
  %v648 = vunpack.c.l.b16 %v455
  %v649 = vunpack.c.h.b16 %v455
  %v650 = vunpack.c.l.b16 %v456
  %v651 = vunpack.c.h.b16 %v456
  %v652 = vunpack.c.l.b16 %v457
  %v653 = vunpack.c.h.b16 %v457
  %v654 = vunpack.c.l.b16 %v458
  %v655 = vunpack.c.h.b16 %v458
  %v656 = vunpack.c.l.b16 %v459
  %v657 = vunpack.c.h.b16 %v459
  %v658 = vunpack.c.l.b16 %v460
  %v659 = vunpack.c.h.b16 %v460
  %v660 = vunpack.c.l.b16 %v461
  %v661 = vunpack.c.h.b16 %v461
  %v662 = vunpack.c.l.b16 %v462
  %v663 = vunpack.c.h.b16 %v462
  %v664 = vunpack.c.l.b16 %v463
  %v665 = vunpack.c.h.b16 %v463
  %v666 = vunpack.c.l.b16 %v464
  %v667 = vunpack.c.h.b16 %v464
  %v668 = vunpack.c.l.b16 %v465
  %v669 = vunpack.c.h.b16 %v465
  %v670 = vunpack.c.l.b16 %v466
  %v671 = vunpack.c.h.b16 %v466
  %v672 = vunpack.c.l.b16 %v467
  %v673 = vunpack.c.h.b16 %v467
  %v674 = vunpack.c.l.b16 %v468
  %v675 = vunpack.c.h.b16 %v468
  %v676 = vunpack.c.l.b16 %v469
  %v677 = vunpack.c.h.b16 %v469
  %v678 = vunpack.c.l.b16 %v470
  %v679 = vunpack.c.h.b16 %v470
  %v680 = vunpack.c.l.b16 %v471
  %v681 = vunpack.c.h.b16 %v471
  %v682 = vunpack.c.l.b16 %v472
  %v683 = vunpack.c.h.b16 %v472
  %v684 = vunpack.c.l.b16 %v473
  %v685 = vunpack.c.h.b16 %v473
  %v686 = vunpack.c.l.b16 %v474
  %v687 = vunpack.c.h.b16 %v474
  %v688 = vunpack.c.l.b16 %v475
  %v689 = vunpack.c.h.b16 %v475
  %v690 = vpack.c.b16 %v566, %v562
  %v691 = vpack.c.b16 %v567, %v563
  %v692 = vpack.c.b16 %v568, %v564
  %v693 = vpack.c.b16 %v569, %v565
  %v694 = vpack.c.b16 %v574, %v570
  %v695 = vpack.c.b16 %v575, %v571
  %v696 = vpack.c.b16 %v576, %v572
  %v697 = vpack.c.b16 %v577, %v573
  %v698 = vpack.c.b16 %v582, %v578
  %v699 = vpack.c.b16 %v583, %v579
  %v700 = vpack.c.b16 %v584, %v580
  %v701 = vpack.c.b16 %v585, %v581
  %v702 = vpack.c.b16 %v590, %v586
  %v703 = vpack.c.b16 %v591, %v587
  %v704 = vpack.c.b16 %v592, %v588
  %v705 = vpack.c.b16 %v593, %v589
  %v706 = vpack.c.b16 %v598, %v594
  %v707 = vpack.c.b16 %v599, %v595
  %v708 = vpack.c.b16 %v600, %v596
  %v709 = vpack.c.b16 %v601, %v597
  %v710 = vpack.c.b16 %v606, %v602
  %v711 = vpack.c.b16 %v607, %v603
  %v712 = vpack.c.b16 %v608, %v604
  %v713 = vpack.c.b16 %v609, %v605
  %v714 = vpack.c.b16 %v614, %v610
  %v715 = vpack.c.b16 %v615, %v611
  %v716 = vpack.c.b16 %v616, %v612
  %v717 = vpack.c.b16 %v617, %v613
  %v718 = vpack.c.b16 %v622, %v618
  %v719 = vpack.c.b16 %v623, %v619
  %v720 = vpack.c.b16 %v624, %v620
  %v721 = vpack.c.b16 %v625, %v621
  %v722 = vpack.c.b16 %v630, %v626
  %v723 = vpack.c.b16 %v631, %v627
  %v724 = vpack.c.b16 %v632, %v628
  %v725 = vpack.c.b16 %v633, %v629
  %v726 = vpack.c.b16 %v638, %v634
  %v727 = vpack.c.b16 %v639, %v635
  %v728 = vpack.c.b16 %v640, %v636
  %v729 = vpack.c.b16 %v641, %v637
  %v730 = vpack.c.b16 %v646, %v642
  %v731 = vpack.c.b16 %v647, %v643
  %v732 = vpack.c.b16 %v648, %v644
  %v733 = vpack.c.b16 %v649, %v645
  %v734 = vpack.c.b16 %v654, %v650
  %v735 = vpack.c.b16 %v655, %v651
  %v736 = vpack.c.b16 %v656, %v652
  %v737 = vpack.c.b16 %v657, %v653
  %v738 = vpack.c.b16 %v662, %v658
  %v739 = vpack.c.b16 %v663, %v659
  %v740 = vpack.c.b16 %v664, %v660
  %v741 = vpack.c.b16 %v665, %v661
  %v742 = vpack.c.b16 %v670, %v666
  %v743 = vpack.c.b16 %v671, %v667
  %v744 = vpack.c.b16 %v672, %v668
  %v745 = vpack.c.b16 %v673, %v669
  %v746 = vpack.c.b16 %v678, %v674
  %v747 = vpack.c.b16 %v679, %v675
  %v748 = vpack.c.b16 %v680, %v676
  %v749 = vpack.c.b16 %v681, %v677
  %v750 = vpack.c.b16 %v686, %v682
  %v751 = vpack.c.b16 %v687, %v683
  %v752 = vpack.c.b16 %v688, %v684
  %v753 = vpack.c.b16 %v689, %v685
  %818 = vmatprep.subr.bf16.mxu0 %v691
  %819 = vmatpush1.bf16.msra.mxu0 %v690
  %820 = vmatprep.subr.bf16.mxu0 %v695
  %821 = vmatpush1.bf16.msra.mxu0 %v694
  %822 = vmatprep.subr.bf16.mxu0 %v699
  %823 = vmatpush1.bf16.msra.mxu0 %v698
  %824 = vmatprep.subr.bf16.mxu0 %v703
  %825 = vmatpush1.bf16.msra.mxu0 %v702
  %826 = vmatprep.subr.bf16.mxu0 %v707
  %827 = vmatpush1.bf16.msra.mxu0 %v706
  %828 = vmatprep.subr.bf16.mxu0 %v711
  %829 = vmatpush1.bf16.msra.mxu0 %v710
  %830 = vmatprep.subr.bf16.mxu0 %v715
  %831 = vmatpush1.bf16.msra.mxu0 %v714
  %832 = vmatprep.subr.bf16.mxu0 %v719
  %833 = vmatpush1.bf16.msra.mxu0 %v718
  %834 = vmatprep.subr.bf16.mxu0 %v723
  %835 = vmatpush1.bf16.msra.mxu0 %v722
  %836 = vmatprep.subr.bf16.mxu0 %v727
  %837 = vmatpush1.bf16.msra.mxu0 %v726
  %838 = vmatprep.subr.bf16.mxu0 %v731
  %839 = vmatpush1.bf16.msra.mxu0 %v730
  %840 = vmatprep.subr.bf16.mxu0 %v735
  %841 = vmatpush1.bf16.msra.mxu0 %v734
  %842 = vmatprep.subr.bf16.mxu0 %v739
  %843 = vmatpush1.bf16.msra.mxu0 %v738
  %844 = vmatprep.subr.bf16.mxu0 %v743
  %845 = vmatpush1.bf16.msra.mxu0 %v742
  %846 = vmatprep.subr.bf16.mxu0 %v747
  %847 = vmatpush1.bf16.msra.mxu0 %v746
  %848 = vmatprep.subr.bf16.mxu0 %v751
  %849 = vmatpush1.bf16.msra.mxu0 %v750
  %850 = vmatprep.mubr.bf16.mxu0 %v411
  %851 = vmatmul.mubr.bf16.gmra.mrb[0].mxu0 %v410
  %v852 = vpop.f32.mrb[0].mxu0
  %v853 = vadd.f32 %v481, %v852
  %v854 = vpop.f32.mrb[0].mxu0
  %v855 = vadd.f32 %v485, %v854
  %v856 = vpop.f32.mrb[0].mxu0
  %v857 = vadd.f32 %v481, %v856
  %v858 = vpop.f32.mrb[0].mxu0
  %v859 = vadd.f32 %v485, %v858
  %860 = vdwg.mxu0
  %861 = vmatprep.subr.bf16.mxu0 %v693
  %862 = vmatpush1.bf16.msra.mxu0 %v692
  %863 = vmatprep.subr.bf16.mxu0 %v697
  %864 = vmatpush1.bf16.msra.mxu0 %v696
  %865 = vmatprep.subr.bf16.mxu0 %v701
  %866 = vmatpush1.bf16.msra.mxu0 %v700
  %867 = vmatprep.subr.bf16.mxu0 %v705
  %868 = vmatpush1.bf16.msra.mxu0 %v704
  %869 = vmatprep.subr.bf16.mxu0 %v709
  %870 = vmatpush1.bf16.msra.mxu0 %v708
  %871 = vmatprep.subr.bf16.mxu0 %v713
  %872 = vmatpush1.bf16.msra.mxu0 %v712
  %873 = vmatprep.subr.bf16.mxu0 %v717
  %874 = vmatpush1.bf16.msra.mxu0 %v716
  %875 = vmatprep.subr.bf16.mxu0 %v721
  %876 = vmatpush1.bf16.msra.mxu0 %v720
  %877 = vmatprep.subr.bf16.mxu0 %v725
  %878 = vmatpush1.bf16.msra.mxu0 %v724
  %879 = vmatprep.subr.bf16.mxu0 %v729
  %880 = vmatpush1.bf16.msra.mxu0 %v728
  %881 = vmatprep.subr.bf16.mxu0 %v733
  %882 = vmatpush1.bf16.msra.mxu0 %v732
  %883 = vmatprep.subr.bf16.mxu0 %v737
  %884 = vmatpush1.bf16.msra.mxu0 %v736
  %885 = vmatprep.subr.bf16.mxu0 %v741
  %886 = vmatpush1.bf16.msra.mxu0 %v740
  %887 = vmatprep.subr.bf16.mxu0 %v745
  %888 = vmatpush1.bf16.msra.mxu0 %v744
  %889 = vmatprep.subr.bf16.mxu0 %v749
  %890 = vmatpush1.bf16.msra.mxu0 %v748
  %891 = vmatprep.subr.bf16.mxu0 %v753
  %892 = vmatpush1.bf16.msra.mxu0 %v752
  %893 = vmatprep.mubr.bf16.mxu0 %v411
  %894 = vmatmul.mubr.bf16.gmra.mrb[0].mxu0 %v410
  %v895 = vpop.f32.mrb[0].mxu0
  %v896 = vadd.f32 %v489, %v895
  %v897 = vpop.f32.mrb[0].mxu0
  %v898 = vadd.f32 %v493, %v897
  %v899 = vpop.f32.mrb[0].mxu0
  %v900 = vadd.f32 %v489, %v899
  %v901 = vpop.f32.mrb[0].mxu0
  %v902 = vadd.f32 %v493, %v901
  %903 = vdwg.mxu0
  %v904 = vlaneseq
  %v905 = vand.u32 %v904, 127
  %v906 = vadd.s32 %v905, 128
  %v907 = vadd.s32 %v905, 256
  %v908 = vadd.s32 %v905, 384
  %s909 = smul.u32 0, 512
  %v910 = vstv %s909
  %v911 = vadd.s32 %v905, %v910
  %v912 = vadd.s32 %v906, %v910
  %v913 = vadd.s32 %v907, %v910
  %v914 = vadd.s32 %v908, %v910
  %v915 = vmax.f32 %v853, %v896
  %v916 = vmax.f32 %v855, %v898
  %v917 = vmax.f32 %v915, %v916
  %918 = vmax.xlane.f32.xlu0 %v917
  %v919 = vpop.xlane.xlu0 %918
  %v920 = vmax.f32 %v857, %v900
  %v921 = vmax.f32 %v859, %v902
  %v922 = vmax.f32 %v920, %v921
  %923 = vmax.xlane.f32.xlu0 %v922
  %v924 = vpop.xlane.xlu0 %923
  %v925 = vld [vmem:[#allocation3] sm:$0xff]
  %v926 = vld [vmem:[#allocation3 + $0x8] sm:$0xff]
  %v927 = vmax.f32 %v925, %v919
  %v928 = vmax.f32 %v926, %v924
  %v929 = vld [vmem:[#allocation4] sm:$0xff]
  %v930 = vld [vmem:[#allocation4 + $0x8] sm:$0xff]
  %v931 = vsub.f32 %v925, %v927
  %v932 = vsub.f32 %v926, %v928
  %v933 = vmul.f32 %v931, 1.442695
  %v934 = vpow.pop %v933
  %v935 = vmul.f32 %v932, 1.442695
  %v936 = vpow.pop %v935
  %v937 = vmul.f32 %v929, %v934
  %v938 = vmul.f32 %v930, %v936
  %940 = vset.pattern.permute.xlu0 0
  %941 = vperm.xlu0 %940, %v927
  %v942 = vpop.permute.xlu0 %941
  %945 = vset.pattern.permute.xlu0 0
  %946 = vperm.xlu0 %945, %v928
  %v947 = vpop.permute.xlu0 %946
  %v949 = vsub.f32 %v853, %v942
  %v950 = vsub.f32 %v855, %v942
  %v951 = vsub.f32 %v896, %v942
  %v952 = vsub.f32 %v898, %v942
  %v953 = vsub.f32 %v857, %v947
  %v954 = vsub.f32 %v859, %v947
  %v955 = vsub.f32 %v900, %v947
  %v956 = vsub.f32 %v902, %v947
  %v957 = vmul.f32 %v949, 1.442695
  %v958 = vpow.pop %v957
  %v959 = vmul.f32 %v950, 1.442695
  %v960 = vpow.pop %v959
  %v961 = vmul.f32 %v951, 1.442695
  %v962 = vpow.pop %v961
  %v963 = vmul.f32 %v952, 1.442695
  %v964 = vpow.pop %v963
  %v965 = vmul.f32 %v953, 1.442695
  %v966 = vpow.pop %v965
  %v967 = vmul.f32 %v954, 1.442695
  %v968 = vpow.pop %v967
  %v969 = vmul.f32 %v955, 1.442695
  %v970 = vpow.pop %v969
  %v971 = vmul.f32 %v956, 1.442695
  %v972 = vpow.pop %v971
  %v973 = vadd.f32 %v958, %v960
  %v974 = vadd.f32 %v973, %v962
  %v975 = vadd.f32 %v974, %v964
  %976 = vadd.xlane.f32.xlu0 %v975
  %v977 = vpop.xlane.xlu0 %976
  %v978 = vadd.f32 %v966, %v968
  %v979 = vadd.f32 %v978, %v970
  %v980 = vadd.f32 %v979, %v972
  %981 = vadd.xlane.f32.xlu0 %v980
  %v982 = vpop.xlane.xlu0 %981
  %v983 = vadd.f32 %v937, %v977
  %v984 = vadd.f32 %v938, %v982
  %vm985 = vcmask 7168
  %986 = vst.msk [vmem:[#allocation4] sm:$0xff] %vm985, %v983
  %987 = vst.msk [vmem:[#allocation4 + $0x8] sm:$0xff] %vm985, %v984
  %988 = vst.msk [vmem:[#allocation3] sm:$0xff] %vm985, %v927
  %989 = vst.msk [vmem:[#allocation3 + $0x8] sm:$0xff] %vm985, %v928
  %vm990 = vcmp.eq.f32.partialorder %v853, %v919
  %vm991 = vcmp.eq.f32.partialorder %v855, %v919
  %vm992 = vcmp.eq.f32.partialorder %v896, %v919
  %vm993 = vcmp.eq.f32.partialorder %v898, %v919
  %vm994 = vcmp.eq.f32.partialorder %v857, %v924
  %vm995 = vcmp.eq.f32.partialorder %v859, %v924
  %vm996 = vcmp.eq.f32.partialorder %v900, %v924
  %vm997 = vcmp.eq.f32.partialorder %v902, %v924
  %v998 = vsel %vm990, %v911, 2147483647
  %v999 = vsel %vm991, %v912, 2147483647
  %v1000 = vsel %vm992, %v913, 2147483647
  %v1001 = vsel %vm993, %v914, 2147483647
  %v1002 = vsel %vm994, %v911, 2147483647
  %v1003 = vsel %vm995, %v912, 2147483647
  %v1004 = vsel %vm996, %v913, 2147483647
  %v1005 = vsel %vm997, %v914, 2147483647
  %vm1006 = vcmp.lt.s32.totalorder %v998, %v1000
  %v1007 = vsel %vm1006, %v998, %v1000
  %vm1008 = vcmp.lt.s32.totalorder %v999, %v1001
  %v1009 = vsel %vm1008, %v999, %v1001
  %vm1010 = vcmp.lt.s32.totalorder %v1007, %v1009
  %v1011 = vsel %vm1010, %v1007, %v1009
  %v1012 = vand.u32 %v1011, 65535
  %v1013 = vshra.s32 %v1011, 16
  %v1014 = vcvt.s32.f32 %v1012
  %v1015 = vcvt.s32.f32 %v1013
  %1016 = vmin.xlane.f32.xlu0 %v1015
  %v1017 = vpop.xlane.xlu0 %1016
  %vm1018 = vcmp.eq.f32.partialorder %v1015, %v1017
  %v1019 = vsel %vm1018, %v1014, inf
  %1020 = vmin.xlane.f32.xlu0 %v1019
  %v1021 = vpop.xlane.xlu0 %1020
  %v1022 = vcvt.f32.s32 %v1021
  %v1023 = vcvt.f32.s32 %v1017
  %v1024 = vshll.u32 %v1023, 16
  %v1025 = vadd.s32 %v1024, %v1022
  %vm1026 = vcmp.lt.s32.totalorder %v1002, %v1004
  %v1027 = vsel %vm1026, %v1002, %v1004
  %vm1028 = vcmp.lt.s32.totalorder %v1003, %v1005
  %v1029 = vsel %vm1028, %v1003, %v1005
  %vm1030 = vcmp.lt.s32.totalorder %v1027, %v1029
  %v1031 = vsel %vm1030, %v1027, %v1029
  %v1032 = vand.u32 %v1031, 65535
  %v1033 = vshra.s32 %v1031, 16
  %v1034 = vcvt.s32.f32 %v1032
  %v1035 = vcvt.s32.f32 %v1033
  %1036 = vmin.xlane.f32.xlu0 %v1035
  %v1037 = vpop.xlane.xlu0 %1036
  %vm1038 = vcmp.eq.f32.partialorder %v1035, %v1037
  %v1039 = vsel %vm1038, %v1034, inf
  %1040 = vmin.xlane.f32.xlu0 %v1039
  %v1041 = vpop.xlane.xlu0 %1040
  %v1042 = vcvt.f32.s32 %v1041
  %v1043 = vcvt.f32.s32 %v1037
  %v1044 = vshll.u32 %v1043, 16
  %v1045 = vadd.s32 %v1044, %v1042
  %v1046 = vld [vmem:[#allocation5] sm:$0xff]
  %v1047 = vld [vmem:[#allocation5 + $0x8] sm:$0xff]
  %vm1048 = vcmp.gt.f32.partialorder %v919, %v1046
  %vm1049 = vcmp.gt.f32.partialorder %v924, %v1047
  %v1050 = vld [vmem:[#allocation6] sm:$0xff]
  %v1051 = vld [vmem:[#allocation6 + $0x8] sm:$0xff]
  %v1052 = vsel %vm1048, %v1025, %v1050
  %v1053 = vsel %vm1049, %v1045, %v1051
  %1054 = vst.msk [vmem:[#allocation6] sm:$0xff] %vm985, %v1052
  %1055 = vst.msk [vmem:[#allocation6 + $0x8] sm:$0xff] %vm985, %v1053
  %v1056 = vld [vmem:[#allocation5] sm:$0xff]
  %v1057 = vld [vmem:[#allocation5 + $0x8] sm:$0xff]
  %v1058 = vsel %vm1048, %v919, %v1056
  %v1059 = vsel %vm1049, %v924, %v1057
  %1060 = vst.msk [vmem:[#allocation5] sm:$0xff] %vm985, %v1058
  %1061 = vst.msk [vmem:[#allocation5 + $0x8] sm:$0xff] %vm985, %v1059
  %v1062 = vld [vmem:[%s7] sm:$0xff]
  %v1063 = vld [vmem:[%s7 + $0x8] sm:$0xff]
  %1064 = vset.pattern.permute.xlu0 0
  %1065 = vperm.xlu0 %1064, %v1062
  %v1066 = vpop.permute.xlu0 %1065
  %1067 = vset.pattern.permute.xlu0 0
  %1068 = vperm.xlu0 %1067, %v1063
  %v1069 = vpop.permute.xlu0 %1068
  %vm1070 = vcmp.eq.s32.totalorder %v911, %v1066
  %vm1071 = vcmp.eq.s32.totalorder %v912, %v1066
  %vm1072 = vcmp.eq.s32.totalorder %v913, %v1066
  %vm1073 = vcmp.eq.s32.totalorder %v914, %v1066
  %vm1074 = vcmp.eq.s32.totalorder %v911, %v1069
  %vm1075 = vcmp.eq.s32.totalorder %v912, %v1069
  %vm1076 = vcmp.eq.s32.totalorder %v913, %v1069
  %vm1077 = vcmp.eq.s32.totalorder %v914, %v1069
  %v1078 = vld [vmem:[#allocation7] sm:$0xff]
  %v1079 = vld [vmem:[#allocation7 + $0x8] sm:$0xff]
  %v1080 = vsel %vm1070, %v853, 0.0
  %v1081 = vsel %vm1071, %v855, 0.0
  %v1082 = vsel %vm1072, %v896, 0.0
  %v1083 = vsel %vm1073, %v898, 0.0
  %v1084 = vsel %vm1074, %v857, 0.0
  %v1085 = vsel %vm1075, %v859, 0.0
  %v1086 = vsel %vm1076, %v900, 0.0
  %v1087 = vsel %vm1077, %v902, 0.0
  %v1088 = vadd.f32 %v1080, %v1081
  %v1089 = vadd.f32 %v1088, %v1082
  %v1090 = vadd.f32 %v1089, %v1083
  %1091 = vadd.xlane.f32.xlu0 %v1090
  %v1092 = vpop.xlane.xlu0 %1091
  %v1093 = vadd.f32 %v1084, %v1085
  %v1094 = vadd.f32 %v1093, %v1086
  %v1095 = vadd.f32 %v1094, %v1087
  %1096 = vadd.xlane.f32.xlu0 %v1095
  %v1097 = vpop.xlane.xlu0 %1096
  %v1098 = vadd.f32 %v1078, %v1092
  %v1099 = vadd.f32 %v1079, %v1097
  %1100 = vst.msk [vmem:[#allocation7] sm:$0xff] %vm985, %v1098
  %1101 = vst.msk [vmem:[#allocation7 + $0x8] sm:$0xff] %vm985, %v1099
  // Predicated region
  $region38: #{macbert_forward.19} parent=0 // pred_check
    %p1102 = pneg %p31
  $region39: #{macbert_forward.19} parent=0 // pred_check_branch
    %1104 = sbr.rel (%p1102) target = $region41
  $region40: #{macbert_forward.19} parent=0 // pred_region
    %v1105 = vld [vmem:[#allocation3] sm:$0xff]
    %v1106 = vld [vmem:[#allocation3 + $0x8] sm:$0xff]
    %v1107 = vld [vmem:[#allocation4] sm:$0xff]
    %v1108 = vld [vmem:[#allocation4 + $0x8] sm:$0xff]
    %v1109 = vlog2.pop %v1107
    %v1110 = vmul.f32 %v1109, 0.6931472
    %v1111 = vlog2.pop %v1108
    %v1112 = vmul.f32 %v1111, 0.6931472
    %v1113 = vadd.f32 %v1105, %v1110
    %v1114 = vadd.f32 %v1106, %v1112
    %v1115 = vld [vmem:[#allocation7] sm:$0xff]
    %v1116 = vld [vmem:[#allocation7 + $0x8] sm:$0xff]
    %v1117 = vsub.f32 %v1113, %v1115
    %v1118 = vsub.f32 %v1114, %v1116
    %1120 = vset.pattern.permute.xlu0 0
    %1121 = vperm.xlu0 %1120, %v1117
    %v1122 = vpop.permute.xlu0 %1121
    %1125 = vset.pattern.permute.xlu0 0
    %1126 = vperm.xlu0 %1125, %v1118
    %v1127 = vpop.permute.xlu0 %1126
    %1129 = vst [vmem:[%s9] sm:$0xff] %v1122
    %1130 = vst [vmem:[%s9 + $0x8] sm:$0xff] %v1127
    %v1131 = vld [vmem:[#allocation6] sm:$0xff]
    %v1132 = vld [vmem:[#allocation6 + $0x8] sm:$0xff]
    %1133 = vset.pattern.permute.xlu0 0
    %1134 = vperm.xlu0 %1133, %v1131
    %v1135 = vpop.permute.xlu0 %1134
    %1136 = vset.pattern.permute.xlu0 0
    %1137 = vperm.xlu0 %1136, %v1132
    %v1138 = vpop.permute.xlu0 %1137
    %1139 = vst [vmem:[%s8] sm:$0xff] %v1135
    %1140 = vst [vmem:[%s8 + $0x8] sm:$0xff] %v1138
  $region41: #{macbert_forward.19} parent=0 // pred_fallthru
    _
  // Predicated region
  $region42: #{macbert_forward.19} parent=0 // pred_check
    _
  $region43: #{macbert_forward.19} parent=0 // pred_check_branch
    %1142 = sbr.rel (0) target = $region45
  $region44: #{macbert_forward.19} parent=0 // pred_region
    _
  $region45: #{macbert_forward.19} parent=0 // pred_fallthru
    _
  // Predicated region
  $region46: #{macbert_forward.19} parent=0 // pred_check
    _
  $region47: #{macbert_forward.19} parent=0 // pred_check_branch
    %1144 = sbr.rel (0) target = $region49
  $region48: #{macbert_forward.19} parent=0 // pred_region
    _
  $region49: #{macbert_forward.19} parent=0 // pred_fallthru
    _
  // Predicated region
  $region50: #{macbert_forward.19} parent=0 // pred_check
    _
  $region51: #{macbert_forward.19} parent=0 // pred_check_branch
    %1146 = sbr.rel (0) target = $region53
  $region52: #{macbert_forward.19} parent=0 // pred_region
    _
  $region53: #{macbert_forward.19} parent=0 // pred_fallthru
    _
  // Predicated region
  $region54: #{macbert_forward.19} parent=0 // pred_check
    _
  $region55: #{macbert_forward.19} parent=0 // pred_check_branch
    %1148 = sbr.rel (0) target = $region57
  $region56: #{macbert_forward.19} parent=0 // pred_region
    _
  $region57: #{macbert_forward.19} parent=0 // pred_fallthru
    _

</llo_original>
